<compile_context>
chip_gen: v7x
topology: tpu7x:2x2x1
jax: 0.10.0
libtpu: 0.0.40
codegen_flags: <defaults>
</compile_context>

<pallas_src>
import jax
import jax.numpy as jnp
from jax.experimental import pallas as pl
from jax.experimental.pallas import tpu as pltpu

EPS = 1e-5
LANES = 128
VMEM_LIMIT = 64 * 1024 * 1024   # safe on v5e/v6e (128 MiB physical) and v7x (64 MiB physical)


def _round_up(x, m):
    return (x + m - 1) // m * m


# ---------------------------------------------------------------------------
# Kernel bodies
# ---------------------------------------------------------------------------

def _conv3x3_fused(xb, w_ref):
    """3x3 stride-1 'SAME' conv of one image as a single wide MXU matmul.

    xb:    (H, W, Cp) bf16 activation (already pre-activated if needed).
    w_ref: (3*Cp, 3*Cp) bf16 ref with
           w_ref[kw*Cp + cin, kh*Cp + cout] == W[kh, kw, cin, cout].
    Returns (H*W, Cp) f32 accumulator.
    """
    H, W, Cp = xb.shape
    K = 3 * Cp
    # kw taps fused along the contraction dim (zero halo along W).
    zc = jnp.zeros((H, 1, Cp), jnp.bfloat16)
    left = jnp.concatenate([zc, xb[:, : W - 1, :]], axis=1)       # x[h, w-1]
    right = jnp.concatenate([xb[:, 1:, :], zc], axis=1)           # x[h, w+1]
    z = jnp.concatenate([left, xb, right], axis=-1)               # (H, W, 3*Cp)
    # One MXU matmul (K = 3*Cp, N = 3*Cp): all three kh slabs at once.
    m = jnp.dot(z.reshape(H * W, K), w_ref[...],
                preferred_element_type=jnp.float32).reshape(H, W, 3 * Cp)
    m0 = m[:, :, 0 * Cp:1 * Cp]      # kh = 0 partial, computed at row h -> feeds row h+1
    m1 = m[:, :, 1 * Cp:2 * Cp]      # kh = 1 partial -> row h
    m2 = m[:, :, 2 * Cp:3 * Cp]      # kh = 2 partial -> row h-1
    # kh taps: shift the Cp-wide f32 *results* by one row (zero halo along H).
    zr = jnp.zeros((1, W, Cp), jnp.float32)
    acc = (m1
           + jnp.concatenate([zr, m0[: H - 1]], axis=0)           # y[h] += m0[h-1]
           + jnp.concatenate([m2[1:], zr], axis=0))               # y[h] += m2[h+1]
    return acc.reshape(H * W, Cp)


def _emit_conv_out_and_stats(acc, y_ref, stats_ref):
    """Store raw conv output (bf16) and this step's per-channel sum / sum-of-squares."""
    _, H, W, Cp = y_ref.shape
    y_ref[...] = acc.reshape(1, H, W, Cp).astype(y_ref.dtype)
    s = jnp.sum(acc, axis=0, keepdims=True)                       # (1, Cp)
    ss = jnp.sum(acc * acc, axis=0, keepdims=True)                # (1, Cp)
    stats_ref[...] = jnp.concatenate([s, ss], axis=0).reshape(1, 2, Cp)


def conv_stats_kernel(x_ref, w_ref, y_ref, stats_ref):
    """conv1: raw 3x3 conv + per-step BN batch statistics."""
    acc = _conv3x3_fused(x_ref[0].astype(jnp.bfloat16), w_ref)
    _emit_conv_out_and_stats(acc, y_ref, stats_ref)


def bn_relu_conv_stats_kernel(y1_ref, w_ref, scale_ref, shift_ref, y2_ref, stats_ref):
    """conv2 with BN1 + ReLU fused onto its input, plus per-step BN batch statistics."""
    a = jnp.maximum(
        y1_ref[0].astype(jnp.float32) * scale_ref[...] + shift_ref[...], 0.0)
    acc = _conv3x3_fused(a.astype(jnp.bfloat16), w_ref)
    _emit_conv_out_and_stats(acc, y2_ref, stats_ref)


def bn_add_relu_kernel(y_ref, id_ref, scale_ref, shift_ref, o_ref):
    """out = relu(y * scale + shift + identity), tiled lane-dense elementwise."""
    o_ref[...] = jnp.maximum(
        y_ref[...].astype(jnp.float32) * scale_ref[...] + shift_ref[...]
        + id_ref[...].astype(jnp.float32), 0.0)


# ---------------------------------------------------------------------------
# pallas_call wrappers
# ---------------------------------------------------------------------------

def _conv_cost(N, H, W, Cp):
    return pl.CostEstimate(
        flops=2 * N * H * W * 9 * Cp * Cp,
        transcendentals=0,
        bytes_accessed=(2 * N * H * W * Cp * 2            # bf16 activation read + write
                        + (3 * Cp) * (3 * Cp) * 2          # packed bf16 weights
                        + N * 2 * Cp * 4),                 # f32 stats slabs
    )


def _call_conv1(xp, wp):
    N, H, W, Cp = xp.shape
    # TODO(synk): for very large feature maps (e.g. 112x112-class) add spatial row tiling
    # with a +-1-row halo so whole-image blocks do not stress v7x's 64 MiB VMEM.
    return pl.pallas_call(
        conv_stats_kernel,
        grid=(N,),
        in_specs=[
            pl.BlockSpec((1, H, W, Cp), lambda n: (n, 0, 0, 0)),
            pl.BlockSpec((3 * Cp, 3 * Cp), lambda n: (0, 0)),
        ],
        out_specs=[
            pl.BlockSpec((1, H, W, Cp), lambda n: (n, 0, 0, 0)),
            pl.BlockSpec((1, 2, Cp), lambda n: (n, 0, 0)),
        ],
        out_shape=(
            jax.ShapeDtypeStruct((N, H, W, Cp), jnp.bfloat16),
            jax.ShapeDtypeStruct((N, 2, Cp), jnp.float32),
        ),
        compiler_params=pltpu.CompilerParams(
            dimension_semantics=("parallel",), vmem_limit_bytes=VMEM_LIMIT),
        cost_estimate=_conv_cost(N, H, W, Cp),
    )(xp, wp)


def _call_conv2(y1raw, wp, scale1, shift1):
    N, H, W, Cp = y1raw.shape
    return pl.pallas_call(
        bn_relu_conv_stats_kernel,
        grid=(N,),
        in_specs=[
            pl.BlockSpec((1, H, W, Cp), lambda n: (n, 0, 0, 0)),
            pl.BlockSpec((3 * Cp, 3 * Cp), lambda n: (0, 0)),
            pl.BlockSpec((1, Cp), lambda n: (0, 0)),
            pl.BlockSpec((1, Cp), lambda n: (0, 0)),
        ],
        out_specs=[
            pl.BlockSpec((1, H, W, Cp), lambda n: (n, 0, 0, 0)),
            pl.BlockSpec((1, 2, Cp), lambda n: (n, 0, 0)),
        ],
        out_shape=(
            jax.ShapeDtypeStruct((N, H, W, Cp), jnp.bfloat16),
            jax.ShapeDtypeStruct((N, 2, Cp), jnp.float32),
        ),
        compiler_params=pltpu.CompilerParams(
            dimension_semantics=("parallel",), vmem_limit_bytes=VMEM_LIMIT),
        cost_estimate=_conv_cost(N, H, W, Cp),
    )(y1raw, wp, scale1, shift1)


def _call_bn_add_relu(y2, identity, scale2, shift2):
    rows, Cp = y2.shape
    # Lane-dense 256-1024 row tiles; pad rows to a tile multiple if needed (no tiny-tile
    # or whole-array fallbacks).
    tr = min(1024, _round_up(rows, 256))
    rows_p = _round_up(rows, tr)
    if rows_p != rows:
        y2 = jnp.pad(y2, ((0, rows_p - rows), (0, 0)))
        identity = jnp.pad(identity, ((0, rows_p - rows), (0, 0)))
    out = pl.pallas_call(
        bn_add_relu_kernel,
        grid=(rows_p // tr,),
        in_specs=[
            pl.BlockSpec((tr, Cp), lambda i: (i, 0)),
            pl.BlockSpec((tr, Cp), lambda i: (i, 0)),
            pl.BlockSpec((1, Cp), lambda i: (0, 0)),
            pl.BlockSpec((1, Cp), lambda i: (0, 0)),
        ],
        out_specs=pl.BlockSpec((tr, Cp), lambda i: (i, 0)),
        out_shape=jax.ShapeDtypeStruct((rows_p, Cp), jnp.float32),
        compiler_params=pltpu.CompilerParams(
            dimension_semantics=("parallel",), vmem_limit_bytes=VMEM_LIMIT),
    )(y2, identity, scale2, shift2)
    return out[:rows]


# ---------------------------------------------------------------------------
# Wrapper (layout plumbing + tiny BN fixup in plain JAX)
# ---------------------------------------------------------------------------

def _pack_conv_weight(w_hwio, Cp):
    """(3, 3, Cin, Cout) f32 -> (3*Cp, 3*Cp) bf16 with
    packed[kw*Cp + cin, kh*Cp + cout] = W[kh, kw, cin, cout] (zero in padded lanes)."""
    _, _, Cin, Cout = w_hwio.shape
    wp = jnp.zeros((3, 3, Cp, Cp), jnp.float32).at[:, :, :Cin, :Cout].set(w_hwio)
    wp = jnp.transpose(wp, (1, 2, 0, 3)).reshape(3 * Cp, 3 * Cp)   # rows=(kw,cin), cols=(kh,cout)
    return wp.astype(jnp.bfloat16)


def _bn_affine(stats, gamma_p, beta_p, count):
    """Per-channel (scale, shift) from per-step sum / sum-of-squares slabs (batch stats)."""
    s = jnp.sum(stats, axis=0)                       # (2, Cp) f32
    mean = s[0] / count
    var = jnp.maximum(s[1] / count - mean * mean, 0.0)
    # TODO(synk): PyTorch training-mode BN also updates running_mean/running_var; not emitted.
    inv = jax.lax.rsqrt(var + EPS)
    scale = gamma_p * inv
    shift = beta_p - mean * scale
    return scale.reshape(1, -1), shift.reshape(1, -1)


def basic_block_forward(x_nchw, params):
    """BasicBlock forward (stride=1, identity shortcut). NCHW f32 in -> NCHW f32 out."""
    w1, g1, b1, w2, g2, b2 = params
    N, C, H, W = x_nchw.shape
    planes = w1.shape[-1]
    assert w1.shape[2] == C and planes == C, "identity shortcut needs inplanes == planes"

    Cp = _round_up(C, LANES)
    count = float(N * H * W)

    # NCHW f32 -> lane-padded NHWC bf16 at the HBM boundary (layout plumbing only).
    x = jnp.transpose(x_nchw, (0, 2, 3, 1))
    xp = jnp.pad(x, ((0, 0), (0, 0), (0, 0), (0, Cp - C))).astype(jnp.bfloat16)

    w1p = _pack_conv_weight(w1, Cp)
    w2p = _pack_conv_weight(w2, Cp)
    g1p = jnp.zeros((Cp,), jnp.float32).at[:C].set(g1)
    b1p = jnp.zeros((Cp,), jnp.float32).at[:C].set(b1)
    g2p = jnp.zeros((Cp,), jnp.float32).at[:C].set(g2)
    b2p = jnp.zeros((Cp,), jnp.float32).at[:C].set(b2)

    # conv1 + BN1 batch statistics (per-step slabs, reduced in plain JAX).
    y1raw, stats1 = _call_conv1(xp, w1p)
    scale1, shift1 = _bn_affine(stats1, g1p, b1p, count)

    # BN1 + ReLU fused into conv2's input (no extra HBM pass for normalized y1),
    # + BN2 batch statistics.
    y2raw, stats2 = _call_conv2(y1raw, w2p, scale1, shift1)
    scale2, shift2 = _bn_affine(stats2, g2p, b2p, count)

    # BN2 + identity add + ReLU over lane-dense row tiles.
    out2d = _call_bn_add_relu(y2raw.reshape(N * H * W, Cp),
                              xp.reshape(N * H * W, Cp), scale2, shift2)

    # TODO(synk): when chaining BasicBlocks keep activations in padded NHWC (bf16) and drop
    # this unpad + transpose; it exists only to honor the module's NCHW interface.
    out = out2d.reshape(N, H, W, Cp)[..., :C]
    return jnp.transpose(out, (0, 3, 1, 2))


# ---------------------------------------------------------------------------
# Pure-JAX reference (same semantics, same bf16 HBM-boundary rounding) and test
# ---------------------------------------------------------------------------

def _reference_forward(x_nchw, params):
    w1, g1, b1, w2, g2, b2 = params
    x = jnp.transpose(x_nchw, (0, 2, 3, 1))
    x_b = x.astype(jnp.bfloat16).astype(jnp.float32)          # kernel stores x in bf16

    def conv(a, w):  # NHWC, HWIO; bf16 operands, f32 accumulation (mirrors the MXU)
        return jax.lax.conv_general_dilated(
            a.astype(jnp.bfloat16), w.astype(jnp.bfloat16),
            window_strides=(1, 1), padding="SAME",
            dimension_numbers=("NHWC", "HWIO", "NHWC"),
            preferred_element_type=jnp.float32)

    def bn_affine(y, g, b):  # training-mode BN with batch stats (biased variance)
        mean = jnp.mean(y, axis=(0, 1, 2))
        var = jnp.maximum(jnp.mean(y * y, axis=(0, 1, 2)) - mean * mean, 0.0)
        scale = g * jax.lax.rsqrt(var + EPS)
        return scale, b - mean * scale

    y1 = conv(x_b, w1)
    s1, t1 = bn_affine(y1, g1, b1)                             # stats from f32 conv output
    y1_b = y1.astype(jnp.bfloat16).astype(jnp.float32)         # kernel stores y1 in bf16
    a1 = jax.nn.relu(y1_b * s1 + t1)
    y2 = conv(a1, w2)
    s2, t2 = bn_affine(y2, g2, b2)
    y2_b = y2.astype(jnp.bfloat16).astype(jnp.float32)         # kernel stores y2 in bf16
    out = jax.nn.relu(y2_b * s2 + t2 + x_b)
    return jnp.transpose(out, (0, 3, 1, 2))


def init_params(key, inplanes, planes):
    k1, k2, k3, k4 = jax.random.split(key, 4)
    # conv weights stored as (kh, kw, Cin, Cout) == PyTorch (Cout, Cin, kh, kw) transposed
    w1 = 0.1 * jax.random.normal(k1, (3, 3, inplanes, planes), jnp.float32)
    w2 = 0.1 * jax.random.normal(k2, (3, 3, planes, planes), jnp.float32)
    g1 = 1.0 + 0.05 * jax.random.normal(k3, (planes,), jnp.float32)
    b1 = 0.05 * jax.random.normal(k3, (planes,), jnp.float32)
    g2 = 1.0 + 0.05 * jax.random.normal(k4, (planes,), jnp.float32)
    b2 = 0.05 * jax.random.normal(k4, (planes,), jnp.float32)
    return (w1, g1, b1, w2, g2, b2)


if __name__ == "__main__":
    key = jax.random.PRNGKey(0)
    kx, kp = jax.random.split(key)

    N, C, H, W = 2, 4, 16, 16          # inplanes = planes = 4, stride = 1, no downsample
    x = jax.random.normal(kx, (N, C, H, W), jnp.float32)
    params = init_params(kp, C, C)

    fwd = jax.jit(basic_block_forward)
    out = jax.block_until_ready(fwd(x, params))

    ref = _reference_forward(x, params)
    assert out.shape == (N, C, H, W)
    assert jnp.allclose(out, ref, atol=1e-2, rtol=1e-2), "mismatch vs JAX reference"

    print("KERNEL_OK")
</pallas_src>

<mosaic_0001>
module attributes {stable_mosaic.version = 11 : i64} {
  func.func @conv_stats_kernel(%arg0: i32, %arg1: memref<1x16x16x128xbf16, #tpu.memory_space<vmem>>, %arg2: memref<384x384xbf16, #tpu.memory_space<vmem>>, %arg3: memref<1x16x16x128xbf16, #tpu.memory_space<vmem>>, %arg4: memref<1x2x128xf32, #tpu.memory_space<vmem>>) attributes {dimension_semantics = [#tpu.dimension_semantics<parallel>], iteration_bounds = array<i64: 2>, scalar_prefetch = 0 : i64, scratch_operands = 0 : i64, tpu.core_type = #tpu.core_type<tc>, window_params = [{transform_indices = @transform_0, window_bounds = array<i64: 1, 16, 16, 128>}, {pipeline_mode = #tpu.pipeline_mode<synchronous>, transform_indices = @transform_1, window_bounds = array<i64: 384, 384>}, {transform_indices = @transform_2, window_bounds = array<i64: 1, 16, 16, 128>}, {transform_indices = @transform_3, window_bounds = array<i64: 1, 2, 128>}]} {
    %c0 = arith.constant 0 : index
    %c0_0 = arith.constant 0 : index
    %c0_1 = arith.constant 0 : index
    %c0_2 = arith.constant 0 : index
    %0 = vector.load %arg1[%c0, %c0_0, %c0_1, %c0_2] : memref<1x16x16x128xbf16, #tpu.memory_space<vmem>>, vector<1x16x16x128xbf16>
    %1 = vector.shape_cast %0 : vector<1x16x16x128xbf16> to vector<16x16x128xbf16>
    %cst = arith.constant 0.000000e+00 : bf16
    %2 = vector.broadcast %cst : bf16 to vector<16x1x128xbf16>
    %3 = vector.extract_strided_slice %1 {offsets = [0, 0, 0], sizes = [16, 15, 128], strides = [1, 1, 1]} : vector<16x16x128xbf16> to vector<16x15x128xbf16>
    %4 = tpu.concatenate %2, %3 in 1 : vector<16x1x128xbf16>, vector<16x15x128xbf16> -> vector<16x16x128xbf16>
    %5 = vector.extract_strided_slice %1 {offsets = [0, 1, 0], sizes = [16, 15, 128], strides = [1, 1, 1]} : vector<16x16x128xbf16> to vector<16x15x128xbf16>
    %6 = tpu.concatenate %5, %2 in 1 : vector<16x15x128xbf16>, vector<16x1x128xbf16> -> vector<16x16x128xbf16>
    %7 = tpu.concatenate %4, %1, %6 in 2 : vector<16x16x128xbf16>, vector<16x16x128xbf16>, vector<16x16x128xbf16> -> vector<16x16x384xbf16>
    %8 = vector.shape_cast %7 : vector<16x16x384xbf16> to vector<256x384xbf16>
    %c0_3 = arith.constant 0 : index
    %c0_4 = arith.constant 0 : index
    %9 = vector.load %arg2[%c0_3, %c0_4] : memref<384x384xbf16, #tpu.memory_space<vmem>>, vector<384x384xbf16>
    %cst_5 = arith.constant dense<0.000000e+00> : vector<256x384xf32>
    %10 = tpu.matmul %8, %9, %cst_5 {dimension_numbers = #tpu.dot_dimension_numbers<[1], [0], [0], [1], [0, 0, 1, 1], [], []>} : vector<256x384xbf16>, vector<384x384xbf16>, vector<256x384xf32> -> vector<256x384xf32>
    %11 = vector.shape_cast %10 : vector<256x384xf32> to vector<16x16x384xf32>
    %12 = vector.extract_strided_slice %11 {offsets = [0, 0, 0], sizes = [16, 16, 128], strides = [1, 1, 1]} : vector<16x16x384xf32> to vector<16x16x128xf32>
    %13 = vector.extract_strided_slice %11 {offsets = [0, 0, 128], sizes = [16, 16, 128], strides = [1, 1, 1]} : vector<16x16x384xf32> to vector<16x16x128xf32>
    %14 = vector.extract_strided_slice %11 {offsets = [0, 0, 256], sizes = [16, 16, 128], strides = [1, 1, 1]} : vector<16x16x384xf32> to vector<16x16x128xf32>
    %cst_6 = arith.constant 0.000000e+00 : f32
    %15 = vector.broadcast %cst_6 : f32 to vector<1x16x128xf32>
    %16 = vector.extract_strided_slice %12 {offsets = [0, 0, 0], sizes = [15, 16, 128], strides = [1, 1, 1]} : vector<16x16x128xf32> to vector<15x16x128xf32>
    %17 = tpu.concatenate %15, %16 in 0 : vector<1x16x128xf32>, vector<15x16x128xf32> -> vector<16x16x128xf32>
    %18 = arith.addf %13, %17 : vector<16x16x128xf32>
    %19 = vector.extract_strided_slice %14 {offsets = [1, 0, 0], sizes = [15, 16, 128], strides = [1, 1, 1]} : vector<16x16x128xf32> to vector<15x16x128xf32>
    %20 = tpu.concatenate %19, %15 in 0 : vector<15x16x128xf32>, vector<1x16x128xf32> -> vector<16x16x128xf32>
    %21 = arith.addf %18, %20 : vector<16x16x128xf32>
    %22 = vector.shape_cast %21 : vector<16x16x128xf32> to vector<256x128xf32>
    %23 = vector.shape_cast %22 : vector<256x128xf32> to vector<1x16x16x128xf32>
    %24 = arith.truncf %23 : vector<1x16x16x128xf32> to vector<1x16x16x128xbf16>
    %c0_7 = arith.constant 0 : index
    %c0_8 = arith.constant 0 : index
    %c0_9 = arith.constant 0 : index
    %c0_10 = arith.constant 0 : index
    %25 = vector.load %arg3[%c0_7, %c0_8, %c0_9, %c0_10] : memref<1x16x16x128xbf16, #tpu.memory_space<vmem>>, vector<1x16x16x128xbf16>
    tpu.vector_store %arg3[%c0_7, %c0_8, %c0_9, %c0_10], %24 {strides = array<i32>} : memref<1x16x16x128xbf16, #tpu.memory_space<vmem>>, vector<1x16x16x128xbf16>,
    %cst_11 = arith.constant dense<0.000000e+00> : vector<128xf32>
    %26 = vector.multi_reduction <add>, %22, %cst_11 [0] : vector<256x128xf32> to vector<128xf32>
    %27 = vector.shape_cast %26 : vector<128xf32> to vector<1x128xf32>
    %28 = arith.mulf %22, %22 : vector<256x128xf32>
    %cst_12 = arith.constant dense<0.000000e+00> : vector<128xf32>
    %29 = vector.multi_reduction <add>, %28, %cst_12 [0] : vector<256x128xf32> to vector<128xf32>
    %30 = vector.shape_cast %29 : vector<128xf32> to vector<1x128xf32>
    %31 = tpu.concatenate %27, %30 in 0 : vector<1x128xf32>, vector<1x128xf32> -> vector<2x128xf32>
    %32 = vector.shape_cast %31 : vector<2x128xf32> to vector<1x2x128xf32>
    %c0_13 = arith.constant 0 : index
    %c0_14 = arith.constant 0 : index
    %c0_15 = arith.constant 0 : index
    %33 = vector.load %arg4[%c0_13, %c0_14, %c0_15] : memref<1x2x128xf32, #tpu.memory_space<vmem>>, vector<1x2x128xf32>
    tpu.vector_store %arg4[%c0_13, %c0_14, %c0_15], %32 {strides = array<i32>} : memref<1x2x128xf32, #tpu.memory_space<vmem>>, vector<1x2x128xf32>,
    return
  }
  func.func @transform_0(%arg0: i32) -> (i32, i32, i32, i32) {
    %c0_i32 = arith.constant 0 : i32
    %c0_i32_0 = arith.constant 0 : i32
    %c0_i32_1 = arith.constant 0 : i32
    %c0_i32_2 = arith.constant 0 : i32
    return %arg0, %c0_i32, %c0_i32_0, %c0_i32_1 : i32, i32, i32, i32
  }
  func.func @transform_1(%arg0: i32) -> (i32, i32) {
    %c0_i32 = arith.constant 0 : i32
    %c0_i32_0 = arith.constant 0 : i32
    %c0_i32_1 = arith.constant 0 : i32
    return %c0_i32, %c0_i32_0 : i32, i32
  }
  func.func @transform_2(%arg0: i32) -> (i32, i32, i32, i32) {
    %c0_i32 = arith.constant 0 : i32
    %c0_i32_0 = arith.constant 0 : i32
    %c0_i32_1 = arith.constant 0 : i32
    %c0_i32_2 = arith.constant 0 : i32
    return %arg0, %c0_i32, %c0_i32_0, %c0_i32_1 : i32, i32, i32, i32
  }
  func.func @transform_3(%arg0: i32) -> (i32, i32, i32) {
    %c0_i32 = arith.constant 0 : i32
    %c0_i32_0 = arith.constant 0 : i32
    %c0_i32_1 = arith.constant 0 : i32
    return %arg0, %c0_i32, %c0_i32_0 : i32, i32, i32
  }
}

module attributes {stable_mosaic.version = 11 : i64} {
  func.func @bn_relu_conv_stats_kernel(%arg0: i32, %arg1: memref<1x16x16x128xbf16, #tpu.memory_space<vmem>>, %arg2: memref<384x384xbf16, #tpu.memory_space<vmem>>, %arg3: memref<1x128xf32, #tpu.memory_space<vmem>>, %arg4: memref<1x128xf32, #tpu.memory_space<vmem>>, %arg5: memref<1x16x16x128xbf16, #tpu.memory_space<vmem>>, %arg6: memref<1x2x128xf32, #tpu.memory_space<vmem>>) attributes {dimension_semantics = [#tpu.dimension_semantics<parallel>], iteration_bounds = array<i64: 2>, scalar_prefetch = 0 : i64, scratch_operands = 0 : i64, tpu.core_type = #tpu.core_type<tc>, window_params = [{transform_indices = @transform_0, window_bounds = array<i64: 1, 16, 16, 128>}, {pipeline_mode = #tpu.pipeline_mode<synchronous>, transform_indices = @transform_1, window_bounds = array<i64: 384, 384>}, {pipeline_mode = #tpu.pipeline_mode<synchronous>, transform_indices = @transform_2, window_bounds = array<i64: 1, 128>}, {pipeline_mode = #tpu.pipeline_mode<synchronous>, transform_indices = @transform_3, window_bounds = array<i64: 1, 128>}, {transform_indices = @transform_4, window_bounds = array<i64: 1, 16, 16, 128>}, {transform_indices = @transform_5, window_bounds = array<i64: 1, 2, 128>}]} {
    %c0 = arith.constant 0 : index
    %c0_0 = arith.constant 0 : index
    %c0_1 = arith.constant 0 : index
    %c0_2 = arith.constant 0 : index
    %0 = vector.load %arg1[%c0, %c0_0, %c0_1, %c0_2] : memref<1x16x16x128xbf16, #tpu.memory_space<vmem>>, vector<1x16x16x128xbf16>
    %1 = vector.shape_cast %0 : vector<1x16x16x128xbf16> to vector<16x16x128xbf16>
    %2 = arith.extf %1 : vector<16x16x128xbf16> to vector<16x16x128xf32>
    %c0_3 = arith.constant 0 : index
    %c0_4 = arith.constant 0 : index
    %3 = vector.load %arg3[%c0_3, %c0_4] : memref<1x128xf32, #tpu.memory_space<vmem>>, vector<1x128xf32>
    %4 = vector.shape_cast %3 : vector<1x128xf32> to vector<1x1x128xf32>
    %5 = vector.broadcast %4 : vector<1x1x128xf32> to vector<16x16x128xf32>
    %6 = arith.mulf %2, %5 : vector<16x16x128xf32>
    %c0_5 = arith.constant 0 : index
    %c0_6 = arith.constant 0 : index
    %7 = vector.load %arg4[%c0_5, %c0_6] : memref<1x128xf32, #tpu.memory_space<vmem>>, vector<1x128xf32>
    %8 = vector.shape_cast %7 : vector<1x128xf32> to vector<1x1x128xf32>
    %9 = vector.broadcast %8 : vector<1x1x128xf32> to vector<16x16x128xf32>
    %10 = arith.addf %6, %9 : vector<16x16x128xf32>
    %cst = arith.constant 0.000000e+00 : f32
    %11 = vector.broadcast %cst : f32 to vector<16x16x128xf32>
    %12 = arith.maximumf %10, %11 : vector<16x16x128xf32>
    %13 = arith.truncf %12 : vector<16x16x128xf32> to vector<16x16x128xbf16>
    %cst_7 = arith.constant 0.000000e+00 : bf16
    %14 = vector.broadcast %cst_7 : bf16 to vector<16x1x128xbf16>
    %15 = vector.extract_strided_slice %13 {offsets = [0, 0, 0], sizes = [16, 15, 128], strides = [1, 1, 1]} : vector<16x16x128xbf16> to vector<16x15x128xbf16>
    %16 = tpu.concatenate %14, %15 in 1 : vector<16x1x128xbf16>, vector<16x15x128xbf16> -> vector<16x16x128xbf16>
    %17 = vector.extract_strided_slice %13 {offsets = [0, 1, 0], sizes = [16, 15, 128], strides = [1, 1, 1]} : vector<16x16x128xbf16> to vector<16x15x128xbf16>
    %18 = tpu.concatenate %17, %14 in 1 : vector<16x15x128xbf16>, vector<16x1x128xbf16> -> vector<16x16x128xbf16>
    %19 = tpu.concatenate %16, %13, %18 in 2 : vector<16x16x128xbf16>, vector<16x16x128xbf16>, vector<16x16x128xbf16> -> vector<16x16x384xbf16>
    %20 = vector.shape_cast %19 : vector<16x16x384xbf16> to vector<256x384xbf16>
    %c0_8 = arith.constant 0 : index
    %c0_9 = arith.constant 0 : index
    %21 = vector.load %arg2[%c0_8, %c0_9] : memref<384x384xbf16, #tpu.memory_space<vmem>>, vector<384x384xbf16>
    %cst_10 = arith.constant dense<0.000000e+00> : vector<256x384xf32>
    %22 = tpu.matmul %20, %21, %cst_10 {dimension_numbers = #tpu.dot_dimension_numbers<[1], [0], [0], [1], [0, 0, 1, 1], [], []>} : vector<256x384xbf16>, vector<384x384xbf16>, vector<256x384xf32> -> vector<256x384xf32>
    %23 = vector.shape_cast %22 : vector<256x384xf32> to vector<16x16x384xf32>
    %24 = vector.extract_strided_slice %23 {offsets = [0, 0, 0], sizes = [16, 16, 128], strides = [1, 1, 1]} : vector<16x16x384xf32> to vector<16x16x128xf32>
    %25 = vector.extract_strided_slice %23 {offsets = [0, 0, 128], sizes = [16, 16, 128], strides = [1, 1, 1]} : vector<16x16x384xf32> to vector<16x16x128xf32>
    %26 = vector.extract_strided_slice %23 {offsets = [0, 0, 256], sizes = [16, 16, 128], strides = [1, 1, 1]} : vector<16x16x384xf32> to vector<16x16x128xf32>
    %cst_11 = arith.constant 0.000000e+00 : f32
    %27 = vector.broadcast %cst_11 : f32 to vector<1x16x128xf32>
    %28 = vector.extract_strided_slice %24 {offsets = [0, 0, 0], sizes = [15, 16, 128], strides = [1, 1, 1]} : vector<16x16x128xf32> to vector<15x16x128xf32>
    %29 = tpu.concatenate %27, %28 in 0 : vector<1x16x128xf32>, vector<15x16x128xf32> -> vector<16x16x128xf32>
    %30 = arith.addf %25, %29 : vector<16x16x128xf32>
    %31 = vector.extract_strided_slice %26 {offsets = [1, 0, 0], sizes = [15, 16, 128], strides = [1, 1, 1]} : vector<16x16x128xf32> to vector<15x16x128xf32>
    %32 = tpu.concatenate %31, %27 in 0 : vector<15x16x128xf32>, vector<1x16x128xf32> -> vector<16x16x128xf32>
    %33 = arith.addf %30, %32 : vector<16x16x128xf32>
    %34 = vector.shape_cast %33 : vector<16x16x128xf32> to vector<256x128xf32>
    %35 = vector.shape_cast %34 : vector<256x128xf32> to vector<1x16x16x128xf32>
    %36 = arith.truncf %35 : vector<1x16x16x128xf32> to vector<1x16x16x128xbf16>
    %c0_12 = arith.constant 0 : index
    %c0_13 = arith.constant 0 : index
    %c0_14 = arith.constant 0 : index
    %c0_15 = arith.constant 0 : index
    %37 = vector.load %arg5[%c0_12, %c0_13, %c0_14, %c0_15] : memref<1x16x16x128xbf16, #tpu.memory_space<vmem>>, vector<1x16x16x128xbf16>
    tpu.vector_store %arg5[%c0_12, %c0_13, %c0_14, %c0_15], %36 {strides = array<i32>} : memref<1x16x16x128xbf16, #tpu.memory_space<vmem>>, vector<1x16x16x128xbf16>,
    %cst_16 = arith.constant dense<0.000000e+00> : vector<128xf32>
    %38 = vector.multi_reduction <add>, %34, %cst_16 [0] : vector<256x128xf32> to vector<128xf32>
    %39 = vector.shape_cast %38 : vector<128xf32> to vector<1x128xf32>
    %40 = arith.mulf %34, %34 : vector<256x128xf32>
    %cst_17 = arith.constant dense<0.000000e+00> : vector<128xf32>
    %41 = vector.multi_reduction <add>, %40, %cst_17 [0] : vector<256x128xf32> to vector<128xf32>
    %42 = vector.shape_cast %41 : vector<128xf32> to vector<1x128xf32>
    %43 = tpu.concatenate %39, %42 in 0 : vector<1x128xf32>, vector<1x128xf32> -> vector<2x128xf32>
    %44 = vector.shape_cast %43 : vector<2x128xf32> to vector<1x2x128xf32>
    %c0_18 = arith.constant 0 : index
    %c0_19 = arith.constant 0 : index
    %c0_20 = arith.constant 0 : index
    %45 = vector.load %arg6[%c0_18, %c0_19, %c0_20] : memref<1x2x128xf32, #tpu.memory_space<vmem>>, vector<1x2x128xf32>
    tpu.vector_store %arg6[%c0_18, %c0_19, %c0_20], %44 {strides = array<i32>} : memref<1x2x128xf32, #tpu.memory_space<vmem>>, vector<1x2x128xf32>,
    return
  }
  func.func @transform_0(%arg0: i32) -> (i32, i32, i32, i32) {
    %c0_i32 = arith.constant 0 : i32
    %c0_i32_0 = arith.constant 0 : i32
    %c0_i32_1 = arith.constant 0 : i32
    %c0_i32_2 = arith.constant 0 : i32
    return %arg0, %c0_i32, %c0_i32_0, %c0_i32_1 : i32, i32, i32, i32
  }
  func.func @transform_1(%arg0: i32) -> (i32, i32) {
    %c0_i32 = arith.constant 0 : i32
    %c0_i32_0 = arith.constant 0 : i32
    %c0_i32_1 = arith.constant 0 : i32
    return %c0_i32, %c0_i32_0 : i32, i32
  }
  func.func @transform_2(%arg0: i32) -> (i32, i32) {
    %c0_i32 = arith.constant 0 : i32
    %c0_i32_0 = arith.constant 0 : i32
    %c0_i32_1 = arith.constant 0 : i32
    return %c0_i32, %c0_i32_0 : i32, i32
  }
  func.func @transform_3(%arg0: i32) -> (i32, i32) {
    %c0_i32 = arith.constant 0 : i32
    %c0_i32_0 = arith.constant 0 : i32
    %c0_i32_1 = arith.constant 0 : i32
    return %c0_i32, %c0_i32_0 : i32, i32
  }
  func.func @transform_4(%arg0: i32) -> (i32, i32, i32, i32) {
    %c0_i32 = arith.constant 0 : i32
    %c0_i32_0 = arith.constant 0 : i32
    %c0_i32_1 = arith.constant 0 : i32
    %c0_i32_2 = arith.constant 0 : i32
    return %arg0, %c0_i32, %c0_i32_0, %c0_i32_1 : i32, i32, i32, i32
  }
  func.func @transform_5(%arg0: i32) -> (i32, i32, i32) {
    %c0_i32 = arith.constant 0 : i32
    %c0_i32_0 = arith.constant 0 : i32
    %c0_i32_1 = arith.constant 0 : i32
    return %arg0, %c0_i32, %c0_i32_0 : i32, i32, i32
  }
}

module attributes {stable_mosaic.version = 11 : i64} {
  func.func @bn_add_relu_kernel(%arg0: i32, %arg1: memref<512x128xbf16, #tpu.memory_space<vmem>>, %arg2: memref<512x128xbf16, #tpu.memory_space<vmem>>, %arg3: memref<1x128xf32, #tpu.memory_space<vmem>>, %arg4: memref<1x128xf32, #tpu.memory_space<vmem>>, %arg5: memref<512x128xf32, #tpu.memory_space<vmem>>) attributes {dimension_semantics = [#tpu.dimension_semantics<parallel>], iteration_bounds = array<i64: 1>, scalar_prefetch = 0 : i64, scratch_operands = 0 : i64, tpu.core_type = #tpu.core_type<tc>, window_params = [{transform_indices = @transform_0, window_bounds = array<i64: 512, 128>}, {transform_indices = @transform_1, window_bounds = array<i64: 512, 128>}, {pipeline_mode = #tpu.pipeline_mode<synchronous>, transform_indices = @transform_2, window_bounds = array<i64: 1, 128>}, {pipeline_mode = #tpu.pipeline_mode<synchronous>, transform_indices = @transform_3, window_bounds = array<i64: 1, 128>}, {transform_indices = @transform_4, window_bounds = array<i64: 512, 128>}]} {
    %c0 = arith.constant 0 : index
    %c0_0 = arith.constant 0 : index
    %0 = vector.load %arg1[%c0, %c0_0] : memref<512x128xbf16, #tpu.memory_space<vmem>>, vector<512x128xbf16>
    %1 = arith.extf %0 : vector<512x128xbf16> to vector<512x128xf32>
    %c0_1 = arith.constant 0 : index
    %c0_2 = arith.constant 0 : index
    %2 = vector.load %arg3[%c0_1, %c0_2] : memref<1x128xf32, #tpu.memory_space<vmem>>, vector<1x128xf32>
    %3 = vector.broadcast %2 : vector<1x128xf32> to vector<512x128xf32>
    %4 = arith.mulf %1, %3 : vector<512x128xf32>
    %c0_3 = arith.constant 0 : index
    %c0_4 = arith.constant 0 : index
    %5 = vector.load %arg4[%c0_3, %c0_4] : memref<1x128xf32, #tpu.memory_space<vmem>>, vector<1x128xf32>
    %6 = vector.broadcast %5 : vector<1x128xf32> to vector<512x128xf32>
    %7 = arith.addf %4, %6 : vector<512x128xf32>
    %c0_5 = arith.constant 0 : index
    %c0_6 = arith.constant 0 : index
    %8 = vector.load %arg2[%c0_5, %c0_6] : memref<512x128xbf16, #tpu.memory_space<vmem>>, vector<512x128xbf16>
    %9 = arith.extf %8 : vector<512x128xbf16> to vector<512x128xf32>
    %10 = arith.addf %7, %9 : vector<512x128xf32>
    %cst = arith.constant 0.000000e+00 : f32
    %11 = vector.broadcast %cst : f32 to vector<512x128xf32>
    %12 = arith.maximumf %10, %11 : vector<512x128xf32>
    %c0_7 = arith.constant 0 : index
    %c0_8 = arith.constant 0 : index
    %13 = vector.load %arg5[%c0_7, %c0_8] : memref<512x128xf32, #tpu.memory_space<vmem>>, vector<512x128xf32>
    tpu.vector_store %arg5[%c0_7, %c0_8], %12 {strides = array<i32>} : memref<512x128xf32, #tpu.memory_space<vmem>>, vector<512x128xf32>,
    return
  }
  func.func @transform_0(%arg0: i32) -> (i32, i32) {
    %c0_i32 = arith.constant 0 : i32
    %c0_i32_0 = arith.constant 0 : i32
    return %arg0, %c0_i32 : i32, i32
  }
  func.func @transform_1(%arg0: i32) -> (i32, i32) {
    %c0_i32 = arith.constant 0 : i32
    %c0_i32_0 = arith.constant 0 : i32
    return %arg0, %c0_i32 : i32, i32
  }
  func.func @transform_2(%arg0: i32) -> (i32, i32) {
    %c0_i32 = arith.constant 0 : i32
    %c0_i32_0 = arith.constant 0 : i32
    %c0_i32_1 = arith.constant 0 : i32
    return %c0_i32, %c0_i32_0 : i32, i32
  }
  func.func @transform_3(%arg0: i32) -> (i32, i32) {
    %c0_i32 = arith.constant 0 : i32
    %c0_i32_0 = arith.constant 0 : i32
    %c0_i32_1 = arith.constant 0 : i32
    return %c0_i32, %c0_i32_0 : i32, i32
  }
  func.func @transform_4(%arg0: i32) -> (i32, i32) {
    %c0_i32 = arith.constant 0 : i32
    %c0_i32_0 = arith.constant 0 : i32
    return %arg0, %c0_i32 : i32, i32
  }
}

</mosaic_0001>

<llo_original>
// kernel: basic_block_forward.5
$region0: #{basic_block_forward.5}
  #allocation0 [shape = 'u32[]', space=smem, size = 0x4, offset = 0x4, fixed_abs, tag = 'smem constant byte address 0x4 - core index']
  #allocation1 [shape = 'u32[144,128]{1,0:T(1,128)}', space=vmem, size = 0x12000, scoped, tag = 'internal scratch']
  %s0 = inlined_call_operand.hbm [shape: bf16[512,128], index: 0, kind: input, shape index: {}]
  %s1 = inlined_call_operand.hbm [shape: bf16[512,128], index: 1, kind: input, shape index: {}]
  %s2 = inlined_call_operand.hbm [shape: f32[1,128], index: 2, kind: input, shape index: {}]
  %s3 = inlined_call_operand.hbm [shape: f32[1,128], index: 3, kind: input, shape index: {}]
  %s4 = inlined_call_operand.hbm [shape: f32[512,128], index: 4, kind: output, shape index: {}]
  %s5 = sld [smem:[#allocation0]]
  $region42: #{basic_block_forward.5} parent=0
    _
  %s7 = ssub.s32 1, %s5
  %s8 = scalar_select 0, %s7, %s5
  $region1: #{basic_block_forward.5} parent=0
    #allocation2 [shape = 'u8[131072]{0}', space=vmem, size = 0x20000, scoped, tag = 'input window, operand 0, single buffered']
    #allocation3 [shape = 's32[1]{0}', space=sflag, size = 0x4, scoped, tag = 'scoped memory for basic_block_forward.5']
    #allocation4 [shape = 's32[1]{0}', space=sflag, size = 0x4, scoped, tag = 'scoped memory for basic_block_forward.5']
    #allocation5 [shape = 'u8[131072]{0}', space=vmem, size = 0x20000, scoped, tag = 'input window, operand 1, single buffered']
    #allocation6 [shape = 's32[1]{0}', space=sflag, size = 0x4, scoped, tag = 'scoped memory for basic_block_forward.5']
    #allocation7 [shape = 'u8[512]{0}', space=vmem, size = 0x400, scoped, tag = 'input window, operand 2, single buffered']
    #allocation8 [shape = 'u8[512]{0}', space=vmem, size = 0x400, scoped, tag = 'input window, operand 3, single buffered']
    #allocation9 [shape = 's32[1]{0}', space=sflag, size = 0x4, scoped, tag = 'scoped memory for basic_block_forward.5']
    #allocation10 [shape = 'u8[262144]{0}', space=vmem, size = 0x40000, scoped, tag = 'output window, operand 0, single buffered']
    %9 = vsyncpa [#allocation3], 0
    %10 = vsyncpa [#allocation6], 0
    %11 = vsyncpa [#allocation9], 0
    %12 = vsyncpa [#allocation4], 0
    // Predicated region
    $region2: #{basic_block_forward.5} parent=1 // pred_check
      _
    $region3: #{basic_block_forward.5} parent=1 // pred_check_branch
      %14 = sbr.rel (0) target = $region5
    $region4: #{basic_block_forward.5} parent=1 // pred_region
      %s16 = ssub.s32 4096, 4096
      %17 = vsyncadd [#allocation3], %s16
      %s18 = sshll.u32 [#allocation2], 4
      %s19 = int_to_ptr.vmem [resolvable:$true] %s18
      %24 = dma.hbm_to_vmem [thread:$0]  %s0, 4096, %s19, [#allocation3], 64, 64, 4
    $region5: #{basic_block_forward.5} parent=1 // pred_fallthru
      _
    // Predicated region
    $region6: #{basic_block_forward.5} parent=1 // pred_check
      _
    $region7: #{basic_block_forward.5} parent=1 // pred_check_branch
      %26 = sbr.rel (0) target = $region9
    $region8: #{basic_block_forward.5} parent=1 // pred_region
      %s28 = ssub.s32 4096, 4096
      %29 = vsyncadd [#allocation6], %s28
      %s30 = sshll.u32 [#allocation5], 4
      %s31 = int_to_ptr.vmem [resolvable:$true] %s30
      %36 = dma.hbm_to_vmem [thread:$0]  %s1, 4096, %s31, [#allocation6], 64, 64, 4
    $region9: #{basic_block_forward.5} parent=1 // pred_fallthru
      _
    // Predicated region
    $region10: #{basic_block_forward.5} parent=1 // pred_check
      _
    $region11: #{basic_block_forward.5} parent=1 // pred_check_branch
      %38 = sbr.rel (0) target = $region13
    $region12: #{basic_block_forward.5} parent=1 // pred_region
      %s40 = ssub.s32 16, 16
      %41 = vsyncadd [#allocation6], %s40
      %s43 = sshll.u32 [#allocation7], 4
      %s44 = int_to_ptr.vmem [resolvable:$true] %s43
      %46 = dma.hbm_to_vmem [thread:$0]  %s2, 16, %s44, [#allocation6]
    $region13: #{basic_block_forward.5} parent=1 // pred_fallthru
      _
    // Predicated region
    $region14: #{basic_block_forward.5} parent=1 // pred_check
      _
    $region15: #{basic_block_forward.5} parent=1 // pred_check_branch
      %48 = sbr.rel (0) target = $region17
    $region16: #{basic_block_forward.5} parent=1 // pred_region
      %s50 = ssub.s32 16, 16
      %51 = vsyncadd [#allocation9], %s50
      %s53 = sshll.u32 [#allocation8], 4
      %s54 = int_to_ptr.vmem [resolvable:$true] %s53
      %56 = dma.hbm_to_vmem [thread:$0]  %s3, 16, %s54, [#allocation9]
    $region17: #{basic_block_forward.5} parent=1 // pred_fallthru
      _
    // Predicated region
    $region18: #{basic_block_forward.5} parent=1 // pred_check
      _
    $region19: #{basic_block_forward.5} parent=1 // pred_check_branch
      %58 = sbr.rel (0) target = $region21
    $region20: #{basic_block_forward.5} parent=1 // pred_region
      %59 = dma.done [#allocation3], 4096
    $region21: #{basic_block_forward.5} parent=1 // pred_fallthru
      _
    // Predicated region
    $region22: #{basic_block_forward.5} parent=1 // pred_check
      _
    $region23: #{basic_block_forward.5} parent=1 // pred_check_branch
      %61 = sbr.rel (0) target = $region25
    $region24: #{basic_block_forward.5} parent=1 // pred_region
      %62 = dma.done [#allocation6], 4096
    $region25: #{basic_block_forward.5} parent=1 // pred_fallthru
      _
    // Predicated region
    $region26: #{basic_block_forward.5} parent=1 // pred_check
      _
    $region27: #{basic_block_forward.5} parent=1 // pred_check_branch
      %64 = sbr.rel (0) target = $region29
    $region28: #{basic_block_forward.5} parent=1 // pred_region
      %65 = dma.done [#allocation6], 16
    $region29: #{basic_block_forward.5} parent=1 // pred_fallthru
      _
    // Predicated region
    $region30: #{basic_block_forward.5} parent=1 // pred_check
      _
    $region31: #{basic_block_forward.5} parent=1 // pred_check_branch
      %67 = sbr.rel (0) target = $region33
    $region32: #{basic_block_forward.5} parent=1 // pred_region
      %68 = dma.done [#allocation9], 16
    $region33: #{basic_block_forward.5} parent=1 // pred_fallthru
      _
    %v69 = vld [vmem:[#allocation2] sm:$0xf]
    %v70 = vld [vmem:[#allocation2 + $0x4] sm:$0xf]
    %v71 = vld [vmem:[#allocation2 + $0x8] sm:$0xf]
    %v72 = vld [vmem:[#allocation2 + $0xc] sm:$0xf]
    %v73 = vld [vmem:[#allocation2 + $0x10] sm:$0xf]
    %v74 = vld [vmem:[#allocation2 + $0x14] sm:$0xf]
    %v75 = vld [vmem:[#allocation2 + $0x18] sm:$0xf]
    %v76 = vld [vmem:[#allocation2 + $0x1c] sm:$0xf]
    %v77 = vld [vmem:[#allocation2 + $0x20] sm:$0xf]
    %v78 = vld [vmem:[#allocation2 + $0x24] sm:$0xf]
    %v79 = vld [vmem:[#allocation2 + $0x28] sm:$0xf]
    %v80 = vld [vmem:[#allocation2 + $0x2c] sm:$0xf]
    %v81 = vld [vmem:[#allocation2 + $0x30] sm:$0xf]
    %v82 = vld [vmem:[#allocation2 + $0x34] sm:$0xf]
    %v83 = vld [vmem:[#allocation2 + $0x38] sm:$0xf]
    %v84 = vld [vmem:[#allocation2 + $0x3c] sm:$0xf]
    %v85 = vld [vmem:[#allocation2 + $0x40] sm:$0xf]
    %v86 = vld [vmem:[#allocation2 + $0x44] sm:$0xf]
    %v87 = vld [vmem:[#allocation2 + $0x48] sm:$0xf]
    %v88 = vld [vmem:[#allocation2 + $0x4c] sm:$0xf]
    %v89 = vld [vmem:[#allocation2 + $0x50] sm:$0xf]
    %v90 = vld [vmem:[#allocation2 + $0x54] sm:$0xf]
    %v91 = vld [vmem:[#allocation2 + $0x58] sm:$0xf]
    %v92 = vld [vmem:[#allocation2 + $0x5c] sm:$0xf]
    %v93 = vld [vmem:[#allocation2 + $0x60] sm:$0xf]
    %v94 = vld [vmem:[#allocation2 + $0x64] sm:$0xf]
    %v95 = vld [vmem:[#allocation2 + $0x68] sm:$0xf]
    %v96 = vld [vmem:[#allocation2 + $0x6c] sm:$0xf]
    %v97 = vld [vmem:[#allocation2 + $0x70] sm:$0xf]
    %v98 = vld [vmem:[#allocation2 + $0x74] sm:$0xf]
    %v99 = vld [vmem:[#allocation2 + $0x78] sm:$0xf]
    %v100 = vld [vmem:[#allocation2 + $0x7c] sm:$0xf]
    %v101 = vld [vmem:[#allocation2 + $0x80] sm:$0xf]
    %v102 = vld [vmem:[#allocation2 + $0x84] sm:$0xf]
    %v103 = vld [vmem:[#allocation2 + $0x88] sm:$0xf]
    %v104 = vld [vmem:[#allocation2 + $0x8c] sm:$0xf]
    %v105 = vld [vmem:[#allocation2 + $0x90] sm:$0xf]
    %v106 = vld [vmem:[#allocation2 + $0x94] sm:$0xf]
    %v107 = vld [vmem:[#allocation2 + $0x98] sm:$0xf]
    %v108 = vld [vmem:[#allocation2 + $0x9c] sm:$0xf]
    %v109 = vld [vmem:[#allocation2 + $0xa0] sm:$0xf]
    %v110 = vld [vmem:[#allocation2 + $0xa4] sm:$0xf]
    %v111 = vld [vmem:[#allocation2 + $0xa8] sm:$0xf]
    %v112 = vld [vmem:[#allocation2 + $0xac] sm:$0xf]
    %v113 = vld [vmem:[#allocation2 + $0xb0] sm:$0xf]
    %v114 = vld [vmem:[#allocation2 + $0xb4] sm:$0xf]
    %v115 = vld [vmem:[#allocation2 + $0xb8] sm:$0xf]
    %v116 = vld [vmem:[#allocation2 + $0xbc] sm:$0xf]
    %v117 = vld [vmem:[#allocation2 + $0xc0] sm:$0xf]
    %v118 = vld [vmem:[#allocation2 + $0xc4] sm:$0xf]
    %v119 = vld [vmem:[#allocation2 + $0xc8] sm:$0xf]
    %v120 = vld [vmem:[#allocation2 + $0xcc] sm:$0xf]
    %v121 = vld [vmem:[#allocation2 + $0xd0] sm:$0xf]
    %v122 = vld [vmem:[#allocation2 + $0xd4] sm:$0xf]
    %v123 = vld [vmem:[#allocation2 + $0xd8] sm:$0xf]
    %v124 = vld [vmem:[#allocation2 + $0xdc] sm:$0xf]
    %v125 = vld [vmem:[#allocation2 + $0xe0] sm:$0xf]
    %v126 = vld [vmem:[#allocation2 + $0xe4] sm:$0xf]
    %v127 = vld [vmem:[#allocation2 + $0xe8] sm:$0xf]
    %v128 = vld [vmem:[#allocation2 + $0xec] sm:$0xf]
    %v129 = vld [vmem:[#allocation2 + $0xf0] sm:$0xf]
    %v130 = vld [vmem:[#allocation2 + $0xf4] sm:$0xf]
    %v131 = vld [vmem:[#allocation2 + $0xf8] sm:$0xf]
    %v132 = vld [vmem:[#allocation2 + $0xfc] sm:$0xf]
    %v133 = vunpack.c.l.bf16 %v69
    %v134 = vunpack.c.l.bf16 %v70
    %v135 = vunpack.c.l.bf16 %v71
    %v136 = vunpack.c.l.bf16 %v72
    %v137 = vunpack.c.l.bf16 %v73
    %v138 = vunpack.c.l.bf16 %v74
    %v139 = vunpack.c.l.bf16 %v75
    %v140 = vunpack.c.l.bf16 %v76
    %v141 = vunpack.c.l.bf16 %v77
    %v142 = vunpack.c.l.bf16 %v78
    %v143 = vunpack.c.l.bf16 %v79
    %v144 = vunpack.c.l.bf16 %v80
    %v145 = vunpack.c.l.bf16 %v81
    %v146 = vunpack.c.l.bf16 %v82
    %v147 = vunpack.c.l.bf16 %v83
    %v148 = vunpack.c.l.bf16 %v84
    %v149 = vunpack.c.l.bf16 %v85
    %v150 = vunpack.c.l.bf16 %v86
    %v151 = vunpack.c.l.bf16 %v87
    %v152 = vunpack.c.l.bf16 %v88
    %v153 = vunpack.c.l.bf16 %v89
    %v154 = vunpack.c.l.bf16 %v90
    %v155 = vunpack.c.l.bf16 %v91
    %v156 = vunpack.c.l.bf16 %v92
    %v157 = vunpack.c.l.bf16 %v93
    %v158 = vunpack.c.l.bf16 %v94
    %v159 = vunpack.c.l.bf16 %v95
    %v160 = vunpack.c.l.bf16 %v96
    %v161 = vunpack.c.l.bf16 %v97
    %v162 = vunpack.c.l.bf16 %v98
    %v163 = vunpack.c.l.bf16 %v99
    %v164 = vunpack.c.l.bf16 %v100
    %v165 = vunpack.c.l.bf16 %v101
    %v166 = vunpack.c.l.bf16 %v102
    %v167 = vunpack.c.l.bf16 %v103
    %v168 = vunpack.c.l.bf16 %v104
    %v169 = vunpack.c.l.bf16 %v105
    %v170 = vunpack.c.l.bf16 %v106
    %v171 = vunpack.c.l.bf16 %v107
    %v172 = vunpack.c.l.bf16 %v108
    %v173 = vunpack.c.l.bf16 %v109
    %v174 = vunpack.c.l.bf16 %v110
    %v175 = vunpack.c.l.bf16 %v111
    %v176 = vunpack.c.l.bf16 %v112
    %v177 = vunpack.c.l.bf16 %v113
    %v178 = vunpack.c.l.bf16 %v114
    %v179 = vunpack.c.l.bf16 %v115
    %v180 = vunpack.c.l.bf16 %v116
    %v181 = vunpack.c.l.bf16 %v117
    %v182 = vunpack.c.l.bf16 %v118
    %v183 = vunpack.c.l.bf16 %v119
    %v184 = vunpack.c.l.bf16 %v120
    %v185 = vunpack.c.l.bf16 %v121
    %v186 = vunpack.c.l.bf16 %v122
    %v187 = vunpack.c.l.bf16 %v123
    %v188 = vunpack.c.l.bf16 %v124
    %v189 = vunpack.c.l.bf16 %v125
    %v190 = vunpack.c.l.bf16 %v126
    %v191 = vunpack.c.l.bf16 %v127
    %v192 = vunpack.c.l.bf16 %v128
    %v193 = vunpack.c.l.bf16 %v129
    %v194 = vunpack.c.l.bf16 %v130
    %v195 = vunpack.c.l.bf16 %v131
    %v196 = vunpack.c.l.bf16 %v132
    %v197 = vld [vmem:[#allocation7] sm:$0x1]
    %v199 = vlaneseq
    %v200 = vshrl.u32 %v199, 7
    %v201 = vsub.s32 0, %v200
    %v202 = vrot.slane %v197, %v201
    %v204 = vmul.f32 %v133, %v202
    %v205 = vmul.f32 %v134, %v202
    %v206 = vmul.f32 %v135, %v202
    %v207 = vmul.f32 %v136, %v202
    %v208 = vmul.f32 %v137, %v202
    %v209 = vmul.f32 %v138, %v202
    %v210 = vmul.f32 %v139, %v202
    %v211 = vmul.f32 %v140, %v202
    %v212 = vmul.f32 %v141, %v202
    %v213 = vmul.f32 %v142, %v202
    %v214 = vmul.f32 %v143, %v202
    %v215 = vmul.f32 %v144, %v202
    %v216 = vmul.f32 %v145, %v202
    %v217 = vmul.f32 %v146, %v202
    %v218 = vmul.f32 %v147, %v202
    %v219 = vmul.f32 %v148, %v202
    %v220 = vmul.f32 %v149, %v202
    %v221 = vmul.f32 %v150, %v202
    %v222 = vmul.f32 %v151, %v202
    %v223 = vmul.f32 %v152, %v202
    %v224 = vmul.f32 %v153, %v202
    %v225 = vmul.f32 %v154, %v202
    %v226 = vmul.f32 %v155, %v202
    %v227 = vmul.f32 %v156, %v202
    %v228 = vmul.f32 %v157, %v202
    %v229 = vmul.f32 %v158, %v202
    %v230 = vmul.f32 %v159, %v202
    %v231 = vmul.f32 %v160, %v202
    %v232 = vmul.f32 %v161, %v202
    %v233 = vmul.f32 %v162, %v202
    %v234 = vmul.f32 %v163, %v202
    %v235 = vmul.f32 %v164, %v202
    %v236 = vmul.f32 %v165, %v202
    %v237 = vmul.f32 %v166, %v202
    %v238 = vmul.f32 %v167, %v202
    %v239 = vmul.f32 %v168, %v202
    %v240 = vmul.f32 %v169, %v202
    %v241 = vmul.f32 %v170, %v202
    %v242 = vmul.f32 %v171, %v202
    %v243 = vmul.f32 %v172, %v202
    %v244 = vmul.f32 %v173, %v202
    %v245 = vmul.f32 %v174, %v202
    %v246 = vmul.f32 %v175, %v202
    %v247 = vmul.f32 %v176, %v202
    %v248 = vmul.f32 %v177, %v202
    %v249 = vmul.f32 %v178, %v202
    %v250 = vmul.f32 %v179, %v202
    %v251 = vmul.f32 %v180, %v202
    %v252 = vmul.f32 %v181, %v202
    %v253 = vmul.f32 %v182, %v202
    %v254 = vmul.f32 %v183, %v202
    %v255 = vmul.f32 %v184, %v202
    %v256 = vmul.f32 %v185, %v202
    %v257 = vmul.f32 %v186, %v202
    %v258 = vmul.f32 %v187, %v202
    %v259 = vmul.f32 %v188, %v202
    %v260 = vmul.f32 %v189, %v202
    %v261 = vmul.f32 %v190, %v202
    %v262 = vmul.f32 %v191, %v202
    %v263 = vmul.f32 %v192, %v202
    %v264 = vmul.f32 %v193, %v202
    %v265 = vmul.f32 %v194, %v202
    %v266 = vmul.f32 %v195, %v202
    %v267 = vmul.f32 %v196, %v202
    %v268 = vld [vmem:[#allocation8] sm:$0x1]
    %v270 = vlaneseq
    %v271 = vshrl.u32 %v270, 7
    %v272 = vsub.s32 0, %v271
    %v273 = vrot.slane %v268, %v272
    %v275 = vadd.f32 %v204, %v273
    %v276 = vadd.f32 %v205, %v273
    %v277 = vadd.f32 %v206, %v273
    %v278 = vadd.f32 %v207, %v273
    %v279 = vadd.f32 %v208, %v273
    %v280 = vadd.f32 %v209, %v273
    %v281 = vadd.f32 %v210, %v273
    %v282 = vadd.f32 %v211, %v273
    %v283 = vadd.f32 %v212, %v273
    %v284 = vadd.f32 %v213, %v273
    %v285 = vadd.f32 %v214, %v273
    %v286 = vadd.f32 %v215, %v273
    %v287 = vadd.f32 %v216, %v273
    %v288 = vadd.f32 %v217, %v273
    %v289 = vadd.f32 %v218, %v273
    %v290 = vadd.f32 %v219, %v273
    %v291 = vadd.f32 %v220, %v273
    %v292 = vadd.f32 %v221, %v273
    %v293 = vadd.f32 %v222, %v273
    %v294 = vadd.f32 %v223, %v273
    %v295 = vadd.f32 %v224, %v273
    %v296 = vadd.f32 %v225, %v273
    %v297 = vadd.f32 %v226, %v273
    %v298 = vadd.f32 %v227, %v273
    %v299 = vadd.f32 %v228, %v273
    %v300 = vadd.f32 %v229, %v273
    %v301 = vadd.f32 %v230, %v273
    %v302 = vadd.f32 %v231, %v273
    %v303 = vadd.f32 %v232, %v273
    %v304 = vadd.f32 %v233, %v273
    %v305 = vadd.f32 %v234, %v273
    %v306 = vadd.f32 %v235, %v273
    %v307 = vadd.f32 %v236, %v273
    %v308 = vadd.f32 %v237, %v273
    %v309 = vadd.f32 %v238, %v273
    %v310 = vadd.f32 %v239, %v273
    %v311 = vadd.f32 %v240, %v273
    %v312 = vadd.f32 %v241, %v273
    %v313 = vadd.f32 %v242, %v273
    %v314 = vadd.f32 %v243, %v273
    %v315 = vadd.f32 %v244, %v273
    %v316 = vadd.f32 %v245, %v273
    %v317 = vadd.f32 %v246, %v273
    %v318 = vadd.f32 %v247, %v273
    %v319 = vadd.f32 %v248, %v273
    %v320 = vadd.f32 %v249, %v273
    %v321 = vadd.f32 %v250, %v273
    %v322 = vadd.f32 %v251, %v273
    %v323 = vadd.f32 %v252, %v273
    %v324 = vadd.f32 %v253, %v273
    %v325 = vadd.f32 %v254, %v273
    %v326 = vadd.f32 %v255, %v273
    %v327 = vadd.f32 %v256, %v273
    %v328 = vadd.f32 %v257, %v273
    %v329 = vadd.f32 %v258, %v273
    %v330 = vadd.f32 %v259, %v273
    %v331 = vadd.f32 %v260, %v273
    %v332 = vadd.f32 %v261, %v273
    %v333 = vadd.f32 %v262, %v273
    %v334 = vadd.f32 %v263, %v273
    %v335 = vadd.f32 %v264, %v273
    %v336 = vadd.f32 %v265, %v273
    %v337 = vadd.f32 %v266, %v273
    %v338 = vadd.f32 %v267, %v273
    %v339 = vld [vmem:[#allocation5] sm:$0xf]
    %v340 = vld [vmem:[#allocation5 + $0x4] sm:$0xf]
    %v341 = vld [vmem:[#allocation5 + $0x8] sm:$0xf]
    %v342 = vld [vmem:[#allocation5 + $0xc] sm:$0xf]
    %v343 = vld [vmem:[#allocation5 + $0x10] sm:$0xf]
    %v344 = vld [vmem:[#allocation5 + $0x14] sm:$0xf]
    %v345 = vld [vmem:[#allocation5 + $0x18] sm:$0xf]
    %v346 = vld [vmem:[#allocation5 + $0x1c] sm:$0xf]
    %v347 = vld [vmem:[#allocation5 + $0x20] sm:$0xf]
    %v348 = vld [vmem:[#allocation5 + $0x24] sm:$0xf]
    %v349 = vld [vmem:[#allocation5 + $0x28] sm:$0xf]
    %v350 = vld [vmem:[#allocation5 + $0x2c] sm:$0xf]
    %v351 = vld [vmem:[#allocation5 + $0x30] sm:$0xf]
    %v352 = vld [vmem:[#allocation5 + $0x34] sm:$0xf]
    %v353 = vld [vmem:[#allocation5 + $0x38] sm:$0xf]
    %v354 = vld [vmem:[#allocation5 + $0x3c] sm:$0xf]
    %v355 = vld [vmem:[#allocation5 + $0x40] sm:$0xf]
    %v356 = vld [vmem:[#allocation5 + $0x44] sm:$0xf]
    %v357 = vld [vmem:[#allocation5 + $0x48] sm:$0xf]
    %v358 = vld [vmem:[#allocation5 + $0x4c] sm:$0xf]
    %v359 = vld [vmem:[#allocation5 + $0x50] sm:$0xf]
    %v360 = vld [vmem:[#allocation5 + $0x54] sm:$0xf]
    %v361 = vld [vmem:[#allocation5 + $0x58] sm:$0xf]
    %v362 = vld [vmem:[#allocation5 + $0x5c] sm:$0xf]
    %v363 = vld [vmem:[#allocation5 + $0x60] sm:$0xf]
    %v364 = vld [vmem:[#allocation5 + $0x64] sm:$0xf]
    %v365 = vld [vmem:[#allocation5 + $0x68] sm:$0xf]
    %v366 = vld [vmem:[#allocation5 + $0x6c] sm:$0xf]
    %v367 = vld [vmem:[#allocation5 + $0x70] sm:$0xf]
    %v368 = vld [vmem:[#allocation5 + $0x74] sm:$0xf]
    %v369 = vld [vmem:[#allocation5 + $0x78] sm:$0xf]
    %v370 = vld [vmem:[#allocation5 + $0x7c] sm:$0xf]
    %v371 = vld [vmem:[#allocation5 + $0x80] sm:$0xf]
    %v372 = vld [vmem:[#allocation5 + $0x84] sm:$0xf]
    %v373 = vld [vmem:[#allocation5 + $0x88] sm:$0xf]
    %v374 = vld [vmem:[#allocation5 + $0x8c] sm:$0xf]
    %v375 = vld [vmem:[#allocation5 + $0x90] sm:$0xf]
    %v376 = vld [vmem:[#allocation5 + $0x94] sm:$0xf]
    %v377 = vld [vmem:[#allocation5 + $0x98] sm:$0xf]
    %v378 = vld [vmem:[#allocation5 + $0x9c] sm:$0xf]
    %v379 = vld [vmem:[#allocation5 + $0xa0] sm:$0xf]
    %v380 = vld [vmem:[#allocation5 + $0xa4] sm:$0xf]
    %v381 = vld [vmem:[#allocation5 + $0xa8] sm:$0xf]
    %v382 = vld [vmem:[#allocation5 + $0xac] sm:$0xf]
    %v383 = vld [vmem:[#allocation5 + $0xb0] sm:$0xf]
    %v384 = vld [vmem:[#allocation5 + $0xb4] sm:$0xf]
    %v385 = vld [vmem:[#allocation5 + $0xb8] sm:$0xf]
    %v386 = vld [vmem:[#allocation5 + $0xbc] sm:$0xf]
    %v387 = vld [vmem:[#allocation5 + $0xc0] sm:$0xf]
    %v388 = vld [vmem:[#allocation5 + $0xc4] sm:$0xf]
    %v389 = vld [vmem:[#allocation5 + $0xc8] sm:$0xf]
    %v390 = vld [vmem:[#allocation5 + $0xcc] sm:$0xf]
    %v391 = vld [vmem:[#allocation5 + $0xd0] sm:$0xf]
    %v392 = vld [vmem:[#allocation5 + $0xd4] sm:$0xf]
    %v393 = vld [vmem:[#allocation5 + $0xd8] sm:$0xf]
    %v394 = vld [vmem:[#allocation5 + $0xdc] sm:$0xf]
    %v395 = vld [vmem:[#allocation5 + $0xe0] sm:$0xf]
    %v396 = vld [vmem:[#allocation5 + $0xe4] sm:$0xf]
    %v397 = vld [vmem:[#allocation5 + $0xe8] sm:$0xf]
    %v398 = vld [vmem:[#allocation5 + $0xec] sm:$0xf]
    %v399 = vld [vmem:[#allocation5 + $0xf0] sm:$0xf]
    %v400 = vld [vmem:[#allocation5 + $0xf4] sm:$0xf]
    %v401 = vld [vmem:[#allocation5 + $0xf8] sm:$0xf]
    %v402 = vld [vmem:[#allocation5 + $0xfc] sm:$0xf]
    %v403 = vunpack.c.l.bf16 %v339
    %v404 = vunpack.c.l.bf16 %v340
    %v405 = vunpack.c.l.bf16 %v341
    %v406 = vunpack.c.l.bf16 %v342
    %v407 = vunpack.c.l.bf16 %v343
    %v408 = vunpack.c.l.bf16 %v344
    %v409 = vunpack.c.l.bf16 %v345
    %v410 = vunpack.c.l.bf16 %v346
    %v411 = vunpack.c.l.bf16 %v347
    %v412 = vunpack.c.l.bf16 %v348
    %v413 = vunpack.c.l.bf16 %v349
    %v414 = vunpack.c.l.bf16 %v350
    %v415 = vunpack.c.l.bf16 %v351
    %v416 = vunpack.c.l.bf16 %v352
    %v417 = vunpack.c.l.bf16 %v353
    %v418 = vunpack.c.l.bf16 %v354
    %v419 = vunpack.c.l.bf16 %v355
    %v420 = vunpack.c.l.bf16 %v356
    %v421 = vunpack.c.l.bf16 %v357
    %v422 = vunpack.c.l.bf16 %v358
    %v423 = vunpack.c.l.bf16 %v359
    %v424 = vunpack.c.l.bf16 %v360
    %v425 = vunpack.c.l.bf16 %v361
    %v426 = vunpack.c.l.bf16 %v362
    %v427 = vunpack.c.l.bf16 %v363
    %v428 = vunpack.c.l.bf16 %v364
    %v429 = vunpack.c.l.bf16 %v365
    %v430 = vunpack.c.l.bf16 %v366
    %v431 = vunpack.c.l.bf16 %v367
    %v432 = vunpack.c.l.bf16 %v368
    %v433 = vunpack.c.l.bf16 %v369
    %v434 = vunpack.c.l.bf16 %v370
    %v435 = vunpack.c.l.bf16 %v371
    %v436 = vunpack.c.l.bf16 %v372
    %v437 = vunpack.c.l.bf16 %v373
    %v438 = vunpack.c.l.bf16 %v374
    %v439 = vunpack.c.l.bf16 %v375
    %v440 = vunpack.c.l.bf16 %v376
    %v441 = vunpack.c.l.bf16 %v377
    %v442 = vunpack.c.l.bf16 %v378
    %v443 = vunpack.c.l.bf16 %v379
    %v444 = vunpack.c.l.bf16 %v380
    %v445 = vunpack.c.l.bf16 %v381
    %v446 = vunpack.c.l.bf16 %v382
    %v447 = vunpack.c.l.bf16 %v383
    %v448 = vunpack.c.l.bf16 %v384
    %v449 = vunpack.c.l.bf16 %v385
    %v450 = vunpack.c.l.bf16 %v386
    %v451 = vunpack.c.l.bf16 %v387
    %v452 = vunpack.c.l.bf16 %v388
    %v453 = vunpack.c.l.bf16 %v389
    %v454 = vunpack.c.l.bf16 %v390
    %v455 = vunpack.c.l.bf16 %v391
    %v456 = vunpack.c.l.bf16 %v392
    %v457 = vunpack.c.l.bf16 %v393
    %v458 = vunpack.c.l.bf16 %v394
    %v459 = vunpack.c.l.bf16 %v395
    %v460 = vunpack.c.l.bf16 %v396
    %v461 = vunpack.c.l.bf16 %v397
    %v462 = vunpack.c.l.bf16 %v398
    %v463 = vunpack.c.l.bf16 %v399
    %v464 = vunpack.c.l.bf16 %v400
    %v465 = vunpack.c.l.bf16 %v401
    %v466 = vunpack.c.l.bf16 %v402
    %v467 = vadd.f32 %v275, %v403
    %v468 = vadd.f32 %v276, %v404
    %v469 = vadd.f32 %v277, %v405
    %v470 = vadd.f32 %v278, %v406
    %v471 = vadd.f32 %v279, %v407
    %v472 = vadd.f32 %v280, %v408
    %v473 = vadd.f32 %v281, %v409
    %v474 = vadd.f32 %v282, %v410
    %v475 = vadd.f32 %v283, %v411
    %v476 = vadd.f32 %v284, %v412
    %v477 = vadd.f32 %v285, %v413
    %v478 = vadd.f32 %v286, %v414
    %v479 = vadd.f32 %v287, %v415
    %v480 = vadd.f32 %v288, %v416
    %v481 = vadd.f32 %v289, %v417
    %v482 = vadd.f32 %v290, %v418
    %v483 = vadd.f32 %v291, %v419
    %v484 = vadd.f32 %v292, %v420
    %v485 = vadd.f32 %v293, %v421
    %v486 = vadd.f32 %v294, %v422
    %v487 = vadd.f32 %v295, %v423
    %v488 = vadd.f32 %v296, %v424
    %v489 = vadd.f32 %v297, %v425
    %v490 = vadd.f32 %v298, %v426
    %v491 = vadd.f32 %v299, %v427
    %v492 = vadd.f32 %v300, %v428
    %v493 = vadd.f32 %v301, %v429
    %v494 = vadd.f32 %v302, %v430
    %v495 = vadd.f32 %v303, %v431
    %v496 = vadd.f32 %v304, %v432
    %v497 = vadd.f32 %v305, %v433
    %v498 = vadd.f32 %v306, %v434
    %v499 = vadd.f32 %v307, %v435
    %v500 = vadd.f32 %v308, %v436
    %v501 = vadd.f32 %v309, %v437
    %v502 = vadd.f32 %v310, %v438
    %v503 = vadd.f32 %v311, %v439
    %v504 = vadd.f32 %v312, %v440
    %v505 = vadd.f32 %v313, %v441
    %v506 = vadd.f32 %v314, %v442
    %v507 = vadd.f32 %v315, %v443
    %v508 = vadd.f32 %v316, %v444
    %v509 = vadd.f32 %v317, %v445
    %v510 = vadd.f32 %v318, %v446
    %v511 = vadd.f32 %v319, %v447
    %v512 = vadd.f32 %v320, %v448
    %v513 = vadd.f32 %v321, %v449
    %v514 = vadd.f32 %v322, %v450
    %v515 = vadd.f32 %v323, %v451
    %v516 = vadd.f32 %v324, %v452
    %v517 = vadd.f32 %v325, %v453
    %v518 = vadd.f32 %v326, %v454
    %v519 = vadd.f32 %v327, %v455
    %v520 = vadd.f32 %v328, %v456
    %v521 = vadd.f32 %v329, %v457
    %v522 = vadd.f32 %v330, %v458
    %v523 = vadd.f32 %v331, %v459
    %v524 = vadd.f32 %v332, %v460
    %v525 = vadd.f32 %v333, %v461
    %v526 = vadd.f32 %v334, %v462
    %v527 = vadd.f32 %v335, %v463
    %v528 = vadd.f32 %v336, %v464
    %v529 = vadd.f32 %v337, %v465
    %v530 = vadd.f32 %v338, %v466
    %v531 = vmax.f32 %v467, 0.0
    %v532 = vmax.f32 %v468, 0.0
    %v533 = vmax.f32 %v469, 0.0
    %v534 = vmax.f32 %v470, 0.0
    %v535 = vmax.f32 %v471, 0.0
    %v536 = vmax.f32 %v472, 0.0
    %v537 = vmax.f32 %v473, 0.0
    %v538 = vmax.f32 %v474, 0.0
    %v539 = vmax.f32 %v475, 0.0
    %v540 = vmax.f32 %v476, 0.0
    %v541 = vmax.f32 %v477, 0.0
    %v542 = vmax.f32 %v478, 0.0
    %v543 = vmax.f32 %v479, 0.0
    %v544 = vmax.f32 %v480, 0.0
    %v545 = vmax.f32 %v481, 0.0
    %v546 = vmax.f32 %v482, 0.0
    %v547 = vmax.f32 %v483, 0.0
    %v548 = vmax.f32 %v484, 0.0
    %v549 = vmax.f32 %v485, 0.0
    %v550 = vmax.f32 %v486, 0.0
    %v551 = vmax.f32 %v487, 0.0
    %v552 = vmax.f32 %v488, 0.0
    %v553 = vmax.f32 %v489, 0.0
    %v554 = vmax.f32 %v490, 0.0
    %v555 = vmax.f32 %v491, 0.0
    %v556 = vmax.f32 %v492, 0.0
    %v557 = vmax.f32 %v493, 0.0
    %v558 = vmax.f32 %v494, 0.0
    %v559 = vmax.f32 %v495, 0.0
    %v560 = vmax.f32 %v496, 0.0
    %v561 = vmax.f32 %v497, 0.0
    %v562 = vmax.f32 %v498, 0.0
    %v563 = vmax.f32 %v499, 0.0
    %v564 = vmax.f32 %v500, 0.0
    %v565 = vmax.f32 %v501, 0.0
    %v566 = vmax.f32 %v502, 0.0
    %v567 = vmax.f32 %v503, 0.0
    %v568 = vmax.f32 %v504, 0.0
    %v569 = vmax.f32 %v505, 0.0
    %v570 = vmax.f32 %v506, 0.0
    %v571 = vmax.f32 %v507, 0.0
    %v572 = vmax.f32 %v508, 0.0
    %v573 = vmax.f32 %v509, 0.0
    %v574 = vmax.f32 %v510, 0.0
    %v575 = vmax.f32 %v511, 0.0
    %v576 = vmax.f32 %v512, 0.0
    %v577 = vmax.f32 %v513, 0.0
    %v578 = vmax.f32 %v514, 0.0
    %v579 = vmax.f32 %v515, 0.0
    %v580 = vmax.f32 %v516, 0.0
    %v581 = vmax.f32 %v517, 0.0
    %v582 = vmax.f32 %v518, 0.0
    %v583 = vmax.f32 %v519, 0.0
    %v584 = vmax.f32 %v520, 0.0
    %v585 = vmax.f32 %v521, 0.0
    %v586 = vmax.f32 %v522, 0.0
    %v587 = vmax.f32 %v523, 0.0
    %v588 = vmax.f32 %v524, 0.0
    %v589 = vmax.f32 %v525, 0.0
    %v590 = vmax.f32 %v526, 0.0
    %v591 = vmax.f32 %v527, 0.0
    %v592 = vmax.f32 %v528, 0.0
    %v593 = vmax.f32 %v529, 0.0
    %v594 = vmax.f32 %v530, 0.0
    %595 = vst [vmem:[#allocation10] sm:$0xff] %v531
    %596 = vst [vmem:[#allocation10 + $0x8] sm:$0xff] %v532
    %597 = vst [vmem:[#allocation10 + $0x10] sm:$0xff] %v533
    %598 = vst [vmem:[#allocation10 + $0x18] sm:$0xff] %v534
    %599 = vst [vmem:[#allocation10 + $0x20] sm:$0xff] %v535
    %600 = vst [vmem:[#allocation10 + $0x28] sm:$0xff] %v536
    %601 = vst [vmem:[#allocation10 + $0x30] sm:$0xff] %v537
    %602 = vst [vmem:[#allocation10 + $0x38] sm:$0xff] %v538
    %603 = vst [vmem:[#allocation10 + $0x40] sm:$0xff] %v539
    %604 = vst [vmem:[#allocation10 + $0x48] sm:$0xff] %v540
    %605 = vst [vmem:[#allocation10 + $0x50] sm:$0xff] %v541
    %606 = vst [vmem:[#allocation10 + $0x58] sm:$0xff] %v542
    %607 = vst [vmem:[#allocation10 + $0x60] sm:$0xff] %v543
    %608 = vst [vmem:[#allocation10 + $0x68] sm:$0xff] %v544
    %609 = vst [vmem:[#allocation10 + $0x70] sm:$0xff] %v545
    %610 = vst [vmem:[#allocation10 + $0x78] sm:$0xff] %v546
    %611 = vst [vmem:[#allocation10 + $0x80] sm:$0xff] %v547
    %612 = vst [vmem:[#allocation10 + $0x88] sm:$0xff] %v548
    %613 = vst [vmem:[#allocation10 + $0x90] sm:$0xff] %v549
    %614 = vst [vmem:[#allocation10 + $0x98] sm:$0xff] %v550
    %615 = vst [vmem:[#allocation10 + $0xa0] sm:$0xff] %v551
    %616 = vst [vmem:[#allocation10 + $0xa8] sm:$0xff] %v552
    %617 = vst [vmem:[#allocation10 + $0xb0] sm:$0xff] %v553
    %618 = vst [vmem:[#allocation10 + $0xb8] sm:$0xff] %v554
    %619 = vst [vmem:[#allocation10 + $0xc0] sm:$0xff] %v555
    %620 = vst [vmem:[#allocation10 + $0xc8] sm:$0xff] %v556
    %621 = vst [vmem:[#allocation10 + $0xd0] sm:$0xff] %v557
    %622 = vst [vmem:[#allocation10 + $0xd8] sm:$0xff] %v558
    %623 = vst [vmem:[#allocation10 + $0xe0] sm:$0xff] %v559
    %624 = vst [vmem:[#allocation10 + $0xe8] sm:$0xff] %v560
    %625 = vst [vmem:[#allocation10 + $0xf0] sm:$0xff] %v561
    %626 = vst [vmem:[#allocation10 + $0xf8] sm:$0xff] %v562
    %627 = vst [vmem:[#allocation10 + $0x100] sm:$0xff] %v563
    %628 = vst [vmem:[#allocation10 + $0x108] sm:$0xff] %v564
    %629 = vst [vmem:[#allocation10 + $0x110] sm:$0xff] %v565
    %630 = vst [vmem:[#allocation10 + $0x118] sm:$0xff] %v566
    %631 = vst [vmem:[#allocation10 + $0x120] sm:$0xff] %v567
    %632 = vst [vmem:[#allocation10 + $0x128] sm:$0xff] %v568
    %633 = vst [vmem:[#allocation10 + $0x130] sm:$0xff] %v569
    %634 = vst [vmem:[#allocation10 + $0x138] sm:$0xff] %v570
    %635 = vst [vmem:[#allocation10 + $0x140] sm:$0xff] %v571
    %636 = vst [vmem:[#allocation10 + $0x148] sm:$0xff] %v572
    %637 = vst [vmem:[#allocation10 + $0x150] sm:$0xff] %v573
    %638 = vst [vmem:[#allocation10 + $0x158] sm:$0xff] %v574
    %639 = vst [vmem:[#allocation10 + $0x160] sm:$0xff] %v575
    %640 = vst [vmem:[#allocation10 + $0x168] sm:$0xff] %v576
    %641 = vst [vmem:[#allocation10 + $0x170] sm:$0xff] %v577
    %642 = vst [vmem:[#allocation10 + $0x178] sm:$0xff] %v578
    %643 = vst [vmem:[#allocation10 + $0x180] sm:$0xff] %v579
    %644 = vst [vmem:[#allocation10 + $0x188] sm:$0xff] %v580
    %645 = vst [vmem:[#allocation10 + $0x190] sm:$0xff] %v581
    %646 = vst [vmem:[#allocation10 + $0x198] sm:$0xff] %v582
    %647 = vst [vmem:[#allocation10 + $0x1a0] sm:$0xff] %v583
    %648 = vst [vmem:[#allocation10 + $0x1a8] sm:$0xff] %v584
    %649 = vst [vmem:[#allocation10 + $0x1b0] sm:$0xff] %v585
    %650 = vst [vmem:[#allocation10 + $0x1b8] sm:$0xff] %v586
    %651 = vst [vmem:[#allocation10 + $0x1c0] sm:$0xff] %v587
    %652 = vst [vmem:[#allocation10 + $0x1c8] sm:$0xff] %v588
    %653 = vst [vmem:[#allocation10 + $0x1d0] sm:$0xff] %v589
    %654 = vst [vmem:[#allocation10 + $0x1d8] sm:$0xff] %v590
    %655 = vst [vmem:[#allocation10 + $0x1e0] sm:$0xff] %v591
    %656 = vst [vmem:[#allocation10 + $0x1e8] sm:$0xff] %v592
    %657 = vst [vmem:[#allocation10 + $0x1f0] sm:$0xff] %v593
    %658 = vst [vmem:[#allocation10 + $0x1f8] sm:$0xff] %v594
    // Predicated region
    $region34: #{basic_block_forward.5} parent=1 // pred_check
      _
    $region35: #{basic_block_forward.5} parent=1 // pred_check_branch
      %660 = sbr.rel (0) target = $region37
    $region36: #{basic_block_forward.5} parent=1 // pred_region
      %s662 = ssub.s32 8192, 8192
      %663 = vsyncadd [#allocation4], %s662
      %s664 = sshll.u32 [#allocation10], 4
      %s665 = int_to_ptr.vmem [resolvable:$true] %s664
      %670 = dma.vmem_to_hbm [thread:$0]  %s665, 8192, %s4, [#allocation4], 128, 128, 8
    $region37: #{basic_block_forward.5} parent=1 // pred_fallthru
      _
    // Predicated region
    $region38: #{basic_block_forward.5} parent=1 // pred_check
      _
    $region39: #{basic_block_forward.5} parent=1 // pred_check_branch
      %672 = sbr.rel (0) target = $region41
    $region40: #{basic_block_forward.5} parent=1 // pred_region
      %673 = dma.done [#allocation4], 8192
    $region41: #{basic_block_forward.5} parent=1 // pred_fallthru
      _
    %674 = vsyncpa [#allocation3], 1
    %675 = vsyncpa [#allocation6], 1
    %676 = vsyncpa [#allocation9], 1
    %677 = vsyncpa [#allocation4], 1

// kernel: basic_block_forward.3
$region0: #{basic_block_forward.3}
  #allocation0 [shape = 'u32[]', space=smem, size = 0x4, offset = 0x4, fixed_abs, tag = 'smem constant byte address 0x4 - core index']
  #allocation1 [shape = 'u32[144,128]{1,0:T(1,128)}', space=vmem, size = 0x12000, scoped, tag = 'internal scratch']
  %s0 = inlined_call_operand.hbm [shape: bf16[2,16,16,128], index: 0, kind: input, shape index: {}]
  %s1 = inlined_call_operand.hbm [shape: bf16[384,384], index: 1, kind: input, shape index: {}]
  %s2 = inlined_call_operand.hbm [shape: bf16[2,16,16,128], index: 2, kind: output, shape index: {0}]
  %s3 = inlined_call_operand.hbm [shape: f32[2,2,128], index: 3, kind: output, shape index: {1}]
  %4 = xla_tuple %s2, %s3
  %s5 = sld [smem:[#allocation0]]
  $region57: #{basic_block_forward.3} parent=0
    _
  %s7 = ssub.s32 1, %s5
  %s8 = scalar_select 0, %s7, %s5
  $region1: #{basic_block_forward.3} parent=0
    #allocation2 [shape = 'u8[131072]{0}', space=vmem, size = 0x20000, scoped, tag = 'input window, operand 0']
    #allocation3 [shape = 's32[2]{0}', space=sflag, size = 0x8, scoped, tag = 'scoped memory for basic_block_forward.3']
    #allocation4 [shape = 's32[2]{0}', space=sflag, size = 0x8, scoped, tag = 'scoped memory for basic_block_forward.3']
    #allocation5 [shape = 'u8[294912]{0}', space=vmem, size = 0x48000, scoped, tag = 'input window, operand 1, single buffered']
    #allocation6 [shape = 's32[1]{0}', space=sflag, size = 0x4, scoped, tag = 'scoped memory for basic_block_forward.3']
    #allocation7 [shape = 'u8[131072]{0}', space=vmem, size = 0x20000, scoped, tag = 'output window, operand 0']
    #allocation8 [shape = 'u8[2048]{0}', space=vmem, size = 0x800, scoped, tag = 'output window, operand 1']
    #allocation9 [shape = 's32[2]{0}', space=sflag, size = 0x8, scoped, tag = 'scoped memory for basic_block_forward.3']
    %9 = vsyncpa [#allocation3], 0
    %s10 = scalar_lea.sflag [#allocation3], 1
    %11 = vsyncpa %s10, 0
    %12 = vsyncpa [#allocation6], 0
    %13 = vsyncpa [#allocation4], 0
    %s14 = scalar_lea.sflag [#allocation4], 1
    %15 = vsyncpa %s14, 0
    %16 = vsyncpa [#allocation9], 0
    %s17 = scalar_lea.sflag [#allocation9], 1
    %18 = vsyncpa %s17, 0
    loop: start=0, step=1, limit=4
    $region2: #{basic_block_forward.3} parent=1 // loop_pre_header
      _
    $region3: #{basic_block_forward.3} parent=1 // loop_header
      %s20 = sphi 0, %s24
      %p21 = scmp.ge.s32.totalorder %s20, 4
      %s30 = sphi 0, %s32
      %s33 = sphi 0, %s30
      %s34 = sphi 0, %s33
      %s50 = sphi 0, %s34
      %s54 = sphi 0, %s54
      %s56 = sphi 0, %s54
      %s57 = sphi 0, %s56
      %s71 = sphi 0, %s57
      %s77 = sphi 0, %s79
      %s80 = sphi 0, %s77
      %s81 = sphi 0, %s80
      %s97 = sphi 0, %s81
      %s103 = sphi 0, %s105
      %s106 = sphi 0, %s103
      %s107 = sphi 0, %s106
      %s123 = sphi 0, %s107
    $region4: #{basic_block_forward.3} parent=1 // loop_header_branch
      %23 = sbr.rel (%p21) target = $region8
    $region5: #{basic_block_forward.3} parent=1 // loop_body
      %s25 = ssub.s32 %s20, 1
      %s26 = ssub.s32 %s20, 2
      %s27 = sadd.s32 %s20, 1
      %s28 = ssub.s32 %s20, %s27
      %p29 = scmp.eq.s32.totalorder %s28, 0
      %s31 = sadd.s32 %s30, 1
      %s32 = scalar_select %p29, %s30, %s31
      %p35 = pneg %p29
      %p36 = scmp.eq.s32.totalorder %s20, 1
      %p37 = por %p35, %p36
      %p38 = scmp.ne.s32.totalorder %s30, %s33
      %p39 = scmp.eq.s32.totalorder %s20, 0
      %p40 = por %p38, %p39
      %p41 = scmp.ne.s32.totalorder %s30, %s33
      %p42 = scmp.eq.s32.totalorder %s25, 1
      %p43 = por %p41, %p42
      %p44 = scmp.ne.s32.totalorder %s33, %s34
      %p45 = scmp.eq.s32.totalorder %s25, 0
      %p46 = por %p44, %p45
      %p47 = scmp.ne.s32.totalorder %s33, %s34
      %p48 = scmp.eq.s32.totalorder %s26, 1
      %p49 = por %p47, %p48
      %p51 = scmp.ne.s32.totalorder %s34, %s50
      %p52 = scmp.eq.s32.totalorder %s26, 0
      %p53 = por %p51, %p52
      %s55 = sadd.s32 %s54, 1
      %p58 = scmp.eq.s32.totalorder %s20, 1
      %p59 = scmp.ne.s32.totalorder %s54, %s56
      %p60 = scmp.eq.s32.totalorder %s20, 0
      %p61 = por %p59, %p60
      %p62 = scmp.ne.s32.totalorder %s54, %s56
      %p63 = scmp.eq.s32.totalorder %s25, 1
      %p64 = por %p62, %p63
      %p65 = scmp.ne.s32.totalorder %s56, %s57
      %p66 = scmp.eq.s32.totalorder %s25, 0
      %p67 = por %p65, %p66
      %p68 = scmp.ne.s32.totalorder %s56, %s57
      %p69 = scmp.eq.s32.totalorder %s26, 1
      %p70 = por %p68, %p69
      %p72 = scmp.ne.s32.totalorder %s57, %s71
      %p73 = scmp.eq.s32.totalorder %s26, 0
      %p74 = por %p72, %p73
      %s75 = ssub.s32 %s20, %s27
      %p76 = scmp.eq.s32.totalorder %s75, 0
      %s78 = sadd.s32 %s77, 1
      %s79 = scalar_select %p76, %s77, %s78
      %p82 = pneg %p76
      %p83 = scmp.eq.s32.totalorder %s20, 1
      %p84 = por %p82, %p83
      %p85 = scmp.ne.s32.totalorder %s77, %s80
      %p86 = scmp.eq.s32.totalorder %s20, 0
      %p87 = por %p85, %p86
      %p88 = scmp.ne.s32.totalorder %s77, %s80
      %p89 = scmp.eq.s32.totalorder %s25, 1
      %p90 = por %p88, %p89
      %p91 = scmp.ne.s32.totalorder %s80, %s81
      %p92 = scmp.eq.s32.totalorder %s25, 0
      %p93 = por %p91, %p92
      %p94 = scmp.ne.s32.totalorder %s80, %s81
      %p95 = scmp.eq.s32.totalorder %s26, 1
      %p96 = por %p94, %p95
      %p98 = scmp.ne.s32.totalorder %s81, %s97
      %p99 = scmp.eq.s32.totalorder %s26, 0
      %p100 = por %p98, %p99
      %s101 = ssub.s32 %s20, %s27
      %p102 = scmp.eq.s32.totalorder %s101, 0
      %s104 = sadd.s32 %s103, 1
      %s105 = scalar_select %p102, %s103, %s104
      %p108 = pneg %p102
      %p109 = scmp.eq.s32.totalorder %s20, 1
      %p110 = por %p108, %p109
      %p111 = scmp.ne.s32.totalorder %s103, %s106
      %p112 = scmp.eq.s32.totalorder %s20, 0
      %p113 = por %p111, %p112
      %p114 = scmp.ne.s32.totalorder %s103, %s106
      %p115 = scmp.eq.s32.totalorder %s25, 1
      %p116 = por %p114, %p115
      %p117 = scmp.ne.s32.totalorder %s106, %s107
      %p118 = scmp.eq.s32.totalorder %s25, 0
      %p119 = por %p117, %p118
      %p120 = scmp.ne.s32.totalorder %s106, %s107
      %p121 = scmp.eq.s32.totalorder %s26, 1
      %p122 = por %p120, %p121
      %p124 = scmp.ne.s32.totalorder %s107, %s123
      %p125 = scmp.eq.s32.totalorder %s26, 0
      %p126 = por %p124, %p125
      %p127 = scmp.le.s32.totalorder 1, %s20
      %p128 = scmp.lt.s32.totalorder %s20, 3
      %p129 = pnand %p127, %p128
      %p130 = pneg %p129
      // Predicated region
      $region9: #{basic_block_forward.3} parent=5 // pred_check
        _
      $region10: #{basic_block_forward.3} parent=5 // pred_check_branch
        %132 = sbr.rel (%p129) target = $region12
      $region11: #{basic_block_forward.3} parent=5 // pred_region
        %s133 = ssub.s32 %s20, 1
        // Predicated region
        $region13: #{basic_block_forward.3} parent=11 // pred_check
          %p134 = pneg %p67
        $region14: #{basic_block_forward.3} parent=11 // pred_check_branch
          %136 = sbr.rel (%p134) target = $region16
        $region15: #{basic_block_forward.3} parent=11 // pred_region
          %s138 = ssub.s32 9216, 9216
          %139 = vsyncadd [#allocation6], %s138
          %s140 = sshll.u32 [#allocation5], 4
          %s141 = int_to_ptr.vmem [resolvable:$true] %s140
          %146 = dma.hbm_to_vmem [thread:$0]  %s1, 9216, %s141, [#allocation6], 192, 192, 12
        $region16: #{basic_block_forward.3} parent=11 // pred_fallthru
          _
      $region12: #{basic_block_forward.3} parent=5 // pred_fallthru
        _
      %p147 = scmp.lt.s32.totalorder %s20, 2
      // Predicated region
      $region17: #{basic_block_forward.3} parent=5 // pred_check
        %p148 = pneg %p147
      $region18: #{basic_block_forward.3} parent=5 // pred_check_branch
        %150 = sbr.rel (%p148) target = $region20
      $region19: #{basic_block_forward.3} parent=5 // pred_region
        // Predicated region
        $region21: #{basic_block_forward.3} parent=19 // pred_check
          %p151 = pneg %p40
        $region22: #{basic_block_forward.3} parent=19 // pred_check_branch
          %153 = sbr.rel (%p151) target = $region24
        $region23: #{basic_block_forward.3} parent=19 // pred_region
          %s154 = sand.u32 %s30, 1
          %s155 = scalar_lea.sflag [#allocation3], %s154
          %s156 = sand.u32 %s30, 1
          %s157 = smul.addr %s156, 128
          %s158 = scalar_lea.vmem [#allocation2], %s157
          %s160 = ssub.s32 2048, 2048
          %161 = vsyncadd %s155, %s160
          %s162 = smul.addr %s20, 32
          %s163 = smul.addr %s162, 64
          %s164 = scalar_lea.hbm %s0, %s163
          %s165 = sshll.u32 %s158, 4
          %s166 = int_to_ptr.vmem [resolvable:$true] %s165
          %171 = dma.hbm_to_vmem [thread:$0]  %s164, 2048, %s166, %s155, 64, 64, 4
        $region24: #{basic_block_forward.3} parent=19 // pred_fallthru
          _
      $region20: #{basic_block_forward.3} parent=5 // pred_fallthru
        _
      %p172 = scmp.le.s32.totalorder 1, %s20
      %p173 = scmp.lt.s32.totalorder %s20, 3
      %p174 = pnand %p172, %p173
      %p175 = pneg %p174
      // Predicated region
      $region25: #{basic_block_forward.3} parent=5 // pred_check
        _
      $region26: #{basic_block_forward.3} parent=5 // pred_check_branch
        %177 = sbr.rel (%p174) target = $region28
      $region27: #{basic_block_forward.3} parent=5 // pred_region
        %s178 = ssub.s32 %s20, 1
        %s179 = sand.u32 %s33, 1
        %s180 = scalar_lea.sflag [#allocation3], %s179
        %s181 = sand.u32 %s33, 1
        %s182 = smul.addr %s181, 128
        %s183 = scalar_lea.vmem [#allocation2], %s182
        // Predicated region
        $region29: #{basic_block_forward.3} parent=27 // pred_check
          %p184 = pneg %p46
        $region30: #{basic_block_forward.3} parent=27 // pred_check_branch
          %186 = sbr.rel (%p184) target = $region32
        $region31: #{basic_block_forward.3} parent=27 // pred_region
          %187 = dma.done %s180, 2048
        $region32: #{basic_block_forward.3} parent=27 // pred_fallthru
          _
        // Predicated region
        $region33: #{basic_block_forward.3} parent=27 // pred_check
          %p188 = pneg %p67
        $region34: #{basic_block_forward.3} parent=27 // pred_check_branch
          %190 = sbr.rel (%p188) target = $region36
        $region35: #{basic_block_forward.3} parent=27 // pred_region
          %191 = dma.done [#allocation6], 9216
        $region36: #{basic_block_forward.3} parent=27 // pred_fallthru
          _
        %s192 = sand.u32 %s33, 1
        %s193 = scalar_lea.sflag [#allocation3], %s192
        %s194 = sand.u32 %s33, 1
        %s195 = smul.addr %s194, 128
        %s196 = scalar_lea.vmem [#allocation2], %s195
        %p197 = pneg %p46
        %p198 = pneg %p43
        %p199 = pneg %p67
        %p200 = pneg %p64
        %p201 = pneg %p93
        %p202 = pneg %p90
        %s203 = sand.u32 %s80, 1
        %s204 = scalar_lea.sflag [#allocation4], %s203
        %s205 = sand.u32 %s80, 1
        %s206 = smul.addr %s205, 128
        %s207 = scalar_lea.vmem [#allocation7], %s206
        %p208 = pneg %p119
        %p209 = pneg %p116
        %s210 = sand.u32 %s106, 1
        %s211 = scalar_lea.sflag [#allocation9], %s210
        %s212 = sand.u32 %s106, 1
        %s213 = smul.addr %s212, 2
        %s214 = scalar_lea.vmem [#allocation8], %s213
        %v216 = vld [vmem:[%s183] sm:$0xf]
        %v217 = vld [vmem:[%s183 + $0x4] sm:$0xf]
        %v218 = vld [vmem:[%s183 + $0x8] sm:$0xf]
        %v219 = vld [vmem:[%s183 + $0xc] sm:$0xf]
        %v220 = vld [vmem:[%s183 + $0x10] sm:$0xf]
        %v221 = vld [vmem:[%s183 + $0x14] sm:$0xf]
        %v222 = vld [vmem:[%s183 + $0x18] sm:$0xf]
        %v223 = vld [vmem:[%s183 + $0x1c] sm:$0xf]
        %v224 = vld [vmem:[%s183 + $0x20] sm:$0xf]
        %v225 = vld [vmem:[%s183 + $0x24] sm:$0xf]
        %v226 = vld [vmem:[%s183 + $0x28] sm:$0xf]
        %v227 = vld [vmem:[%s183 + $0x2c] sm:$0xf]
        %v228 = vld [vmem:[%s183 + $0x30] sm:$0xf]
        %v229 = vld [vmem:[%s183 + $0x34] sm:$0xf]
        %v230 = vld [vmem:[%s183 + $0x38] sm:$0xf]
        %v231 = vld [vmem:[%s183 + $0x3c] sm:$0xf]
        %v232 = vld [vmem:[%s183 + $0x40] sm:$0xf]
        %v233 = vld [vmem:[%s183 + $0x44] sm:$0xf]
        %v234 = vld [vmem:[%s183 + $0x48] sm:$0xf]
        %v235 = vld [vmem:[%s183 + $0x4c] sm:$0xf]
        %v236 = vld [vmem:[%s183 + $0x50] sm:$0xf]
        %v237 = vld [vmem:[%s183 + $0x54] sm:$0xf]
        %v238 = vld [vmem:[%s183 + $0x58] sm:$0xf]
        %v239 = vld [vmem:[%s183 + $0x5c] sm:$0xf]
        %v240 = vld [vmem:[%s183 + $0x60] sm:$0xf]
        %v241 = vld [vmem:[%s183 + $0x64] sm:$0xf]
        %v242 = vld [vmem:[%s183 + $0x68] sm:$0xf]
        %v243 = vld [vmem:[%s183 + $0x6c] sm:$0xf]
        %v244 = vld [vmem:[%s183 + $0x70] sm:$0xf]
        %v245 = vld [vmem:[%s183 + $0x74] sm:$0xf]
        %v246 = vld [vmem:[%s183 + $0x78] sm:$0xf]
        %v247 = vld [vmem:[%s183 + $0x7c] sm:$0xf]
        %v280 = vunpack.c.l.b16 %v216
        %v281 = vunpack.c.l.b16 %v217
        %v282 = vunpack.c.l.b16 %v218
        %v283 = vunpack.c.l.b16 %v219
        %v284 = vunpack.c.l.b16 %v220
        %v285 = vunpack.c.l.b16 %v221
        %v286 = vunpack.c.l.b16 %v222
        %v287 = vunpack.c.l.b16 %v223
        %v288 = vunpack.c.l.b16 %v224
        %v289 = vunpack.c.l.b16 %v225
        %v290 = vunpack.c.l.b16 %v226
        %v291 = vunpack.c.l.b16 %v227
        %v292 = vunpack.c.l.b16 %v228
        %v293 = vunpack.c.l.b16 %v229
        %v294 = vunpack.c.l.b16 %v230
        %v295 = vunpack.c.l.b16 %v231
        %v296 = vunpack.c.l.b16 %v232
        %v297 = vunpack.c.l.b16 %v233
        %v298 = vunpack.c.l.b16 %v234
        %v299 = vunpack.c.l.b16 %v235
        %v300 = vunpack.c.l.b16 %v236
        %v301 = vunpack.c.l.b16 %v237
        %v302 = vunpack.c.l.b16 %v238
        %v303 = vunpack.c.l.b16 %v239
        %v304 = vunpack.c.l.b16 %v240
        %v305 = vunpack.c.l.b16 %v241
        %v306 = vunpack.c.l.b16 %v242
        %v307 = vunpack.c.l.b16 %v243
        %v308 = vunpack.c.l.b16 %v244
        %v309 = vunpack.c.l.b16 %v245
        %v310 = vunpack.c.l.b16 %v246
        %v311 = vunpack.c.l.b16 %v247
        %v312 = vpack.c.b16 %v281, %v280
        %v313 = vpack.c.b16 %v283, %v282
        %v314 = vpack.c.b16 %v285, %v284
        %v315 = vpack.c.b16 %v287, %v286
        %v316 = vpack.c.b16 %v289, %v288
        %v317 = vpack.c.b16 %v291, %v290
        %v318 = vpack.c.b16 %v293, %v292
        %v319 = vpack.c.b16 %v295, %v294
        %v320 = vpack.c.b16 %v297, %v296
        %v321 = vpack.c.b16 %v299, %v298
        %v322 = vpack.c.b16 %v301, %v300
        %v323 = vpack.c.b16 %v303, %v302
        %v324 = vpack.c.b16 %v305, %v304
        %v325 = vpack.c.b16 %v307, %v306
        %v326 = vpack.c.b16 %v309, %v308
        %v327 = vpack.c.b16 %v311, %v310
        %v329 = vshrl.u32 %v312, 16
        %v331 = vrot.slane %v329, 7
        %v332 = vshll.u32 %v312, 16
        %v334 = vor.u32 %v331, %v332
        %v336 = vshrl.u32 %v313, 16
        %v338 = vrot.slane %v336, 7
        %v339 = vshll.u32 %v313, 16
        %v341 = vor.u32 %v338, %v339
        %v343 = vshrl.u32 %v314, 16
        %v345 = vrot.slane %v343, 7
        %v346 = vshll.u32 %v314, 16
        %v348 = vor.u32 %v345, %v346
        %v350 = vshrl.u32 %v315, 16
        %v352 = vrot.slane %v350, 7
        %v353 = vshll.u32 %v315, 16
        %v355 = vor.u32 %v352, %v353
        %v357 = vshrl.u32 %v316, 16
        %v359 = vrot.slane %v357, 7
        %v360 = vshll.u32 %v316, 16
        %v362 = vor.u32 %v359, %v360
        %v364 = vshrl.u32 %v317, 16
        %v366 = vrot.slane %v364, 7
        %v367 = vshll.u32 %v317, 16
        %v369 = vor.u32 %v366, %v367
        %v371 = vshrl.u32 %v318, 16
        %v373 = vrot.slane %v371, 7
        %v374 = vshll.u32 %v318, 16
        %v376 = vor.u32 %v373, %v374
        %v378 = vshrl.u32 %v319, 16
        %v380 = vrot.slane %v378, 7
        %v381 = vshll.u32 %v319, 16
        %v383 = vor.u32 %v380, %v381
        %v385 = vshrl.u32 %v320, 16
        %v387 = vrot.slane %v385, 7
        %v388 = vshll.u32 %v320, 16
        %v390 = vor.u32 %v387, %v388
        %v392 = vshrl.u32 %v321, 16
        %v394 = vrot.slane %v392, 7
        %v395 = vshll.u32 %v321, 16
        %v397 = vor.u32 %v394, %v395
        %v399 = vshrl.u32 %v322, 16
        %v401 = vrot.slane %v399, 7
        %v402 = vshll.u32 %v322, 16
        %v404 = vor.u32 %v401, %v402
        %v406 = vshrl.u32 %v323, 16
        %v408 = vrot.slane %v406, 7
        %v409 = vshll.u32 %v323, 16
        %v411 = vor.u32 %v408, %v409
        %v413 = vshrl.u32 %v324, 16
        %v415 = vrot.slane %v413, 7
        %v416 = vshll.u32 %v324, 16
        %v418 = vor.u32 %v415, %v416
        %v420 = vshrl.u32 %v325, 16
        %v422 = vrot.slane %v420, 7
        %v423 = vshll.u32 %v325, 16
        %v425 = vor.u32 %v422, %v423
        %v427 = vshrl.u32 %v326, 16
        %v429 = vrot.slane %v427, 7
        %v430 = vshll.u32 %v326, 16
        %v432 = vor.u32 %v429, %v430
        %v434 = vshrl.u32 %v327, 16
        %v436 = vrot.slane %v434, 7
        %v437 = vshll.u32 %v327, 16
        %v439 = vor.u32 %v436, %v437
        %vm456 = vcmask 1040384
        %vm457 = vsmask.f32 256
        %vm458 = vmand %vm456, %vm457
        %v459 = vsel %vm458, 0, %v334
        %v460 = vsel %vm458, 0, %v341
        %v461 = vsel %vm458, 0, %v348
        %v462 = vsel %vm458, 0, %v355
        %v463 = vsel %vm458, 0, %v362
        %v464 = vsel %vm458, 0, %v369
        %v465 = vsel %vm458, 0, %v376
        %v466 = vsel %vm458, 0, %v383
        %v467 = vsel %vm458, 0, %v390
        %v468 = vsel %vm458, 0, %v397
        %v469 = vsel %vm458, 0, %v404
        %v470 = vsel %vm458, 0, %v411
        %v471 = vsel %vm458, 0, %v418
        %v472 = vsel %vm458, 0, %v425
        %v473 = vsel %vm458, 0, %v432
        %v474 = vsel %vm458, 0, %v439
        %v475 = vrot.slane %v332, 1
        %v476 = vor.u32 %v329, %v475
        %v477 = vrot.slane %v339, 1
        %v478 = vor.u32 %v336, %v477
        %v479 = vrot.slane %v346, 1
        %v480 = vor.u32 %v343, %v479
        %v481 = vrot.slane %v353, 1
        %v482 = vor.u32 %v350, %v481
        %v483 = vrot.slane %v360, 1
        %v484 = vor.u32 %v357, %v483
        %v485 = vrot.slane %v367, 1
        %v486 = vor.u32 %v364, %v485
        %v487 = vrot.slane %v374, 1
        %v488 = vor.u32 %v371, %v487
        %v489 = vrot.slane %v381, 1
        %v490 = vor.u32 %v378, %v489
        %v491 = vrot.slane %v388, 1
        %v492 = vor.u32 %v385, %v491
        %v493 = vrot.slane %v395, 1
        %v494 = vor.u32 %v392, %v493
        %v495 = vrot.slane %v402, 1
        %v496 = vor.u32 %v399, %v495
        %v497 = vrot.slane %v409, 1
        %v498 = vor.u32 %v406, %v497
        %v499 = vrot.slane %v416, 1
        %v500 = vor.u32 %v413, %v499
        %v501 = vrot.slane %v423, 1
        %v502 = vor.u32 %v420, %v501
        %v503 = vrot.slane %v430, 1
        %v504 = vor.u32 %v427, %v503
        %v505 = vrot.slane %v437, 1
        %v506 = vor.u32 %v434, %v505
        %vm523 = vcmask 1047552
        %vm524 = vsmask.f32 7424
        %vm525 = vmand %vm523, %vm524
        %v526 = vsel %vm525, %v476, 0
        %v527 = vsel %vm525, %v478, 0
        %v528 = vsel %vm525, %v480, 0
        %v529 = vsel %vm525, %v482, 0
        %v530 = vsel %vm525, %v484, 0
        %v531 = vsel %vm525, %v486, 0
        %v532 = vsel %vm525, %v488, 0
        %v533 = vsel %vm525, %v490, 0
        %v534 = vsel %vm525, %v492, 0
        %v535 = vsel %vm525, %v494, 0
        %v536 = vsel %vm525, %v496, 0
        %v537 = vsel %vm525, %v498, 0
        %v538 = vsel %vm525, %v500, 0
        %v539 = vsel %vm525, %v502, 0
        %v540 = vsel %vm525, %v504, 0
        %v541 = vsel %vm525, %v506, 0
        %v558 = vld [vmem:[#allocation5] sm:$0xff]
        %v559 = vld [vmem:[#allocation5 + $0x8] sm:$0xf]
        %v560 = vld [vmem:[#allocation5 + $0xc] sm:$0xff]
        %v561 = vld [vmem:[#allocation5 + $0x14] sm:$0xf]
        %v562 = vld [vmem:[#allocation5 + $0x18] sm:$0xff]
        %v563 = vld [vmem:[#allocation5 + $0x20] sm:$0xf]
        %v564 = vld [vmem:[#allocation5 + $0x24] sm:$0xff]
        %v565 = vld [vmem:[#allocation5 + $0x2c] sm:$0xf]
        %v566 = vld [vmem:[#allocation5 + $0x30] sm:$0xff]
        %v567 = vld [vmem:[#allocation5 + $0x38] sm:$0xf]
        %v568 = vld [vmem:[#allocation5 + $0x3c] sm:$0xff]
        %v569 = vld [vmem:[#allocation5 + $0x44] sm:$0xf]
        %v570 = vld [vmem:[#allocation5 + $0x48] sm:$0xff]
        %v571 = vld [vmem:[#allocation5 + $0x50] sm:$0xf]
        %v572 = vld [vmem:[#allocation5 + $0x54] sm:$0xff]
        %v573 = vld [vmem:[#allocation5 + $0x5c] sm:$0xf]
        %v574 = vld [vmem:[#allocation5 + $0x60] sm:$0xff]
        %v575 = vld [vmem:[#allocation5 + $0x68] sm:$0xf]
        %v576 = vld [vmem:[#allocation5 + $0x6c] sm:$0xff]
        %v577 = vld [vmem:[#allocation5 + $0x74] sm:$0xf]
        %v578 = vld [vmem:[#allocation5 + $0x78] sm:$0xff]
        %v579 = vld [vmem:[#allocation5 + $0x80] sm:$0xf]
        %v580 = vld [vmem:[#allocation5 + $0x84] sm:$0xff]
        %v581 = vld [vmem:[#allocation5 + $0x8c] sm:$0xf]
        %v582 = vld [vmem:[#allocation5 + $0x90] sm:$0xff]
        %v583 = vld [vmem:[#allocation5 + $0x98] sm:$0xf]
        %v584 = vld [vmem:[#allocation5 + $0x9c] sm:$0xff]
        %v585 = vld [vmem:[#allocation5 + $0xa4] sm:$0xf]
        %v586 = vld [vmem:[#allocation5 + $0xa8] sm:$0xff]
        %v587 = vld [vmem:[#allocation5 + $0xb0] sm:$0xf]
        %v588 = vld [vmem:[#allocation5 + $0xb4] sm:$0xff]
        %v589 = vld [vmem:[#allocation5 + $0xbc] sm:$0xf]
        %v590 = vld [vmem:[#allocation5 + $0xc0] sm:$0xff]
        %v591 = vld [vmem:[#allocation5 + $0xc8] sm:$0xf]
        %v592 = vld [vmem:[#allocation5 + $0xcc] sm:$0xff]
        %v593 = vld [vmem:[#allocation5 + $0xd4] sm:$0xf]
        %v594 = vld [vmem:[#allocation5 + $0xd8] sm:$0xff]
        %v595 = vld [vmem:[#allocation5 + $0xe0] sm:$0xf]
        %v596 = vld [vmem:[#allocation5 + $0xe4] sm:$0xff]
        %v597 = vld [vmem:[#allocation5 + $0xec] sm:$0xf]
        %v598 = vld [vmem:[#allocation5 + $0xf0] sm:$0xff]
        %v599 = vld [vmem:[#allocation5 + $0xf8] sm:$0xf]
        %v600 = vld [vmem:[#allocation5 + $0xfc] sm:$0xff]
        %v601 = vld [vmem:[#allocation5 + $0x104] sm:$0xf]
        %v602 = vld [vmem:[#allocation5 + $0x108] sm:$0xff]
        %v603 = vld [vmem:[#allocation5 + $0x110] sm:$0xf]
        %v604 = vld [vmem:[#allocation5 + $0x114] sm:$0xff]
        %v605 = vld [vmem:[#allocation5 + $0x11c] sm:$0xf]
        %v606 = vld [vmem:[#allocation5 + $0x120] sm:$0xff]
        %v607 = vld [vmem:[#allocation5 + $0x128] sm:$0xf]
        %v608 = vld [vmem:[#allocation5 + $0x12c] sm:$0xff]
        %v609 = vld [vmem:[#allocation5 + $0x134] sm:$0xf]
        %v610 = vld [vmem:[#allocation5 + $0x138] sm:$0xff]
        %v611 = vld [vmem:[#allocation5 + $0x140] sm:$0xf]
        %v612 = vld [vmem:[#allocation5 + $0x144] sm:$0xff]
        %v613 = vld [vmem:[#allocation5 + $0x14c] sm:$0xf]
        %v614 = vld [vmem:[#allocation5 + $0x150] sm:$0xff]
        %v615 = vld [vmem:[#allocation5 + $0x158] sm:$0xf]
        %v616 = vld [vmem:[#allocation5 + $0x15c] sm:$0xff]
        %v617 = vld [vmem:[#allocation5 + $0x164] sm:$0xf]
        %v618 = vld [vmem:[#allocation5 + $0x168] sm:$0xff]
        %v619 = vld [vmem:[#allocation5 + $0x170] sm:$0xf]
        %v620 = vld [vmem:[#allocation5 + $0x174] sm:$0xff]
        %v621 = vld [vmem:[#allocation5 + $0x17c] sm:$0xf]
        %v622 = vld [vmem:[#allocation5 + $0x180] sm:$0xff]
        %v623 = vld [vmem:[#allocation5 + $0x188] sm:$0xf]
        %v624 = vld [vmem:[#allocation5 + $0x18c] sm:$0xff]
        %v625 = vld [vmem:[#allocation5 + $0x194] sm:$0xf]
        %v626 = vld [vmem:[#allocation5 + $0x198] sm:$0xff]
        %v627 = vld [vmem:[#allocation5 + $0x1a0] sm:$0xf]
        %v628 = vld [vmem:[#allocation5 + $0x1a4] sm:$0xff]
        %v629 = vld [vmem:[#allocation5 + $0x1ac] sm:$0xf]
        %v630 = vld [vmem:[#allocation5 + $0x1b0] sm:$0xff]
        %v631 = vld [vmem:[#allocation5 + $0x1b8] sm:$0xf]
        %v632 = vld [vmem:[#allocation5 + $0x1bc] sm:$0xff]
        %v633 = vld [vmem:[#allocation5 + $0x1c4] sm:$0xf]
        %v634 = vld [vmem:[#allocation5 + $0x1c8] sm:$0xff]
        %v635 = vld [vmem:[#allocation5 + $0x1d0] sm:$0xf]
        %v636 = vld [vmem:[#allocation5 + $0x1d4] sm:$0xff]
        %v637 = vld [vmem:[#allocation5 + $0x1dc] sm:$0xf]
        %v638 = vld [vmem:[#allocation5 + $0x1e0] sm:$0xff]
        %v639 = vld [vmem:[#allocation5 + $0x1e8] sm:$0xf]
        %v640 = vld [vmem:[#allocation5 + $0x1ec] sm:$0xff]
        %v641 = vld [vmem:[#allocation5 + $0x1f4] sm:$0xf]
        %v642 = vld [vmem:[#allocation5 + $0x1f8] sm:$0xff]
        %v643 = vld [vmem:[#allocation5 + $0x200] sm:$0xf]
        %v644 = vld [vmem:[#allocation5 + $0x204] sm:$0xff]
        %v645 = vld [vmem:[#allocation5 + $0x20c] sm:$0xf]
        %v646 = vld [vmem:[#allocation5 + $0x210] sm:$0xff]
        %v647 = vld [vmem:[#allocation5 + $0x218] sm:$0xf]
        %v648 = vld [vmem:[#allocation5 + $0x21c] sm:$0xff]
        %v649 = vld [vmem:[#allocation5 + $0x224] sm:$0xf]
        %v650 = vld [vmem:[#allocation5 + $0x228] sm:$0xff]
        %v651 = vld [vmem:[#allocation5 + $0x230] sm:$0xf]
        %v652 = vld [vmem:[#allocation5 + $0x234] sm:$0xff]
        %v653 = vld [vmem:[#allocation5 + $0x23c] sm:$0xf]
        %v750 = vunpack.c.l.b16 %v558
        %v751 = vunpack.c.h.b16 %v558
        %v752 = vunpack.c.l.b16 %v559
        %v753 = vunpack.c.l.b16 %v560
        %v754 = vunpack.c.h.b16 %v560
        %v755 = vunpack.c.l.b16 %v561
        %v756 = vunpack.c.l.b16 %v562
        %v757 = vunpack.c.h.b16 %v562
        %v758 = vunpack.c.l.b16 %v563
        %v759 = vunpack.c.l.b16 %v564
        %v760 = vunpack.c.h.b16 %v564
        %v761 = vunpack.c.l.b16 %v565
        %v762 = vunpack.c.l.b16 %v566
        %v763 = vunpack.c.h.b16 %v566
        %v764 = vunpack.c.l.b16 %v567
        %v765 = vunpack.c.l.b16 %v568
        %v766 = vunpack.c.h.b16 %v568
        %v767 = vunpack.c.l.b16 %v569
        %v768 = vunpack.c.l.b16 %v570
        %v769 = vunpack.c.h.b16 %v570
        %v770 = vunpack.c.l.b16 %v571
        %v771 = vunpack.c.l.b16 %v572
        %v772 = vunpack.c.h.b16 %v572
        %v773 = vunpack.c.l.b16 %v573
        %v774 = vunpack.c.l.b16 %v574
        %v775 = vunpack.c.h.b16 %v574
        %v776 = vunpack.c.l.b16 %v575
        %v777 = vunpack.c.l.b16 %v576
        %v778 = vunpack.c.h.b16 %v576
        %v779 = vunpack.c.l.b16 %v577
        %v780 = vunpack.c.l.b16 %v578
        %v781 = vunpack.c.h.b16 %v578
        %v782 = vunpack.c.l.b16 %v579
        %v783 = vunpack.c.l.b16 %v580
        %v784 = vunpack.c.h.b16 %v580
        %v785 = vunpack.c.l.b16 %v581
        %v786 = vunpack.c.l.b16 %v582
        %v787 = vunpack.c.h.b16 %v582
        %v788 = vunpack.c.l.b16 %v583
        %v789 = vunpack.c.l.b16 %v584
        %v790 = vunpack.c.h.b16 %v584
        %v791 = vunpack.c.l.b16 %v585
        %v792 = vunpack.c.l.b16 %v586
        %v793 = vunpack.c.h.b16 %v586
        %v794 = vunpack.c.l.b16 %v587
        %v795 = vunpack.c.l.b16 %v588
        %v796 = vunpack.c.h.b16 %v588
        %v797 = vunpack.c.l.b16 %v589
        %v798 = vunpack.c.l.b16 %v590
        %v799 = vunpack.c.h.b16 %v590
        %v800 = vunpack.c.l.b16 %v591
        %v801 = vunpack.c.l.b16 %v592
        %v802 = vunpack.c.h.b16 %v592
        %v803 = vunpack.c.l.b16 %v593
        %v804 = vunpack.c.l.b16 %v594
        %v805 = vunpack.c.h.b16 %v594
        %v806 = vunpack.c.l.b16 %v595
        %v807 = vunpack.c.l.b16 %v596
        %v808 = vunpack.c.h.b16 %v596
        %v809 = vunpack.c.l.b16 %v597
        %v810 = vunpack.c.l.b16 %v598
        %v811 = vunpack.c.h.b16 %v598
        %v812 = vunpack.c.l.b16 %v599
        %v813 = vunpack.c.l.b16 %v600
        %v814 = vunpack.c.h.b16 %v600
        %v815 = vunpack.c.l.b16 %v601
        %v816 = vunpack.c.l.b16 %v602
        %v817 = vunpack.c.h.b16 %v602
        %v818 = vunpack.c.l.b16 %v603
        %v819 = vunpack.c.l.b16 %v604
        %v820 = vunpack.c.h.b16 %v604
        %v821 = vunpack.c.l.b16 %v605
        %v822 = vunpack.c.l.b16 %v606
        %v823 = vunpack.c.h.b16 %v606
        %v824 = vunpack.c.l.b16 %v607
        %v825 = vunpack.c.l.b16 %v608
        %v826 = vunpack.c.h.b16 %v608
        %v827 = vunpack.c.l.b16 %v609
        %v828 = vunpack.c.l.b16 %v610
        %v829 = vunpack.c.h.b16 %v610
        %v830 = vunpack.c.l.b16 %v611
        %v831 = vunpack.c.l.b16 %v612
        %v832 = vunpack.c.h.b16 %v612
        %v833 = vunpack.c.l.b16 %v613
        %v834 = vunpack.c.l.b16 %v614
        %v835 = vunpack.c.h.b16 %v614
        %v836 = vunpack.c.l.b16 %v615
        %v837 = vunpack.c.l.b16 %v616
        %v838 = vunpack.c.h.b16 %v616
        %v839 = vunpack.c.l.b16 %v617
        %v840 = vunpack.c.l.b16 %v618
        %v841 = vunpack.c.h.b16 %v618
        %v842 = vunpack.c.l.b16 %v619
        %v843 = vunpack.c.l.b16 %v620
        %v844 = vunpack.c.h.b16 %v620
        %v845 = vunpack.c.l.b16 %v621
        %v846 = vunpack.c.l.b16 %v622
        %v847 = vunpack.c.h.b16 %v622
        %v848 = vunpack.c.l.b16 %v623
        %v849 = vunpack.c.l.b16 %v624
        %v850 = vunpack.c.h.b16 %v624
        %v851 = vunpack.c.l.b16 %v625
        %v852 = vunpack.c.l.b16 %v626
        %v853 = vunpack.c.h.b16 %v626
        %v854 = vunpack.c.l.b16 %v627
        %v855 = vunpack.c.l.b16 %v628
        %v856 = vunpack.c.h.b16 %v628
        %v857 = vunpack.c.l.b16 %v629
        %v858 = vunpack.c.l.b16 %v630
        %v859 = vunpack.c.h.b16 %v630
        %v860 = vunpack.c.l.b16 %v631
        %v861 = vunpack.c.l.b16 %v632
        %v862 = vunpack.c.h.b16 %v632
        %v863 = vunpack.c.l.b16 %v633
        %v864 = vunpack.c.l.b16 %v634
        %v865 = vunpack.c.h.b16 %v634
        %v866 = vunpack.c.l.b16 %v635
        %v867 = vunpack.c.l.b16 %v636
        %v868 = vunpack.c.h.b16 %v636
        %v869 = vunpack.c.l.b16 %v637
        %v870 = vunpack.c.l.b16 %v638
        %v871 = vunpack.c.h.b16 %v638
        %v872 = vunpack.c.l.b16 %v639
        %v873 = vunpack.c.l.b16 %v640
        %v874 = vunpack.c.h.b16 %v640
        %v875 = vunpack.c.l.b16 %v641
        %v876 = vunpack.c.l.b16 %v642
        %v877 = vunpack.c.h.b16 %v642
        %v878 = vunpack.c.l.b16 %v643
        %v879 = vunpack.c.l.b16 %v644
        %v880 = vunpack.c.h.b16 %v644
        %v881 = vunpack.c.l.b16 %v645
        %v882 = vunpack.c.l.b16 %v646
        %v883 = vunpack.c.h.b16 %v646
        %v884 = vunpack.c.l.b16 %v647
        %v885 = vunpack.c.l.b16 %v648
        %v886 = vunpack.c.h.b16 %v648
        %v887 = vunpack.c.l.b16 %v649
        %v888 = vunpack.c.l.b16 %v650
        %v889 = vunpack.c.h.b16 %v650
        %v890 = vunpack.c.l.b16 %v651
        %v891 = vunpack.c.l.b16 %v652
        %v892 = vunpack.c.h.b16 %v652
        %v893 = vunpack.c.l.b16 %v653
        %v894 = vpack.c.b16 %v753, %v750
        %v895 = vpack.c.b16 %v754, %v751
        %v896 = vpack.c.b16 %v755, %v752
        %v897 = vpack.c.b16 %v759, %v756
        %v898 = vpack.c.b16 %v760, %v757
        %v899 = vpack.c.b16 %v761, %v758
        %v900 = vpack.c.b16 %v765, %v762
        %v901 = vpack.c.b16 %v766, %v763
        %v902 = vpack.c.b16 %v767, %v764
        %v903 = vpack.c.b16 %v771, %v768
        %v904 = vpack.c.b16 %v772, %v769
        %v905 = vpack.c.b16 %v773, %v770
        %v906 = vpack.c.b16 %v777, %v774
        %v907 = vpack.c.b16 %v778, %v775
        %v908 = vpack.c.b16 %v779, %v776
        %v909 = vpack.c.b16 %v783, %v780
        %v910 = vpack.c.b16 %v784, %v781
        %v911 = vpack.c.b16 %v785, %v782
        %v912 = vpack.c.b16 %v789, %v786
        %v913 = vpack.c.b16 %v790, %v787
        %v914 = vpack.c.b16 %v791, %v788
        %v915 = vpack.c.b16 %v795, %v792
        %v916 = vpack.c.b16 %v796, %v793
        %v917 = vpack.c.b16 %v797, %v794
        %v918 = vpack.c.b16 %v801, %v798
        %v919 = vpack.c.b16 %v802, %v799
        %v920 = vpack.c.b16 %v803, %v800
        %v921 = vpack.c.b16 %v807, %v804
        %v922 = vpack.c.b16 %v808, %v805
        %v923 = vpack.c.b16 %v809, %v806
        %v924 = vpack.c.b16 %v813, %v810
        %v925 = vpack.c.b16 %v814, %v811
        %v926 = vpack.c.b16 %v815, %v812
        %v927 = vpack.c.b16 %v819, %v816
        %v928 = vpack.c.b16 %v820, %v817
        %v929 = vpack.c.b16 %v821, %v818
        %v930 = vpack.c.b16 %v825, %v822
        %v931 = vpack.c.b16 %v826, %v823
        %v932 = vpack.c.b16 %v827, %v824
        %v933 = vpack.c.b16 %v831, %v828
        %v934 = vpack.c.b16 %v832, %v829
        %v935 = vpack.c.b16 %v833, %v830
        %v936 = vpack.c.b16 %v837, %v834
        %v937 = vpack.c.b16 %v838, %v835
        %v938 = vpack.c.b16 %v839, %v836
        %v939 = vpack.c.b16 %v843, %v840
        %v940 = vpack.c.b16 %v844, %v841
        %v941 = vpack.c.b16 %v845, %v842
        %v942 = vpack.c.b16 %v849, %v846
        %v943 = vpack.c.b16 %v850, %v847
        %v944 = vpack.c.b16 %v851, %v848
        %v945 = vpack.c.b16 %v855, %v852
        %v946 = vpack.c.b16 %v856, %v853
        %v947 = vpack.c.b16 %v857, %v854
        %v948 = vpack.c.b16 %v861, %v858
        %v949 = vpack.c.b16 %v862, %v859
        %v950 = vpack.c.b16 %v863, %v860
        %v951 = vpack.c.b16 %v867, %v864
        %v952 = vpack.c.b16 %v868, %v865
        %v953 = vpack.c.b16 %v869, %v866
        %v954 = vpack.c.b16 %v873, %v870
        %v955 = vpack.c.b16 %v874, %v871
        %v956 = vpack.c.b16 %v875, %v872
        %v957 = vpack.c.b16 %v879, %v876
        %v958 = vpack.c.b16 %v880, %v877
        %v959 = vpack.c.b16 %v881, %v878
        %v960 = vpack.c.b16 %v885, %v882
        %v961 = vpack.c.b16 %v886, %v883
        %v962 = vpack.c.b16 %v887, %v884
        %v963 = vpack.c.b16 %v891, %v888
        %v964 = vpack.c.b16 %v892, %v889
        %v965 = vpack.c.b16 %v893, %v890
        %1038 = vmatprep.subr.bf16.mxu0 %v895
        %1039 = vmatpush1.bf16.msra.mxu0 %v894
        %1040 = vmatprep.subr.bf16.mxu0 %v898
        %1041 = vmatpush1.bf16.msra.mxu0 %v897
        %1042 = vmatprep.subr.bf16.mxu0 %v901
        %1043 = vmatpush1.bf16.msra.mxu0 %v900
        %1044 = vmatprep.subr.bf16.mxu0 %v904
        %1045 = vmatpush1.bf16.msra.mxu0 %v903
        %1046 = vmatprep.subr.bf16.mxu0 %v907
        %1047 = vmatpush1.bf16.msra.mxu0 %v906
        %1048 = vmatprep.subr.bf16.mxu0 %v910
        %1049 = vmatpush1.bf16.msra.mxu0 %v909
        %1050 = vmatprep.subr.bf16.mxu0 %v913
        %1051 = vmatpush1.bf16.msra.mxu0 %v912
        %1052 = vmatprep.subr.bf16.mxu0 %v916
        %1053 = vmatpush1.bf16.msra.mxu0 %v915
        %1054 = vmatprep.subr.bf16.mxu0 %v919
        %1055 = vmatpush1.bf16.msra.mxu0 %v918
        %1056 = vmatprep.subr.bf16.mxu0 %v922
        %1057 = vmatpush1.bf16.msra.mxu0 %v921
        %1058 = vmatprep.subr.bf16.mxu0 %v925
        %1059 = vmatpush1.bf16.msra.mxu0 %v924
        %1060 = vmatprep.subr.bf16.mxu0 %v928
        %1061 = vmatpush1.bf16.msra.mxu0 %v927
        %1062 = vmatprep.subr.bf16.mxu0 %v931
        %1063 = vmatpush1.bf16.msra.mxu0 %v930
        %1064 = vmatprep.subr.bf16.mxu0 %v934
        %1065 = vmatpush1.bf16.msra.mxu0 %v933
        %1066 = vmatprep.subr.bf16.mxu0 %v937
        %1067 = vmatpush1.bf16.msra.mxu0 %v936
        %1068 = vmatprep.subr.bf16.mxu0 %v940
        %1069 = vmatpush1.bf16.msra.mxu0 %v939
        %1070 = vmatprep.mubr.bf16.mxu0 %v312
        %1071 = vmatmul.mubr.bf16.gmra.mrb[0].mxu0 %v459
        %v1072 = vpop.f32.mrb[0].mxu0
        %v1073 = vadd.f32 0.0, %v1072
        %v1074 = vpop.f32.mrb[0].mxu0
        %v1075 = vadd.f32 0.0, %v1074
        %v1076 = vpop.f32.mrb[0].mxu0
        %v1077 = vadd.f32 0.0, %v1076
        %v1078 = vpop.f32.mrb[0].mxu0
        %v1079 = vadd.f32 0.0, %v1078
        %1080 = vmatprep.mubr.bf16.mxu0 %v313
        %1081 = vmatmul.mubr.bf16.gmra.mrb[0].mxu0 %v460
        %v1082 = vpop.f32.mrb[0].mxu0
        %v1083 = vadd.f32 0.0, %v1082
        %v1084 = vpop.f32.mrb[0].mxu0
        %v1085 = vadd.f32 0.0, %v1084
        %v1086 = vpop.f32.mrb[0].mxu0
        %v1087 = vadd.f32 0.0, %v1086
        %v1088 = vpop.f32.mrb[0].mxu0
        %v1089 = vadd.f32 0.0, %v1088
        %1090 = vmatprep.mubr.bf16.mxu0 %v314
        %1091 = vmatmul.mubr.bf16.gmra.mrb[0].mxu0 %v461
        %v1092 = vpop.f32.mrb[0].mxu0
        %v1093 = vadd.f32 0.0, %v1092
        %v1094 = vpop.f32.mrb[0].mxu0
        %v1095 = vadd.f32 0.0, %v1094
        %v1096 = vpop.f32.mrb[0].mxu0
        %v1097 = vadd.f32 0.0, %v1096
        %v1098 = vpop.f32.mrb[0].mxu0
        %v1099 = vadd.f32 0.0, %v1098
        %1100 = vmatprep.mubr.bf16.mxu0 %v315
        %1101 = vmatmul.mubr.bf16.gmra.mrb[0].mxu0 %v462
        %v1102 = vpop.f32.mrb[0].mxu0
        %v1103 = vadd.f32 0.0, %v1102
        %v1104 = vpop.f32.mrb[0].mxu0
        %v1105 = vadd.f32 0.0, %v1104
        %v1106 = vpop.f32.mrb[0].mxu0
        %v1107 = vadd.f32 0.0, %v1106
        %v1108 = vpop.f32.mrb[0].mxu0
        %v1109 = vadd.f32 0.0, %v1108
        %1110 = vmatprep.mubr.bf16.mxu0 %v316
        %1111 = vmatmul.mubr.bf16.gmra.mrb[0].mxu0 %v463
        %v1112 = vpop.f32.mrb[0].mxu0
        %v1113 = vadd.f32 0.0, %v1112
        %v1114 = vpop.f32.mrb[0].mxu0
        %v1115 = vadd.f32 0.0, %v1114
        %v1116 = vpop.f32.mrb[0].mxu0
        %v1117 = vadd.f32 0.0, %v1116
        %v1118 = vpop.f32.mrb[0].mxu0
        %v1119 = vadd.f32 0.0, %v1118
        %1120 = vmatprep.mubr.bf16.mxu0 %v317
        %1121 = vmatmul.mubr.bf16.gmra.mrb[0].mxu0 %v464
        %v1122 = vpop.f32.mrb[0].mxu0
        %v1123 = vadd.f32 0.0, %v1122
        %v1124 = vpop.f32.mrb[0].mxu0
        %v1125 = vadd.f32 0.0, %v1124
        %v1126 = vpop.f32.mrb[0].mxu0
        %v1127 = vadd.f32 0.0, %v1126
        %v1128 = vpop.f32.mrb[0].mxu0
        %v1129 = vadd.f32 0.0, %v1128
        %1130 = vmatprep.mubr.bf16.mxu0 %v318
        %1131 = vmatmul.mubr.bf16.gmra.mrb[0].mxu0 %v465
        %v1132 = vpop.f32.mrb[0].mxu0
        %v1133 = vadd.f32 0.0, %v1132
        %v1134 = vpop.f32.mrb[0].mxu0
        %v1135 = vadd.f32 0.0, %v1134
        %v1136 = vpop.f32.mrb[0].mxu0
        %v1137 = vadd.f32 0.0, %v1136
        %v1138 = vpop.f32.mrb[0].mxu0
        %v1139 = vadd.f32 0.0, %v1138
        %1140 = vmatprep.mubr.bf16.mxu0 %v319
        %1141 = vmatmul.mubr.bf16.gmra.mrb[0].mxu0 %v466
        %v1142 = vpop.f32.mrb[0].mxu0
        %v1143 = vadd.f32 0.0, %v1142
        %v1144 = vpop.f32.mrb[0].mxu0
        %v1145 = vadd.f32 0.0, %v1144
        %v1146 = vpop.f32.mrb[0].mxu0
        %v1147 = vadd.f32 0.0, %v1146
        %v1148 = vpop.f32.mrb[0].mxu0
        %v1149 = vadd.f32 0.0, %v1148
        %1150 = vmatprep.mubr.bf16.mxu0 %v320
        %1151 = vmatmul.mubr.bf16.gmra.mrb[0].mxu0 %v467
        %v1152 = vpop.f32.mrb[0].mxu0
        %v1153 = vadd.f32 0.0, %v1152
        %v1154 = vpop.f32.mrb[0].mxu0
        %v1155 = vadd.f32 0.0, %v1154
        %v1156 = vpop.f32.mrb[0].mxu0
        %v1157 = vadd.f32 0.0, %v1156
        %v1158 = vpop.f32.mrb[0].mxu0
        %v1159 = vadd.f32 0.0, %v1158
        %1160 = vmatprep.mubr.bf16.mxu0 %v321
        %1161 = vmatmul.mubr.bf16.gmra.mrb[0].mxu0 %v468
        %v1162 = vpop.f32.mrb[0].mxu0
        %v1163 = vadd.f32 0.0, %v1162
        %v1164 = vpop.f32.mrb[0].mxu0
        %v1165 = vadd.f32 0.0, %v1164
        %v1166 = vpop.f32.mrb[0].mxu0
        %v1167 = vadd.f32 0.0, %v1166
        %v1168 = vpop.f32.mrb[0].mxu0
        %v1169 = vadd.f32 0.0, %v1168
        %1170 = vmatprep.mubr.bf16.mxu0 %v322
        %1171 = vmatmul.mubr.bf16.gmra.mrb[0].mxu0 %v469
        %v1172 = vpop.f32.mrb[0].mxu0
        %v1173 = vadd.f32 0.0, %v1172
        %v1174 = vpop.f32.mrb[0].mxu0
        %v1175 = vadd.f32 0.0, %v1174
        %v1176 = vpop.f32.mrb[0].mxu0
        %v1177 = vadd.f32 0.0, %v1176
        %v1178 = vpop.f32.mrb[0].mxu0
        %v1179 = vadd.f32 0.0, %v1178
        %1180 = vmatprep.mubr.bf16.mxu0 %v323
        %1181 = vmatmul.mubr.bf16.gmra.mrb[0].mxu0 %v470
        %v1182 = vpop.f32.mrb[0].mxu0
        %v1183 = vadd.f32 0.0, %v1182
        %v1184 = vpop.f32.mrb[0].mxu0
        %v1185 = vadd.f32 0.0, %v1184
        %v1186 = vpop.f32.mrb[0].mxu0
        %v1187 = vadd.f32 0.0, %v1186
        %v1188 = vpop.f32.mrb[0].mxu0
        %v1189 = vadd.f32 0.0, %v1188
        %1190 = vmatprep.mubr.bf16.mxu0 %v324
        %1191 = vmatmul.mubr.bf16.gmra.mrb[0].mxu0 %v471
        %v1192 = vpop.f32.mrb[0].mxu0
        %v1193 = vadd.f32 0.0, %v1192
        %v1194 = vpop.f32.mrb[0].mxu0
        %v1195 = vadd.f32 0.0, %v1194
        %v1196 = vpop.f32.mrb[0].mxu0
        %v1197 = vadd.f32 0.0, %v1196
        %v1198 = vpop.f32.mrb[0].mxu0
        %v1199 = vadd.f32 0.0, %v1198
        %1200 = vmatprep.mubr.bf16.mxu0 %v325
        %1201 = vmatmul.mubr.bf16.gmra.mrb[0].mxu0 %v472
        %v1202 = vpop.f32.mrb[0].mxu0
        %v1203 = vadd.f32 0.0, %v1202
        %v1204 = vpop.f32.mrb[0].mxu0
        %v1205 = vadd.f32 0.0, %v1204
        %v1206 = vpop.f32.mrb[0].mxu0
        %v1207 = vadd.f32 0.0, %v1206
        %v1208 = vpop.f32.mrb[0].mxu0
        %v1209 = vadd.f32 0.0, %v1208
        %1210 = vmatprep.mubr.bf16.mxu0 %v326
        %1211 = vmatmul.mubr.bf16.gmra.mrb[0].mxu0 %v473
        %v1212 = vpop.f32.mrb[0].mxu0
        %v1213 = vadd.f32 0.0, %v1212
        %v1214 = vpop.f32.mrb[0].mxu0
        %v1215 = vadd.f32 0.0, %v1214
        %v1216 = vpop.f32.mrb[0].mxu0
        %v1217 = vadd.f32 0.0, %v1216
        %v1218 = vpop.f32.mrb[0].mxu0
        %v1219 = vadd.f32 0.0, %v1218
        %1220 = vmatprep.mubr.bf16.mxu0 %v327
        %1221 = vmatmul.mubr.bf16.gmra.mrb[0].mxu0 %v474
        %v1222 = vpop.f32.mrb[0].mxu0
        %v1223 = vpop.f32.mrb[0].mxu0
        %v1224 = vadd.f32 0.0, %v1223
        %v1225 = vpop.f32.mrb[0].mxu0
        %v1226 = vpop.f32.mrb[0].mxu0
        %v1227 = vadd.f32 0.0, %v1226
        %1228 = vdwg.mxu0
        %1229 = vmatprep.subr.bf16.mxu0 %v943
        %1230 = vmatpush1.bf16.msra.mxu0 %v942
        %1231 = vmatprep.subr.bf16.mxu0 %v946
        %1232 = vmatpush1.bf16.msra.mxu0 %v945
        %1233 = vmatprep.subr.bf16.mxu0 %v949
        %1234 = vmatpush1.bf16.msra.mxu0 %v948
        %1235 = vmatprep.subr.bf16.mxu0 %v952
        %1236 = vmatpush1.bf16.msra.mxu0 %v951
        %1237 = vmatprep.subr.bf16.mxu0 %v955
        %1238 = vmatpush1.bf16.msra.mxu0 %v954
        %1239 = vmatprep.subr.bf16.mxu0 %v958
        %1240 = vmatpush1.bf16.msra.mxu0 %v957
        %1241 = vmatprep.subr.bf16.mxu0 %v961
        %1242 = vmatpush1.bf16.msra.mxu0 %v960
        %1243 = vmatprep.subr.bf16.mxu0 %v964
        %1244 = vmatpush1.bf16.msra.mxu0 %v963
        %1245 = vmatprep.subr.bf16.mxu0 0
        %1246 = vmatpush1.bf16.msra.mxu0 0
        %1247 = vmatprep.subr.bf16.mxu0 0
        %1248 = vmatpush1.bf16.msra.mxu0 0
        %1249 = vmatprep.subr.bf16.mxu0 0
        %1250 = vmatpush1.bf16.msra.mxu0 0
        %1251 = vmatprep.subr.bf16.mxu0 0
        %1252 = vmatpush1.bf16.msra.mxu0 0
        %1253 = vmatprep.subr.bf16.mxu0 0
        %1254 = vmatpush1.bf16.msra.mxu0 0
        %1255 = vmatprep.subr.bf16.mxu0 0
        %1256 = vmatpush1.bf16.msra.mxu0 0
        %1257 = vmatprep.subr.bf16.mxu0 0
        %1258 = vmatpush1.bf16.msra.mxu0 0
        %1259 = vmatprep.subr.bf16.mxu0 0
        %1260 = vmatpush1.bf16.msra.mxu0 0
        %1261 = vmatprep.mubr.bf16.mxu0 0
        %1262 = vmatmul.mubr.bf16.gmra.mrb[0].mxu0 %v526
        %v1263 = vpop.f32.mrb[0].mxu0
        %v1264 = vadd.f32 %v1073, %v1263
        %v1265 = vpop.f32.mrb[0].mxu0
        %v1266 = vadd.f32 %v1075, %v1265
        %v1267 = vpop.f32.mrb[0].mxu0
        %v1268 = vadd.f32 %v1077, %v1267
        %v1269 = vpop.f32.mrb[0].mxu0
        %v1270 = vadd.f32 %v1079, %v1269
        %1271 = vmatprep.mubr.bf16.mxu0 0
        %1272 = vmatmul.mubr.bf16.gmra.mrb[0].mxu0 %v527
        %v1273 = vpop.f32.mrb[0].mxu0
        %v1274 = vadd.f32 %v1083, %v1273
        %v1275 = vpop.f32.mrb[0].mxu0
        %v1276 = vadd.f32 %v1085, %v1275
        %v1277 = vpop.f32.mrb[0].mxu0
        %v1278 = vadd.f32 %v1087, %v1277
        %v1279 = vpop.f32.mrb[0].mxu0
        %v1280 = vadd.f32 %v1089, %v1279
        %1281 = vmatprep.mubr.bf16.mxu0 0
        %1282 = vmatmul.mubr.bf16.gmra.mrb[0].mxu0 %v528
        %v1283 = vpop.f32.mrb[0].mxu0
        %v1284 = vadd.f32 %v1093, %v1283
        %v1285 = vpop.f32.mrb[0].mxu0
        %v1286 = vadd.f32 %v1095, %v1285
        %v1287 = vpop.f32.mrb[0].mxu0
        %v1288 = vadd.f32 %v1097, %v1287
        %v1289 = vpop.f32.mrb[0].mxu0
        %v1290 = vadd.f32 %v1099, %v1289
        %1291 = vmatprep.mubr.bf16.mxu0 0
        %1292 = vmatmul.mubr.bf16.gmra.mrb[0].mxu0 %v529
        %v1293 = vpop.f32.mrb[0].mxu0
        %v1294 = vadd.f32 %v1103, %v1293
        %v1295 = vpop.f32.mrb[0].mxu0
        %v1296 = vadd.f32 %v1105, %v1295
        %v1297 = vpop.f32.mrb[0].mxu0
        %v1298 = vadd.f32 %v1107, %v1297
        %v1299 = vpop.f32.mrb[0].mxu0
        %v1300 = vadd.f32 %v1109, %v1299
        %1301 = vmatprep.mubr.bf16.mxu0 0
        %1302 = vmatmul.mubr.bf16.gmra.mrb[0].mxu0 %v530
        %v1303 = vpop.f32.mrb[0].mxu0
        %v1304 = vadd.f32 %v1113, %v1303
        %v1305 = vpop.f32.mrb[0].mxu0
        %v1306 = vadd.f32 %v1115, %v1305
        %v1307 = vpop.f32.mrb[0].mxu0
        %v1308 = vadd.f32 %v1117, %v1307
        %v1309 = vpop.f32.mrb[0].mxu0
        %v1310 = vadd.f32 %v1119, %v1309
        %1311 = vmatprep.mubr.bf16.mxu0 0
        %1312 = vmatmul.mubr.bf16.gmra.mrb[0].mxu0 %v531
        %v1313 = vpop.f32.mrb[0].mxu0
        %v1314 = vadd.f32 %v1123, %v1313
        %v1315 = vpop.f32.mrb[0].mxu0
        %v1316 = vadd.f32 %v1125, %v1315
        %v1317 = vpop.f32.mrb[0].mxu0
        %v1318 = vadd.f32 %v1127, %v1317
        %v1319 = vpop.f32.mrb[0].mxu0
        %v1320 = vadd.f32 %v1129, %v1319
        %1321 = vmatprep.mubr.bf16.mxu0 0
        %1322 = vmatmul.mubr.bf16.gmra.mrb[0].mxu0 %v532
        %v1323 = vpop.f32.mrb[0].mxu0
        %v1324 = vadd.f32 %v1133, %v1323
        %v1325 = vpop.f32.mrb[0].mxu0
        %v1326 = vadd.f32 %v1135, %v1325
        %v1327 = vpop.f32.mrb[0].mxu0
        %v1328 = vadd.f32 %v1137, %v1327
        %v1329 = vpop.f32.mrb[0].mxu0
        %v1330 = vadd.f32 %v1139, %v1329
        %1331 = vmatprep.mubr.bf16.mxu0 0
        %1332 = vmatmul.mubr.bf16.gmra.mrb[0].mxu0 %v533
        %v1333 = vpop.f32.mrb[0].mxu0
        %v1334 = vadd.f32 %v1143, %v1333
        %v1335 = vpop.f32.mrb[0].mxu0
        %v1336 = vadd.f32 %v1145, %v1335
        %v1337 = vpop.f32.mrb[0].mxu0
        %v1338 = vadd.f32 %v1147, %v1337
        %v1339 = vpop.f32.mrb[0].mxu0
        %v1340 = vadd.f32 %v1149, %v1339
        %1341 = vmatprep.mubr.bf16.mxu0 0
        %1342 = vmatmul.mubr.bf16.gmra.mrb[0].mxu0 %v534
        %v1343 = vpop.f32.mrb[0].mxu0
        %v1344 = vadd.f32 %v1153, %v1343
        %v1345 = vpop.f32.mrb[0].mxu0
        %v1346 = vadd.f32 %v1155, %v1345
        %v1347 = vpop.f32.mrb[0].mxu0
        %v1348 = vadd.f32 %v1157, %v1347
        %v1349 = vpop.f32.mrb[0].mxu0
        %v1350 = vadd.f32 %v1159, %v1349
        %1351 = vmatprep.mubr.bf16.mxu0 0
        %1352 = vmatmul.mubr.bf16.gmra.mrb[0].mxu0 %v535
        %v1353 = vpop.f32.mrb[0].mxu0
        %v1354 = vadd.f32 %v1163, %v1353
        %v1355 = vpop.f32.mrb[0].mxu0
        %v1356 = vadd.f32 %v1165, %v1355
        %v1357 = vpop.f32.mrb[0].mxu0
        %v1358 = vadd.f32 %v1167, %v1357
        %v1359 = vpop.f32.mrb[0].mxu0
        %v1360 = vadd.f32 %v1169, %v1359
        %1361 = vmatprep.mubr.bf16.mxu0 0
        %1362 = vmatmul.mubr.bf16.gmra.mrb[0].mxu0 %v536
        %v1363 = vpop.f32.mrb[0].mxu0
        %v1364 = vadd.f32 %v1173, %v1363
        %v1365 = vpop.f32.mrb[0].mxu0
        %v1366 = vadd.f32 %v1175, %v1365
        %v1367 = vpop.f32.mrb[0].mxu0
        %v1368 = vadd.f32 %v1177, %v1367
        %v1369 = vpop.f32.mrb[0].mxu0
        %v1370 = vadd.f32 %v1179, %v1369
        %1371 = vmatprep.mubr.bf16.mxu0 0
        %1372 = vmatmul.mubr.bf16.gmra.mrb[0].mxu0 %v537
        %v1373 = vpop.f32.mrb[0].mxu0
        %v1374 = vadd.f32 %v1183, %v1373
        %v1375 = vpop.f32.mrb[0].mxu0
        %v1376 = vadd.f32 %v1185, %v1375
        %v1377 = vpop.f32.mrb[0].mxu0
        %v1378 = vadd.f32 %v1187, %v1377
        %v1379 = vpop.f32.mrb[0].mxu0
        %v1380 = vadd.f32 %v1189, %v1379
        %1381 = vmatprep.mubr.bf16.mxu0 0
        %1382 = vmatmul.mubr.bf16.gmra.mrb[0].mxu0 %v538
        %v1383 = vpop.f32.mrb[0].mxu0
        %v1384 = vadd.f32 %v1193, %v1383
        %v1385 = vpop.f32.mrb[0].mxu0
        %v1386 = vadd.f32 %v1195, %v1385
        %v1387 = vpop.f32.mrb[0].mxu0
        %v1388 = vadd.f32 %v1197, %v1387
        %v1389 = vpop.f32.mrb[0].mxu0
        %v1390 = vadd.f32 %v1199, %v1389
        %1391 = vmatprep.mubr.bf16.mxu0 0
        %1392 = vmatmul.mubr.bf16.gmra.mrb[0].mxu0 %v539
        %v1393 = vpop.f32.mrb[0].mxu0
        %v1394 = vadd.f32 %v1203, %v1393
        %v1395 = vpop.f32.mrb[0].mxu0
        %v1396 = vadd.f32 %v1205, %v1395
        %v1397 = vpop.f32.mrb[0].mxu0
        %v1398 = vadd.f32 %v1207, %v1397
        %v1399 = vpop.f32.mrb[0].mxu0
        %v1400 = vadd.f32 %v1209, %v1399
        %1401 = vmatprep.mubr.bf16.mxu0 0
        %1402 = vmatmul.mubr.bf16.gmra.mrb[0].mxu0 %v540
        %v1403 = vpop.f32.mrb[0].mxu0
        %v1404 = vadd.f32 %v1213, %v1403
        %v1405 = vpop.f32.mrb[0].mxu0
        %v1406 = vadd.f32 %v1215, %v1405
        %v1407 = vpop.f32.mrb[0].mxu0
        %v1408 = vadd.f32 %v1217, %v1407
        %v1409 = vpop.f32.mrb[0].mxu0
        %v1410 = vadd.f32 %v1219, %v1409
        %1411 = vmatprep.mubr.bf16.mxu0 0
        %1412 = vmatmul.mubr.bf16.gmra.mrb[0].mxu0 %v541
        %v1413 = vpop.f32.mrb[0].mxu0
        %v1414 = vpop.f32.mrb[0].mxu0
        %v1415 = vadd.f32 %v1224, %v1414
        %v1416 = vpop.f32.mrb[0].mxu0
        %v1417 = vpop.f32.mrb[0].mxu0
        %v1418 = vadd.f32 %v1227, %v1417
        %1419 = vdwg.mxu0
        %1420 = vmatprep.subr.bf16.mxu0 0
        %1421 = vmatpush1.bf16.msra.mxu0 %v896
        %1422 = vmatprep.subr.bf16.mxu0 0
        %1423 = vmatpush1.bf16.msra.mxu0 %v899
        %1424 = vmatprep.subr.bf16.mxu0 0
        %1425 = vmatpush1.bf16.msra.mxu0 %v902
        %1426 = vmatprep.subr.bf16.mxu0 0
        %1427 = vmatpush1.bf16.msra.mxu0 %v905
        %1428 = vmatprep.subr.bf16.mxu0 0
        %1429 = vmatpush1.bf16.msra.mxu0 %v908
        %1430 = vmatprep.subr.bf16.mxu0 0
        %1431 = vmatpush1.bf16.msra.mxu0 %v911
        %1432 = vmatprep.subr.bf16.mxu0 0
        %1433 = vmatpush1.bf16.msra.mxu0 %v914
        %1434 = vmatprep.subr.bf16.mxu0 0
        %1435 = vmatpush1.bf16.msra.mxu0 %v917
        %1436 = vmatprep.subr.bf16.mxu0 0
        %1437 = vmatpush1.bf16.msra.mxu0 %v920
        %1438 = vmatprep.subr.bf16.mxu0 0
        %1439 = vmatpush1.bf16.msra.mxu0 %v923
        %1440 = vmatprep.subr.bf16.mxu0 0
        %1441 = vmatpush1.bf16.msra.mxu0 %v926
        %1442 = vmatprep.subr.bf16.mxu0 0
        %1443 = vmatpush1.bf16.msra.mxu0 %v929
        %1444 = vmatprep.subr.bf16.mxu0 0
        %1445 = vmatpush1.bf16.msra.mxu0 %v932
        %1446 = vmatprep.subr.bf16.mxu0 0
        %1447 = vmatpush1.bf16.msra.mxu0 %v935
        %1448 = vmatprep.subr.bf16.mxu0 0
        %1449 = vmatpush1.bf16.msra.mxu0 %v938
        %1450 = vmatprep.subr.bf16.mxu0 0
        %1451 = vmatpush1.bf16.msra.mxu0 %v941
        %1452 = vmatprep.mubr.bf16.mxu0 %v312
        %1453 = vmatmul.mubr.bf16.gmra.mrb[0].mxu0 %v459
        %v1454 = vpop.f32.mrb[0].mxu0
        %v1455 = vpop.f32.mrb[0].mxu0
        %v1456 = vpop.f32.mrb[0].mxu0
        %v1457 = vpop.f32.mrb[0].mxu0
        %1458 = vmatprep.mubr.bf16.mxu0 %v313
        %1459 = vmatmul.mubr.bf16.gmra.mrb[0].mxu0 %v460
        %v1460 = vpop.f32.mrb[0].mxu0
        %v1461 = vadd.f32 0.0, %v1460
        %v1462 = vpop.f32.mrb[0].mxu0
        %v1463 = vpop.f32.mrb[0].mxu0
        %v1464 = vadd.f32 0.0, %v1463
        %v1465 = vpop.f32.mrb[0].mxu0
        %1466 = vmatprep.mubr.bf16.mxu0 %v314
        %1467 = vmatmul.mubr.bf16.gmra.mrb[0].mxu0 %v461
        %v1468 = vpop.f32.mrb[0].mxu0
        %v1469 = vadd.f32 0.0, %v1468
        %v1470 = vpop.f32.mrb[0].mxu0
        %v1471 = vpop.f32.mrb[0].mxu0
        %v1472 = vadd.f32 0.0, %v1471
        %v1473 = vpop.f32.mrb[0].mxu0
        %1474 = vmatprep.mubr.bf16.mxu0 %v315
        %1475 = vmatmul.mubr.bf16.gmra.mrb[0].mxu0 %v462
        %v1476 = vpop.f32.mrb[0].mxu0
        %v1477 = vadd.f32 0.0, %v1476
        %v1478 = vpop.f32.mrb[0].mxu0
        %v1479 = vpop.f32.mrb[0].mxu0
        %v1480 = vadd.f32 0.0, %v1479
        %v1481 = vpop.f32.mrb[0].mxu0
        %1482 = vmatprep.mubr.bf16.mxu0 %v316
        %1483 = vmatmul.mubr.bf16.gmra.mrb[0].mxu0 %v463
        %v1484 = vpop.f32.mrb[0].mxu0
        %v1485 = vadd.f32 0.0, %v1484
        %v1486 = vpop.f32.mrb[0].mxu0
        %v1487 = vpop.f32.mrb[0].mxu0
        %v1488 = vadd.f32 0.0, %v1487
        %v1489 = vpop.f32.mrb[0].mxu0
        %1490 = vmatprep.mubr.bf16.mxu0 %v317
        %1491 = vmatmul.mubr.bf16.gmra.mrb[0].mxu0 %v464
        %v1492 = vpop.f32.mrb[0].mxu0
        %v1493 = vadd.f32 0.0, %v1492
        %v1494 = vpop.f32.mrb[0].mxu0
        %v1495 = vpop.f32.mrb[0].mxu0
        %v1496 = vadd.f32 0.0, %v1495
        %v1497 = vpop.f32.mrb[0].mxu0
        %1498 = vmatprep.mubr.bf16.mxu0 %v318
        %1499 = vmatmul.mubr.bf16.gmra.mrb[0].mxu0 %v465
        %v1500 = vpop.f32.mrb[0].mxu0
        %v1501 = vadd.f32 0.0, %v1500
        %v1502 = vpop.f32.mrb[0].mxu0
        %v1503 = vpop.f32.mrb[0].mxu0
        %v1504 = vadd.f32 0.0, %v1503
        %v1505 = vpop.f32.mrb[0].mxu0
        %1506 = vmatprep.mubr.bf16.mxu0 %v319
        %1507 = vmatmul.mubr.bf16.gmra.mrb[0].mxu0 %v466
        %v1508 = vpop.f32.mrb[0].mxu0
        %v1509 = vadd.f32 0.0, %v1508
        %v1510 = vpop.f32.mrb[0].mxu0
        %v1511 = vpop.f32.mrb[0].mxu0
        %v1512 = vadd.f32 0.0, %v1511
        %v1513 = vpop.f32.mrb[0].mxu0
        %1514 = vmatprep.mubr.bf16.mxu0 %v320
        %1515 = vmatmul.mubr.bf16.gmra.mrb[0].mxu0 %v467
        %v1516 = vpop.f32.mrb[0].mxu0
        %v1517 = vadd.f32 0.0, %v1516
        %v1518 = vpop.f32.mrb[0].mxu0
        %v1519 = vpop.f32.mrb[0].mxu0
        %v1520 = vadd.f32 0.0, %v1519
        %v1521 = vpop.f32.mrb[0].mxu0
        %1522 = vmatprep.mubr.bf16.mxu0 %v321
        %1523 = vmatmul.mubr.bf16.gmra.mrb[0].mxu0 %v468
        %v1524 = vpop.f32.mrb[0].mxu0
        %v1525 = vadd.f32 0.0, %v1524
        %v1526 = vpop.f32.mrb[0].mxu0
        %v1527 = vpop.f32.mrb[0].mxu0
        %v1528 = vadd.f32 0.0, %v1527
        %v1529 = vpop.f32.mrb[0].mxu0
        %1530 = vmatprep.mubr.bf16.mxu0 %v322
        %1531 = vmatmul.mubr.bf16.gmra.mrb[0].mxu0 %v469
        %v1532 = vpop.f32.mrb[0].mxu0
        %v1533 = vadd.f32 0.0, %v1532
        %v1534 = vpop.f32.mrb[0].mxu0
        %v1535 = vpop.f32.mrb[0].mxu0
        %v1536 = vadd.f32 0.0, %v1535
        %v1537 = vpop.f32.mrb[0].mxu0
        %1538 = vmatprep.mubr.bf16.mxu0 %v323
        %1539 = vmatmul.mubr.bf16.gmra.mrb[0].mxu0 %v470
        %v1540 = vpop.f32.mrb[0].mxu0
        %v1541 = vadd.f32 0.0, %v1540
        %v1542 = vpop.f32.mrb[0].mxu0
        %v1543 = vpop.f32.mrb[0].mxu0
        %v1544 = vadd.f32 0.0, %v1543
        %v1545 = vpop.f32.mrb[0].mxu0
        %1546 = vmatprep.mubr.bf16.mxu0 %v324
        %1547 = vmatmul.mubr.bf16.gmra.mrb[0].mxu0 %v471
        %v1548 = vpop.f32.mrb[0].mxu0
        %v1549 = vadd.f32 0.0, %v1548
        %v1550 = vpop.f32.mrb[0].mxu0
        %v1551 = vpop.f32.mrb[0].mxu0
        %v1552 = vadd.f32 0.0, %v1551
        %v1553 = vpop.f32.mrb[0].mxu0
        %1554 = vmatprep.mubr.bf16.mxu0 %v325
        %1555 = vmatmul.mubr.bf16.gmra.mrb[0].mxu0 %v472
        %v1556 = vpop.f32.mrb[0].mxu0
        %v1557 = vadd.f32 0.0, %v1556
        %v1558 = vpop.f32.mrb[0].mxu0
        %v1559 = vpop.f32.mrb[0].mxu0
        %v1560 = vadd.f32 0.0, %v1559
        %v1561 = vpop.f32.mrb[0].mxu0
        %1562 = vmatprep.mubr.bf16.mxu0 %v326
        %1563 = vmatmul.mubr.bf16.gmra.mrb[0].mxu0 %v473
        %v1564 = vpop.f32.mrb[0].mxu0
        %v1565 = vadd.f32 0.0, %v1564
        %v1566 = vpop.f32.mrb[0].mxu0
        %v1567 = vpop.f32.mrb[0].mxu0
        %v1568 = vadd.f32 0.0, %v1567
        %v1569 = vpop.f32.mrb[0].mxu0
        %1570 = vmatprep.mubr.bf16.mxu0 %v327
        %1571 = vmatmul.mubr.bf16.gmra.mrb[0].mxu0 %v474
        %v1572 = vpop.f32.mrb[0].mxu0
        %v1573 = vadd.f32 0.0, %v1572
        %v1574 = vpop.f32.mrb[0].mxu0
        %v1575 = vpop.f32.mrb[0].mxu0
        %v1576 = vadd.f32 0.0, %v1575
        %v1577 = vpop.f32.mrb[0].mxu0
        %1578 = vdwg.mxu0
        %1579 = vmatprep.subr.bf16.mxu0 0
        %1580 = vmatpush1.bf16.msra.mxu0 %v944
        %1581 = vmatprep.subr.bf16.mxu0 0
        %1582 = vmatpush1.bf16.msra.mxu0 %v947
        %1583 = vmatprep.subr.bf16.mxu0 0
        %1584 = vmatpush1.bf16.msra.mxu0 %v950
        %1585 = vmatprep.subr.bf16.mxu0 0
        %1586 = vmatpush1.bf16.msra.mxu0 %v953
        %1587 = vmatprep.subr.bf16.mxu0 0
        %1588 = vmatpush1.bf16.msra.mxu0 %v956
        %1589 = vmatprep.subr.bf16.mxu0 0
        %1590 = vmatpush1.bf16.msra.mxu0 %v959
        %1591 = vmatprep.subr.bf16.mxu0 0
        %1592 = vmatpush1.bf16.msra.mxu0 %v962
        %1593 = vmatprep.subr.bf16.mxu0 0
        %1594 = vmatpush1.bf16.msra.mxu0 %v965
        %1595 = vmatprep.subr.bf16.mxu0 0
        %1596 = vmatpush1.bf16.msra.mxu0 0
        %1597 = vmatprep.subr.bf16.mxu0 0
        %1598 = vmatpush1.bf16.msra.mxu0 0
        %1599 = vmatprep.subr.bf16.mxu0 0
        %1600 = vmatpush1.bf16.msra.mxu0 0
        %1601 = vmatprep.subr.bf16.mxu0 0
        %1602 = vmatpush1.bf16.msra.mxu0 0
        %1603 = vmatprep.subr.bf16.mxu0 0
        %1604 = vmatpush1.bf16.msra.mxu0 0
        %1605 = vmatprep.subr.bf16.mxu0 0
        %1606 = vmatpush1.bf16.msra.mxu0 0
        %1607 = vmatprep.subr.bf16.mxu0 0
        %1608 = vmatpush1.bf16.msra.mxu0 0
        %1609 = vmatprep.subr.bf16.mxu0 0
        %1610 = vmatpush1.bf16.msra.mxu0 0
        %1611 = vmatprep.mubr.bf16.mxu0 0
        %1612 = vmatmul.mubr.bf16.gmra.mrb[0].mxu0 %v526
        %v1613 = vpop.f32.mrb[0].mxu0
        %v1614 = vpop.f32.mrb[0].mxu0
        %v1615 = vpop.f32.mrb[0].mxu0
        %v1616 = vpop.f32.mrb[0].mxu0
        %1617 = vmatprep.mubr.bf16.mxu0 0
        %1618 = vmatmul.mubr.bf16.gmra.mrb[0].mxu0 %v527
        %v1619 = vpop.f32.mrb[0].mxu0
        %v1620 = vadd.f32 %v1461, %v1619
        %v1621 = vpop.f32.mrb[0].mxu0
        %v1622 = vpop.f32.mrb[0].mxu0
        %v1623 = vadd.f32 %v1464, %v1622
        %v1624 = vpop.f32.mrb[0].mxu0
        %1625 = vmatprep.mubr.bf16.mxu0 0
        %1626 = vmatmul.mubr.bf16.gmra.mrb[0].mxu0 %v528
        %v1627 = vpop.f32.mrb[0].mxu0
        %v1628 = vadd.f32 %v1469, %v1627
        %v1629 = vpop.f32.mrb[0].mxu0
        %v1630 = vpop.f32.mrb[0].mxu0
        %v1631 = vadd.f32 %v1472, %v1630
        %v1632 = vpop.f32.mrb[0].mxu0
        %1633 = vmatprep.mubr.bf16.mxu0 0
        %1634 = vmatmul.mubr.bf16.gmra.mrb[0].mxu0 %v529
        %v1635 = vpop.f32.mrb[0].mxu0
        %v1636 = vadd.f32 %v1477, %v1635
        %v1637 = vpop.f32.mrb[0].mxu0
        %v1638 = vpop.f32.mrb[0].mxu0
        %v1639 = vadd.f32 %v1480, %v1638
        %v1640 = vpop.f32.mrb[0].mxu0
        %1641 = vmatprep.mubr.bf16.mxu0 0
        %1642 = vmatmul.mubr.bf16.gmra.mrb[0].mxu0 %v530
        %v1643 = vpop.f32.mrb[0].mxu0
        %v1644 = vadd.f32 %v1485, %v1643
        %v1645 = vpop.f32.mrb[0].mxu0
        %v1646 = vpop.f32.mrb[0].mxu0
        %v1647 = vadd.f32 %v1488, %v1646
        %v1648 = vpop.f32.mrb[0].mxu0
        %1649 = vmatprep.mubr.bf16.mxu0 0
        %1650 = vmatmul.mubr.bf16.gmra.mrb[0].mxu0 %v531
        %v1651 = vpop.f32.mrb[0].mxu0
        %v1652 = vadd.f32 %v1493, %v1651
        %v1653 = vpop.f32.mrb[0].mxu0
        %v1654 = vpop.f32.mrb[0].mxu0
        %v1655 = vadd.f32 %v1496, %v1654
        %v1656 = vpop.f32.mrb[0].mxu0
        %1657 = vmatprep.mubr.bf16.mxu0 0
        %1658 = vmatmul.mubr.bf16.gmra.mrb[0].mxu0 %v532
        %v1659 = vpop.f32.mrb[0].mxu0
        %v1660 = vadd.f32 %v1501, %v1659
        %v1661 = vpop.f32.mrb[0].mxu0
        %v1662 = vpop.f32.mrb[0].mxu0
        %v1663 = vadd.f32 %v1504, %v1662
        %v1664 = vpop.f32.mrb[0].mxu0
        %1665 = vmatprep.mubr.bf16.mxu0 0
        %1666 = vmatmul.mubr.bf16.gmra.mrb[0].mxu0 %v533
        %v1667 = vpop.f32.mrb[0].mxu0
        %v1668 = vadd.f32 %v1509, %v1667
        %v1669 = vpop.f32.mrb[0].mxu0
        %v1670 = vpop.f32.mrb[0].mxu0
        %v1671 = vadd.f32 %v1512, %v1670
        %v1672 = vpop.f32.mrb[0].mxu0
        %1673 = vmatprep.mubr.bf16.mxu0 0
        %1674 = vmatmul.mubr.bf16.gmra.mrb[0].mxu0 %v534
        %v1675 = vpop.f32.mrb[0].mxu0
        %v1676 = vadd.f32 %v1517, %v1675
        %v1677 = vpop.f32.mrb[0].mxu0
        %v1678 = vpop.f32.mrb[0].mxu0
        %v1679 = vadd.f32 %v1520, %v1678
        %v1680 = vpop.f32.mrb[0].mxu0
        %1681 = vmatprep.mubr.bf16.mxu0 0
        %1682 = vmatmul.mubr.bf16.gmra.mrb[0].mxu0 %v535
        %v1683 = vpop.f32.mrb[0].mxu0
        %v1684 = vadd.f32 %v1525, %v1683
        %v1685 = vpop.f32.mrb[0].mxu0
        %v1686 = vpop.f32.mrb[0].mxu0
        %v1687 = vadd.f32 %v1528, %v1686
        %v1688 = vpop.f32.mrb[0].mxu0
        %1689 = vmatprep.mubr.bf16.mxu0 0
        %1690 = vmatmul.mubr.bf16.gmra.mrb[0].mxu0 %v536
        %v1691 = vpop.f32.mrb[0].mxu0
        %v1692 = vadd.f32 %v1533, %v1691
        %v1693 = vpop.f32.mrb[0].mxu0
        %v1694 = vpop.f32.mrb[0].mxu0
        %v1695 = vadd.f32 %v1536, %v1694
        %v1696 = vpop.f32.mrb[0].mxu0
        %1697 = vmatprep.mubr.bf16.mxu0 0
        %1698 = vmatmul.mubr.bf16.gmra.mrb[0].mxu0 %v537
        %v1699 = vpop.f32.mrb[0].mxu0
        %v1700 = vadd.f32 %v1541, %v1699
        %v1701 = vpop.f32.mrb[0].mxu0
        %v1702 = vpop.f32.mrb[0].mxu0
        %v1703 = vadd.f32 %v1544, %v1702
        %v1704 = vpop.f32.mrb[0].mxu0
        %1705 = vmatprep.mubr.bf16.mxu0 0
        %1706 = vmatmul.mubr.bf16.gmra.mrb[0].mxu0 %v538
        %v1707 = vpop.f32.mrb[0].mxu0
        %v1708 = vadd.f32 %v1549, %v1707
        %v1709 = vpop.f32.mrb[0].mxu0
        %v1710 = vpop.f32.mrb[0].mxu0
        %v1711 = vadd.f32 %v1552, %v1710
        %v1712 = vpop.f32.mrb[0].mxu0
        %1713 = vmatprep.mubr.bf16.mxu0 0
        %1714 = vmatmul.mubr.bf16.gmra.mrb[0].mxu0 %v539
        %v1715 = vpop.f32.mrb[0].mxu0
        %v1716 = vadd.f32 %v1557, %v1715
        %v1717 = vpop.f32.mrb[0].mxu0
        %v1718 = vpop.f32.mrb[0].mxu0
        %v1719 = vadd.f32 %v1560, %v1718
        %v1720 = vpop.f32.mrb[0].mxu0
        %1721 = vmatprep.mubr.bf16.mxu0 0
        %1722 = vmatmul.mubr.bf16.gmra.mrb[0].mxu0 %v540
        %v1723 = vpop.f32.mrb[0].mxu0
        %v1724 = vadd.f32 %v1565, %v1723
        %v1725 = vpop.f32.mrb[0].mxu0
        %v1726 = vpop.f32.mrb[0].mxu0
        %v1727 = vadd.f32 %v1568, %v1726
        %v1728 = vpop.f32.mrb[0].mxu0
        %1729 = vmatprep.mubr.bf16.mxu0 0
        %1730 = vmatmul.mubr.bf16.gmra.mrb[0].mxu0 %v541
        %v1731 = vpop.f32.mrb[0].mxu0
        %v1732 = vadd.f32 %v1573, %v1731
        %v1733 = vpop.f32.mrb[0].mxu0
        %v1734 = vpop.f32.mrb[0].mxu0
        %v1735 = vadd.f32 %v1576, %v1734
        %v1736 = vpop.f32.mrb[0].mxu0
        %1737 = vdwg.mxu0
        %v1738 = vadd.f32 %v1266, 0.0
        %v1739 = vadd.f32 %v1270, 0.0
        %v1740 = vadd.f32 %v1276, %v1264
        %v1741 = vadd.f32 %v1280, %v1268
        %v1742 = vadd.f32 %v1286, %v1274
        %v1743 = vadd.f32 %v1290, %v1278
        %v1744 = vadd.f32 %v1296, %v1284
        %v1745 = vadd.f32 %v1300, %v1288
        %v1746 = vadd.f32 %v1306, %v1294
        %v1747 = vadd.f32 %v1310, %v1298
        %v1748 = vadd.f32 %v1316, %v1304
        %v1749 = vadd.f32 %v1320, %v1308
        %v1750 = vadd.f32 %v1326, %v1314
        %v1751 = vadd.f32 %v1330, %v1318
        %v1752 = vadd.f32 %v1336, %v1324
        %v1753 = vadd.f32 %v1340, %v1328
        %v1754 = vadd.f32 %v1346, %v1334
        %v1755 = vadd.f32 %v1350, %v1338
        %v1756 = vadd.f32 %v1356, %v1344
        %v1757 = vadd.f32 %v1360, %v1348
        %v1758 = vadd.f32 %v1366, %v1354
        %v1759 = vadd.f32 %v1370, %v1358
        %v1760 = vadd.f32 %v1376, %v1364
        %v1761 = vadd.f32 %v1380, %v1368
        %v1762 = vadd.f32 %v1386, %v1374
        %v1763 = vadd.f32 %v1390, %v1378
        %v1764 = vadd.f32 %v1396, %v1384
        %v1765 = vadd.f32 %v1400, %v1388
        %v1766 = vadd.f32 %v1406, %v1394
        %v1767 = vadd.f32 %v1410, %v1398
        %v1768 = vadd.f32 %v1415, %v1404
        %v1769 = vadd.f32 %v1418, %v1408
        %v1770 = vadd.f32 %v1738, %v1620
        %v1771 = vadd.f32 %v1739, %v1623
        %v1772 = vadd.f32 %v1740, %v1628
        %v1773 = vadd.f32 %v1741, %v1631
        %v1774 = vadd.f32 %v1742, %v1636
        %v1775 = vadd.f32 %v1743, %v1639
        %v1776 = vadd.f32 %v1744, %v1644
        %v1777 = vadd.f32 %v1745, %v1647
        %v1778 = vadd.f32 %v1746, %v1652
        %v1779 = vadd.f32 %v1747, %v1655
        %v1780 = vadd.f32 %v1748, %v1660
        %v1781 = vadd.f32 %v1749, %v1663
        %v1782 = vadd.f32 %v1750, %v1668
        %v1783 = vadd.f32 %v1751, %v1671
        %v1784 = vadd.f32 %v1752, %v1676
        %v1785 = vadd.f32 %v1753, %v1679
        %v1786 = vadd.f32 %v1754, %v1684
        %v1787 = vadd.f32 %v1755, %v1687
        %v1788 = vadd.f32 %v1756, %v1692
        %v1789 = vadd.f32 %v1757, %v1695
        %v1790 = vadd.f32 %v1758, %v1700
        %v1791 = vadd.f32 %v1759, %v1703
        %v1792 = vadd.f32 %v1760, %v1708
        %v1793 = vadd.f32 %v1761, %v1711
        %v1794 = vadd.f32 %v1762, %v1716
        %v1795 = vadd.f32 %v1763, %v1719
        %v1796 = vadd.f32 %v1764, %v1724
        %v1797 = vadd.f32 %v1765, %v1727
        %v1798 = vadd.f32 %v1766, %v1732
        %v1799 = vadd.f32 %v1767, %v1735
        %v1800 = vadd.f32 %v1768, 0.0
        %v1801 = vadd.f32 %v1769, 0.0
        %v1802 = vpack.c.bf16 %v1771, %v1770
        %v1803 = vpack.c.bf16 %v1773, %v1772
        %v1804 = vpack.c.bf16 %v1775, %v1774
        %v1805 = vpack.c.bf16 %v1777, %v1776
        %v1806 = vpack.c.bf16 %v1779, %v1778
        %v1807 = vpack.c.bf16 %v1781, %v1780
        %v1808 = vpack.c.bf16 %v1783, %v1782
        %v1809 = vpack.c.bf16 %v1785, %v1784
        %v1810 = vpack.c.bf16 %v1787, %v1786
        %v1811 = vpack.c.bf16 %v1789, %v1788
        %v1812 = vpack.c.bf16 %v1791, %v1790
        %v1813 = vpack.c.bf16 %v1793, %v1792
        %v1814 = vpack.c.bf16 %v1795, %v1794
        %v1815 = vpack.c.bf16 %v1797, %v1796
        %v1816 = vpack.c.bf16 %v1799, %v1798
        %v1817 = vpack.c.bf16 %v1801, %v1800
        %v1834 = vunpack.c.l.b16 %v1802
        %v1835 = vunpack.c.h.b16 %v1802
        %v1836 = vunpack.c.l.b16 %v1803
        %v1837 = vunpack.c.h.b16 %v1803
        %v1838 = vunpack.c.l.b16 %v1804
        %v1839 = vunpack.c.h.b16 %v1804
        %v1840 = vunpack.c.l.b16 %v1805
        %v1841 = vunpack.c.h.b16 %v1805
        %v1842 = vunpack.c.l.b16 %v1806
        %v1843 = vunpack.c.h.b16 %v1806
        %v1844 = vunpack.c.l.b16 %v1807
        %v1845 = vunpack.c.h.b16 %v1807
        %v1846 = vunpack.c.l.b16 %v1808
        %v1847 = vunpack.c.h.b16 %v1808
        %v1848 = vunpack.c.l.b16 %v1809
        %v1849 = vunpack.c.h.b16 %v1809
        %v1850 = vunpack.c.l.b16 %v1810
        %v1851 = vunpack.c.h.b16 %v1810
        %v1852 = vunpack.c.l.b16 %v1811
        %v1853 = vunpack.c.h.b16 %v1811
        %v1854 = vunpack.c.l.b16 %v1812
        %v1855 = vunpack.c.h.b16 %v1812
        %v1856 = vunpack.c.l.b16 %v1813
        %v1857 = vunpack.c.h.b16 %v1813
        %v1858 = vunpack.c.l.b16 %v1814
        %v1859 = vunpack.c.h.b16 %v1814
        %v1860 = vunpack.c.l.b16 %v1815
        %v1861 = vunpack.c.h.b16 %v1815
        %v1862 = vunpack.c.l.b16 %v1816
        %v1863 = vunpack.c.h.b16 %v1816
        %v1864 = vunpack.c.l.b16 %v1817
        %v1865 = vunpack.c.h.b16 %v1817
        %v1866 = vpack.c.b16 %v1834, %v1834
        %v1867 = vpack.c.b16 %v1835, %v1835
        %v1868 = vpack.c.b16 %v1836, %v1836
        %v1869 = vpack.c.b16 %v1837, %v1837
        %v1870 = vpack.c.b16 %v1838, %v1838
        %v1871 = vpack.c.b16 %v1839, %v1839
        %v1872 = vpack.c.b16 %v1840, %v1840
        %v1873 = vpack.c.b16 %v1841, %v1841
        %v1874 = vpack.c.b16 %v1842, %v1842
        %v1875 = vpack.c.b16 %v1843, %v1843
        %v1876 = vpack.c.b16 %v1844, %v1844
        %v1877 = vpack.c.b16 %v1845, %v1845
        %v1878 = vpack.c.b16 %v1846, %v1846
        %v1879 = vpack.c.b16 %v1847, %v1847
        %v1880 = vpack.c.b16 %v1848, %v1848
        %v1881 = vpack.c.b16 %v1849, %v1849
        %v1882 = vpack.c.b16 %v1850, %v1850
        %v1883 = vpack.c.b16 %v1851, %v1851
        %v1884 = vpack.c.b16 %v1852, %v1852
        %v1885 = vpack.c.b16 %v1853, %v1853
        %v1886 = vpack.c.b16 %v1854, %v1854
        %v1887 = vpack.c.b16 %v1855, %v1855
        %v1888 = vpack.c.b16 %v1856, %v1856
        %v1889 = vpack.c.b16 %v1857, %v1857
        %v1890 = vpack.c.b16 %v1858, %v1858
        %v1891 = vpack.c.b16 %v1859, %v1859
        %v1892 = vpack.c.b16 %v1860, %v1860
        %v1893 = vpack.c.b16 %v1861, %v1861
        %v1894 = vpack.c.b16 %v1862, %v1862
        %v1895 = vpack.c.b16 %v1863, %v1863
        %v1896 = vpack.c.b16 %v1864, %v1864
        %v1897 = vpack.c.b16 %v1865, %v1865
        %1930 = vst [vmem:[%s207] sm:$0xf] %v1866
        %1931 = vst [vmem:[%s207 + $0x4] sm:$0xf] %v1867
        %1932 = vst [vmem:[%s207 + $0x8] sm:$0xf] %v1868
        %1933 = vst [vmem:[%s207 + $0xc] sm:$0xf] %v1869
        %1934 = vst [vmem:[%s207 + $0x10] sm:$0xf] %v1870
        %1935 = vst [vmem:[%s207 + $0x14] sm:$0xf] %v1871
        %1936 = vst [vmem:[%s207 + $0x18] sm:$0xf] %v1872
        %1937 = vst [vmem:[%s207 + $0x1c] sm:$0xf] %v1873
        %1938 = vst [vmem:[%s207 + $0x20] sm:$0xf] %v1874
        %1939 = vst [vmem:[%s207 + $0x24] sm:$0xf] %v1875
        %1940 = vst [vmem:[%s207 + $0x28] sm:$0xf] %v1876
        %1941 = vst [vmem:[%s207 + $0x2c] sm:$0xf] %v1877
        %1942 = vst [vmem:[%s207 + $0x30] sm:$0xf] %v1878
        %1943 = vst [vmem:[%s207 + $0x34] sm:$0xf] %v1879
        %1944 = vst [vmem:[%s207 + $0x38] sm:$0xf] %v1880
        %1945 = vst [vmem:[%s207 + $0x3c] sm:$0xf] %v1881
        %1946 = vst [vmem:[%s207 + $0x40] sm:$0xf] %v1882
        %1947 = vst [vmem:[%s207 + $0x44] sm:$0xf] %v1883
        %1948 = vst [vmem:[%s207 + $0x48] sm:$0xf] %v1884
        %1949 = vst [vmem:[%s207 + $0x4c] sm:$0xf] %v1885
        %1950 = vst [vmem:[%s207 + $0x50] sm:$0xf] %v1886
        %1951 = vst [vmem:[%s207 + $0x54] sm:$0xf] %v1887
        %1952 = vst [vmem:[%s207 + $0x58] sm:$0xf] %v1888
        %1953 = vst [vmem:[%s207 + $0x5c] sm:$0xf] %v1889
        %1954 = vst [vmem:[%s207 + $0x60] sm:$0xf] %v1890
        %1955 = vst [vmem:[%s207 + $0x64] sm:$0xf] %v1891
        %1956 = vst [vmem:[%s207 + $0x68] sm:$0xf] %v1892
        %1957 = vst [vmem:[%s207 + $0x6c] sm:$0xf] %v1893
        %1958 = vst [vmem:[%s207 + $0x70] sm:$0xf] %v1894
        %1959 = vst [vmem:[%s207 + $0x74] sm:$0xf] %v1895
        %1960 = vst [vmem:[%s207 + $0x78] sm:$0xf] %v1896
        %1961 = vst [vmem:[%s207 + $0x7c] sm:$0xf] %v1897
        %v1962 = vadd.f32 %v1770, %v1771
        %v1963 = vadd.f32 %v1962, %v1772
        %v1964 = vadd.f32 %v1963, %v1773
        %v1965 = vadd.f32 %v1964, %v1774
        %v1966 = vadd.f32 %v1965, %v1775
        %v1967 = vadd.f32 %v1966, %v1776
        %v1968 = vadd.f32 %v1967, %v1777
        %v1969 = vadd.f32 %v1968, %v1778
        %v1970 = vadd.f32 %v1969, %v1779
        %v1971 = vadd.f32 %v1970, %v1780
        %v1972 = vadd.f32 %v1971, %v1781
        %v1973 = vadd.f32 %v1972, %v1782
        %v1974 = vadd.f32 %v1973, %v1783
        %v1975 = vadd.f32 %v1974, %v1784
        %v1976 = vadd.f32 %v1975, %v1785
        %v1977 = vadd.f32 %v1976, %v1786
        %v1978 = vadd.f32 %v1977, %v1787
        %v1979 = vadd.f32 %v1978, %v1788
        %v1980 = vadd.f32 %v1979, %v1789
        %v1981 = vadd.f32 %v1980, %v1790
        %v1982 = vadd.f32 %v1981, %v1791
        %v1983 = vadd.f32 %v1982, %v1792
        %v1984 = vadd.f32 %v1983, %v1793
        %v1985 = vadd.f32 %v1984, %v1794
        %v1986 = vadd.f32 %v1985, %v1795
        %v1987 = vadd.f32 %v1986, %v1796
        %v1988 = vadd.f32 %v1987, %v1797
        %v1989 = vadd.f32 %v1988, %v1798
        %v1990 = vadd.f32 %v1989, %v1799
        %v1991 = vadd.f32 %v1990, %v1800
        %v1992 = vadd.f32 %v1991, %v1801
        %v1993 = vrot.slane %v1992, 4
        %v1994 = vadd.f32 %v1992, %v1993
        %v1995 = vrot.slane %v1994, 2
        %v1996 = vadd.f32 %v1994, %v1995
        %v1997 = vrot.slane %v1996, 1
        %v1998 = vadd.f32 %v1996, %v1997
        %v1999 = vmul.f32 %v1770, %v1770
        %v2000 = vmul.f32 %v1771, %v1771
        %v2001 = vmul.f32 %v1772, %v1772
        %v2002 = vmul.f32 %v1773, %v1773
        %v2003 = vmul.f32 %v1774, %v1774
        %v2004 = vmul.f32 %v1775, %v1775
        %v2005 = vmul.f32 %v1776, %v1776
        %v2006 = vmul.f32 %v1777, %v1777
        %v2007 = vmul.f32 %v1778, %v1778
        %v2008 = vmul.f32 %v1779, %v1779
        %v2009 = vmul.f32 %v1780, %v1780
        %v2010 = vmul.f32 %v1781, %v1781
        %v2011 = vmul.f32 %v1782, %v1782
        %v2012 = vmul.f32 %v1783, %v1783
        %v2013 = vmul.f32 %v1784, %v1784
        %v2014 = vmul.f32 %v1785, %v1785
        %v2015 = vmul.f32 %v1786, %v1786
        %v2016 = vmul.f32 %v1787, %v1787
        %v2017 = vmul.f32 %v1788, %v1788
        %v2018 = vmul.f32 %v1789, %v1789
        %v2019 = vmul.f32 %v1790, %v1790
        %v2020 = vmul.f32 %v1791, %v1791
        %v2021 = vmul.f32 %v1792, %v1792
        %v2022 = vmul.f32 %v1793, %v1793
        %v2023 = vmul.f32 %v1794, %v1794
        %v2024 = vmul.f32 %v1795, %v1795
        %v2025 = vmul.f32 %v1796, %v1796
        %v2026 = vmul.f32 %v1797, %v1797
        %v2027 = vmul.f32 %v1798, %v1798
        %v2028 = vmul.f32 %v1799, %v1799
        %v2029 = vmul.f32 %v1800, %v1800
        %v2030 = vmul.f32 %v1801, %v1801
        %v2031 = vadd.f32 %v1999, %v2000
        %v2032 = vadd.f32 %v2031, %v2001
        %v2033 = vadd.f32 %v2032, %v2002
        %v2034 = vadd.f32 %v2033, %v2003
        %v2035 = vadd.f32 %v2034, %v2004
        %v2036 = vadd.f32 %v2035, %v2005
        %v2037 = vadd.f32 %v2036, %v2006
        %v2038 = vadd.f32 %v2037, %v2007
        %v2039 = vadd.f32 %v2038, %v2008
        %v2040 = vadd.f32 %v2039, %v2009
        %v2041 = vadd.f32 %v2040, %v2010
        %v2042 = vadd.f32 %v2041, %v2011
        %v2043 = vadd.f32 %v2042, %v2012
        %v2044 = vadd.f32 %v2043, %v2013
        %v2045 = vadd.f32 %v2044, %v2014
        %v2046 = vadd.f32 %v2045, %v2015
        %v2047 = vadd.f32 %v2046, %v2016
        %v2048 = vadd.f32 %v2047, %v2017
        %v2049 = vadd.f32 %v2048, %v2018
        %v2050 = vadd.f32 %v2049, %v2019
        %v2051 = vadd.f32 %v2050, %v2020
        %v2052 = vadd.f32 %v2051, %v2021
        %v2053 = vadd.f32 %v2052, %v2022
        %v2054 = vadd.f32 %v2053, %v2023
        %v2055 = vadd.f32 %v2054, %v2024
        %v2056 = vadd.f32 %v2055, %v2025
        %v2057 = vadd.f32 %v2056, %v2026
        %v2058 = vadd.f32 %v2057, %v2027
        %v2059 = vadd.f32 %v2058, %v2028
        %v2060 = vadd.f32 %v2059, %v2029
        %v2061 = vadd.f32 %v2060, %v2030
        %v2062 = vrot.slane %v2061, 4
        %v2063 = vadd.f32 %v2061, %v2062
        %v2064 = vrot.slane %v2063, 2
        %v2065 = vadd.f32 %v2063, %v2064
        %v2066 = vrot.slane %v2065, 1
        %v2067 = vadd.f32 %v2065, %v2066
        %vm2068 = vcmask 1040384
        %v2069 = vsel %vm2068, %v1998, %v2067
        %2070 = vst [vmem:[%s214] sm:$0x3] %v2069
        %s2071 = sand.u32 %s80, 1
        %s2072 = scalar_lea.sflag [#allocation4], %s2071
        %s2073 = sand.u32 %s80, 1
        %s2074 = smul.addr %s2073, 128
        %s2075 = scalar_lea.vmem [#allocation7], %s2074
        %s2076 = sand.u32 %s106, 1
        %s2077 = scalar_lea.sflag [#allocation9], %s2076
        %s2078 = sand.u32 %s106, 1
        %s2079 = smul.addr %s2078, 2
        %s2080 = scalar_lea.vmem [#allocation8], %s2079
        // Predicated region
        $region37: #{basic_block_forward.3} parent=27 // pred_check
          %p2081 = pneg %p90
        $region38: #{basic_block_forward.3} parent=27 // pred_check_branch
          %2083 = sbr.rel (%p2081) target = $region40
        $region39: #{basic_block_forward.3} parent=27 // pred_region
          %s2085 = ssub.s32 2048, 2048
          %2086 = vsyncadd %s2072, %s2085
          %s2087 = smul.addr %s25, 32
          %s2088 = smul.addr %s2087, 64
          %s2089 = scalar_lea.hbm %s2, %s2088
          %s2090 = sshll.u32 %s2075, 4
          %s2091 = int_to_ptr.vmem [resolvable:$true] %s2090
          %2096 = dma.vmem_to_hbm [thread:$0]  %s2091, 2048, %s2089, %s2072, 64, 64, 4
        $region40: #{basic_block_forward.3} parent=27 // pred_fallthru
          _
        // Predicated region
        $region41: #{basic_block_forward.3} parent=27 // pred_check
          %p2097 = pneg %p116
        $region42: #{basic_block_forward.3} parent=27 // pred_check_branch
          %2099 = sbr.rel (%p2097) target = $region44
        $region43: #{basic_block_forward.3} parent=27 // pred_region
          %s2101 = ssub.s32 32, 32
          %2102 = vsyncadd %s2077, %s2101
          %s2103 = smul.addr %s25, 32
          %s2104 = scalar_lea.hbm %s3, %s2103
          %s2106 = sshll.u32 %s2080, 4
          %s2107 = int_to_ptr.vmem [resolvable:$true] %s2106
          %2109 = dma.vmem_to_hbm [thread:$0]  %s2107, 32, %s2104, %s2077
        $region44: #{basic_block_forward.3} parent=27 // pred_fallthru
          _
      $region28: #{basic_block_forward.3} parent=5 // pred_fallthru
        _
      %p2110 = scmp.le.s32.totalorder 2, %s20
      // Predicated region
      $region45: #{basic_block_forward.3} parent=5 // pred_check
        %p2111 = pneg %p2110
      $region46: #{basic_block_forward.3} parent=5 // pred_check_branch
        %2113 = sbr.rel (%p2111) target = $region48
      $region47: #{basic_block_forward.3} parent=5 // pred_region
        %s2114 = ssub.s32 %s20, 2
        // Predicated region
        $region49: #{basic_block_forward.3} parent=47 // pred_check
          %p2115 = pneg %p96
        $region50: #{basic_block_forward.3} parent=47 // pred_check_branch
          %2117 = sbr.rel (%p2115) target = $region52
        $region51: #{basic_block_forward.3} parent=47 // pred_region
          %s2118 = sand.u32 %s81, 1
          %s2119 = scalar_lea.sflag [#allocation4], %s2118
          %s2120 = sand.u32 %s81, 1
          %s2121 = smul.addr %s2120, 128
          %s2122 = scalar_lea.vmem [#allocation7], %s2121
          %2123 = dma.done %s2119, 2048
        $region52: #{basic_block_forward.3} parent=47 // pred_fallthru
          _
        // Predicated region
        $region53: #{basic_block_forward.3} parent=47 // pred_check
          %p2124 = pneg %p122
        $region54: #{basic_block_forward.3} parent=47 // pred_check_branch
          %2126 = sbr.rel (%p2124) target = $region56
        $region55: #{basic_block_forward.3} parent=47 // pred_region
          %s2127 = sand.u32 %s107, 1
          %s2128 = scalar_lea.sflag [#allocation9], %s2127
          %s2129 = sand.u32 %s107, 1
          %s2130 = smul.addr %s2129, 2
          %s2131 = scalar_lea.vmem [#allocation8], %s2130
          %2132 = dma.done %s2128, 32
        $region56: #{basic_block_forward.3} parent=47 // pred_fallthru
          _
      $region48: #{basic_block_forward.3} parent=5 // pred_fallthru
        _
    $region6: #{basic_block_forward.3} parent=1 // loop_footer
      %s24 = sadd.s32 1, %s20
    $region7: #{basic_block_forward.3} parent=1 // loop_footer_branch
      %19 = sbr.rel target = $region3
    $region8: #{basic_block_forward.3} parent=1 // loop_exit
      _
    %2133 = vsyncpa [#allocation3], 1
    %s2134 = scalar_lea.sflag [#allocation3], 1
    %2135 = vsyncpa %s2134, 1
    %2136 = vsyncpa [#allocation6], 1
    %2137 = vsyncpa [#allocation4], 1
    %s2138 = scalar_lea.sflag [#allocation4], 1
    %2139 = vsyncpa %s2138, 1
    %2140 = vsyncpa [#allocation9], 1
    %s2141 = scalar_lea.sflag [#allocation9], 1
    %2142 = vsyncpa %s2141, 1

// kernel: basic_block_forward.4
$region0: #{basic_block_forward.4}
  #allocation0 [shape = 'u32[]', space=smem, size = 0x4, offset = 0x4, fixed_abs, tag = 'smem constant byte address 0x4 - core index']
  #allocation1 [shape = 'u32[144,128]{1,0:T(1,128)}', space=vmem, size = 0x12000, scoped, tag = 'internal scratch']
  %s0 = inlined_call_operand.hbm [shape: bf16[2,16,16,128], index: 0, kind: input, shape index: {}]
  %s1 = inlined_call_operand.hbm [shape: bf16[384,384], index: 1, kind: input, shape index: {}]
  %s2 = inlined_call_operand.hbm [shape: f32[1,128], index: 2, kind: input, shape index: {}]
  %s3 = inlined_call_operand.hbm [shape: f32[1,128], index: 3, kind: input, shape index: {}]
  %s4 = inlined_call_operand.hbm [shape: bf16[2,16,16,128], index: 4, kind: output, shape index: {0}]
  %s5 = inlined_call_operand.hbm [shape: f32[2,2,128], index: 5, kind: output, shape index: {1}]
  %6 = xla_tuple %s4, %s5
  %s7 = sld [smem:[#allocation0]]
  $region73: #{basic_block_forward.4} parent=0
    _
  %s9 = ssub.s32 1, %s7
  %s10 = scalar_select 0, %s9, %s7
  $region1: #{basic_block_forward.4} parent=0
    #allocation2 [shape = 'u8[131072]{0}', space=vmem, size = 0x20000, scoped, tag = 'input window, operand 0']
    #allocation3 [shape = 's32[2]{0}', space=sflag, size = 0x8, scoped, tag = 'scoped memory for basic_block_forward.4']
    #allocation4 [shape = 's32[2]{0}', space=sflag, size = 0x8, scoped, tag = 'scoped memory for basic_block_forward.4']
    #allocation5 [shape = 'u8[294912]{0}', space=vmem, size = 0x48000, scoped, tag = 'input window, operand 1, single buffered']
    #allocation6 [shape = 's32[1]{0}', space=sflag, size = 0x4, scoped, tag = 'scoped memory for basic_block_forward.4']
    #allocation7 [shape = 'u8[512]{0}', space=vmem, size = 0x400, scoped, tag = 'input window, operand 2, single buffered']
    #allocation8 [shape = 'u8[512]{0}', space=vmem, size = 0x400, scoped, tag = 'input window, operand 3, single buffered']
    #allocation9 [shape = 's32[1]{0}', space=sflag, size = 0x4, scoped, tag = 'scoped memory for basic_block_forward.4']
    #allocation10 [shape = 'u8[131072]{0}', space=vmem, size = 0x20000, scoped, tag = 'output window, operand 0']
    #allocation11 [shape = 'u8[2048]{0}', space=vmem, size = 0x800, scoped, tag = 'output window, operand 1']
    #allocation12 [shape = 's32[2]{0}', space=sflag, size = 0x8, scoped, tag = 'scoped memory for basic_block_forward.4']
    %11 = vsyncpa [#allocation3], 0
    %s12 = scalar_lea.sflag [#allocation3], 1
    %13 = vsyncpa %s12, 0
    %14 = vsyncpa [#allocation6], 0
    %15 = vsyncpa [#allocation9], 0
    %16 = vsyncpa [#allocation4], 0
    %s17 = scalar_lea.sflag [#allocation4], 1
    %18 = vsyncpa %s17, 0
    %19 = vsyncpa [#allocation12], 0
    %s20 = scalar_lea.sflag [#allocation12], 1
    %21 = vsyncpa %s20, 0
    loop: start=0, step=1, limit=4
    $region2: #{basic_block_forward.4} parent=1 // loop_pre_header
      _
    $region3: #{basic_block_forward.4} parent=1 // loop_header
      %s23 = sphi 0, %s27
      %p24 = scmp.ge.s32.totalorder %s23, 4
      %s33 = sphi 0, %s35
      %s36 = sphi 0, %s33
      %s37 = sphi 0, %s36
      %s53 = sphi 0, %s37
      %s57 = sphi 0, %s57
      %s59 = sphi 0, %s57
      %s60 = sphi 0, %s59
      %s74 = sphi 0, %s60
      %s78 = sphi 0, %s78
      %s80 = sphi 0, %s78
      %s81 = sphi 0, %s80
      %s95 = sphi 0, %s81
      %s99 = sphi 0, %s99
      %s101 = sphi 0, %s99
      %s102 = sphi 0, %s101
      %s116 = sphi 0, %s102
      %s122 = sphi 0, %s124
      %s125 = sphi 0, %s122
      %s126 = sphi 0, %s125
      %s142 = sphi 0, %s126
      %s148 = sphi 0, %s150
      %s151 = sphi 0, %s148
      %s152 = sphi 0, %s151
      %s168 = sphi 0, %s152
    $region4: #{basic_block_forward.4} parent=1 // loop_header_branch
      %26 = sbr.rel (%p24) target = $region8
    $region5: #{basic_block_forward.4} parent=1 // loop_body
      %s28 = ssub.s32 %s23, 1
      %s29 = ssub.s32 %s23, 2
      %s30 = sadd.s32 %s23, 1
      %s31 = ssub.s32 %s23, %s30
      %p32 = scmp.eq.s32.totalorder %s31, 0
      %s34 = sadd.s32 %s33, 1
      %s35 = scalar_select %p32, %s33, %s34
      %p38 = pneg %p32
      %p39 = scmp.eq.s32.totalorder %s23, 1
      %p40 = por %p38, %p39
      %p41 = scmp.ne.s32.totalorder %s33, %s36
      %p42 = scmp.eq.s32.totalorder %s23, 0
      %p43 = por %p41, %p42
      %p44 = scmp.ne.s32.totalorder %s33, %s36
      %p45 = scmp.eq.s32.totalorder %s28, 1
      %p46 = por %p44, %p45
      %p47 = scmp.ne.s32.totalorder %s36, %s37
      %p48 = scmp.eq.s32.totalorder %s28, 0
      %p49 = por %p47, %p48
      %p50 = scmp.ne.s32.totalorder %s36, %s37
      %p51 = scmp.eq.s32.totalorder %s29, 1
      %p52 = por %p50, %p51
      %p54 = scmp.ne.s32.totalorder %s37, %s53
      %p55 = scmp.eq.s32.totalorder %s29, 0
      %p56 = por %p54, %p55
      %s58 = sadd.s32 %s57, 1
      %p61 = scmp.eq.s32.totalorder %s23, 1
      %p62 = scmp.ne.s32.totalorder %s57, %s59
      %p63 = scmp.eq.s32.totalorder %s23, 0
      %p64 = por %p62, %p63
      %p65 = scmp.ne.s32.totalorder %s57, %s59
      %p66 = scmp.eq.s32.totalorder %s28, 1
      %p67 = por %p65, %p66
      %p68 = scmp.ne.s32.totalorder %s59, %s60
      %p69 = scmp.eq.s32.totalorder %s28, 0
      %p70 = por %p68, %p69
      %p71 = scmp.ne.s32.totalorder %s59, %s60
      %p72 = scmp.eq.s32.totalorder %s29, 1
      %p73 = por %p71, %p72
      %p75 = scmp.ne.s32.totalorder %s60, %s74
      %p76 = scmp.eq.s32.totalorder %s29, 0
      %p77 = por %p75, %p76
      %s79 = sadd.s32 %s78, 1
      %p82 = scmp.eq.s32.totalorder %s23, 1
      %p83 = scmp.ne.s32.totalorder %s78, %s80
      %p84 = scmp.eq.s32.totalorder %s23, 0
      %p85 = por %p83, %p84
      %p86 = scmp.ne.s32.totalorder %s78, %s80
      %p87 = scmp.eq.s32.totalorder %s28, 1
      %p88 = por %p86, %p87
      %p89 = scmp.ne.s32.totalorder %s80, %s81
      %p90 = scmp.eq.s32.totalorder %s28, 0
      %p91 = por %p89, %p90
      %p92 = scmp.ne.s32.totalorder %s80, %s81
      %p93 = scmp.eq.s32.totalorder %s29, 1
      %p94 = por %p92, %p93
      %p96 = scmp.ne.s32.totalorder %s81, %s95
      %p97 = scmp.eq.s32.totalorder %s29, 0
      %p98 = por %p96, %p97
      %s100 = sadd.s32 %s99, 1
      %p103 = scmp.eq.s32.totalorder %s23, 1
      %p104 = scmp.ne.s32.totalorder %s99, %s101
      %p105 = scmp.eq.s32.totalorder %s23, 0
      %p106 = por %p104, %p105
      %p107 = scmp.ne.s32.totalorder %s99, %s101
      %p108 = scmp.eq.s32.totalorder %s28, 1
      %p109 = por %p107, %p108
      %p110 = scmp.ne.s32.totalorder %s101, %s102
      %p111 = scmp.eq.s32.totalorder %s28, 0
      %p112 = por %p110, %p111
      %p113 = scmp.ne.s32.totalorder %s101, %s102
      %p114 = scmp.eq.s32.totalorder %s29, 1
      %p115 = por %p113, %p114
      %p117 = scmp.ne.s32.totalorder %s102, %s116
      %p118 = scmp.eq.s32.totalorder %s29, 0
      %p119 = por %p117, %p118
      %s120 = ssub.s32 %s23, %s30
      %p121 = scmp.eq.s32.totalorder %s120, 0
      %s123 = sadd.s32 %s122, 1
      %s124 = scalar_select %p121, %s122, %s123
      %p127 = pneg %p121
      %p128 = scmp.eq.s32.totalorder %s23, 1
      %p129 = por %p127, %p128
      %p130 = scmp.ne.s32.totalorder %s122, %s125
      %p131 = scmp.eq.s32.totalorder %s23, 0
      %p132 = por %p130, %p131
      %p133 = scmp.ne.s32.totalorder %s122, %s125
      %p134 = scmp.eq.s32.totalorder %s28, 1
      %p135 = por %p133, %p134
      %p136 = scmp.ne.s32.totalorder %s125, %s126
      %p137 = scmp.eq.s32.totalorder %s28, 0
      %p138 = por %p136, %p137
      %p139 = scmp.ne.s32.totalorder %s125, %s126
      %p140 = scmp.eq.s32.totalorder %s29, 1
      %p141 = por %p139, %p140
      %p143 = scmp.ne.s32.totalorder %s126, %s142
      %p144 = scmp.eq.s32.totalorder %s29, 0
      %p145 = por %p143, %p144
      %s146 = ssub.s32 %s23, %s30
      %p147 = scmp.eq.s32.totalorder %s146, 0
      %s149 = sadd.s32 %s148, 1
      %s150 = scalar_select %p147, %s148, %s149
      %p153 = pneg %p147
      %p154 = scmp.eq.s32.totalorder %s23, 1
      %p155 = por %p153, %p154
      %p156 = scmp.ne.s32.totalorder %s148, %s151
      %p157 = scmp.eq.s32.totalorder %s23, 0
      %p158 = por %p156, %p157
      %p159 = scmp.ne.s32.totalorder %s148, %s151
      %p160 = scmp.eq.s32.totalorder %s28, 1
      %p161 = por %p159, %p160
      %p162 = scmp.ne.s32.totalorder %s151, %s152
      %p163 = scmp.eq.s32.totalorder %s28, 0
      %p164 = por %p162, %p163
      %p165 = scmp.ne.s32.totalorder %s151, %s152
      %p166 = scmp.eq.s32.totalorder %s29, 1
      %p167 = por %p165, %p166
      %p169 = scmp.ne.s32.totalorder %s152, %s168
      %p170 = scmp.eq.s32.totalorder %s29, 0
      %p171 = por %p169, %p170
      %p172 = scmp.le.s32.totalorder 1, %s23
      %p173 = scmp.lt.s32.totalorder %s23, 3
      %p174 = pnand %p172, %p173
      %p175 = pneg %p174
      // Predicated region
      $region9: #{basic_block_forward.4} parent=5 // pred_check
        _
      $region10: #{basic_block_forward.4} parent=5 // pred_check_branch
        %177 = sbr.rel (%p174) target = $region12
      $region11: #{basic_block_forward.4} parent=5 // pred_region
        %s178 = ssub.s32 %s23, 1
        // Predicated region
        $region13: #{basic_block_forward.4} parent=11 // pred_check
          %p179 = pneg %p70
        $region14: #{basic_block_forward.4} parent=11 // pred_check_branch
          %181 = sbr.rel (%p179) target = $region16
        $region15: #{basic_block_forward.4} parent=11 // pred_region
          %s183 = ssub.s32 9216, 9216
          %184 = vsyncadd [#allocation6], %s183
          %s185 = sshll.u32 [#allocation5], 4
          %s186 = int_to_ptr.vmem [resolvable:$true] %s185
          %191 = dma.hbm_to_vmem [thread:$0]  %s1, 9216, %s186, [#allocation6], 192, 192, 12
        $region16: #{basic_block_forward.4} parent=11 // pred_fallthru
          _
        // Predicated region
        $region17: #{basic_block_forward.4} parent=11 // pred_check
          %p192 = pneg %p91
        $region18: #{basic_block_forward.4} parent=11 // pred_check_branch
          %194 = sbr.rel (%p192) target = $region20
        $region19: #{basic_block_forward.4} parent=11 // pred_region
          %s196 = ssub.s32 16, 16
          %197 = vsyncadd [#allocation6], %s196
          %s199 = sshll.u32 [#allocation7], 4
          %s200 = int_to_ptr.vmem [resolvable:$true] %s199
          %202 = dma.hbm_to_vmem [thread:$0]  %s2, 16, %s200, [#allocation6]
        $region20: #{basic_block_forward.4} parent=11 // pred_fallthru
          _
        // Predicated region
        $region21: #{basic_block_forward.4} parent=11 // pred_check
          %p203 = pneg %p112
        $region22: #{basic_block_forward.4} parent=11 // pred_check_branch
          %205 = sbr.rel (%p203) target = $region24
        $region23: #{basic_block_forward.4} parent=11 // pred_region
          %s207 = ssub.s32 16, 16
          %208 = vsyncadd [#allocation9], %s207
          %s210 = sshll.u32 [#allocation8], 4
          %s211 = int_to_ptr.vmem [resolvable:$true] %s210
          %213 = dma.hbm_to_vmem [thread:$0]  %s3, 16, %s211, [#allocation9]
        $region24: #{basic_block_forward.4} parent=11 // pred_fallthru
          _
      $region12: #{basic_block_forward.4} parent=5 // pred_fallthru
        _
      %p214 = scmp.lt.s32.totalorder %s23, 2
      // Predicated region
      $region25: #{basic_block_forward.4} parent=5 // pred_check
        %p215 = pneg %p214
      $region26: #{basic_block_forward.4} parent=5 // pred_check_branch
        %217 = sbr.rel (%p215) target = $region28
      $region27: #{basic_block_forward.4} parent=5 // pred_region
        // Predicated region
        $region29: #{basic_block_forward.4} parent=27 // pred_check
          %p218 = pneg %p43
        $region30: #{basic_block_forward.4} parent=27 // pred_check_branch
          %220 = sbr.rel (%p218) target = $region32
        $region31: #{basic_block_forward.4} parent=27 // pred_region
          %s221 = sand.u32 %s33, 1
          %s222 = scalar_lea.sflag [#allocation3], %s221
          %s223 = sand.u32 %s33, 1
          %s224 = smul.addr %s223, 128
          %s225 = scalar_lea.vmem [#allocation2], %s224
          %s227 = ssub.s32 2048, 2048
          %228 = vsyncadd %s222, %s227
          %s229 = smul.addr %s23, 32
          %s230 = smul.addr %s229, 64
          %s231 = scalar_lea.hbm %s0, %s230
          %s232 = sshll.u32 %s225, 4
          %s233 = int_to_ptr.vmem [resolvable:$true] %s232
          %238 = dma.hbm_to_vmem [thread:$0]  %s231, 2048, %s233, %s222, 64, 64, 4
        $region32: #{basic_block_forward.4} parent=27 // pred_fallthru
          _
      $region28: #{basic_block_forward.4} parent=5 // pred_fallthru
        _
      %p239 = scmp.le.s32.totalorder 1, %s23
      %p240 = scmp.lt.s32.totalorder %s23, 3
      %p241 = pnand %p239, %p240
      %p242 = pneg %p241
      // Predicated region
      $region33: #{basic_block_forward.4} parent=5 // pred_check
        _
      $region34: #{basic_block_forward.4} parent=5 // pred_check_branch
        %244 = sbr.rel (%p241) target = $region36
      $region35: #{basic_block_forward.4} parent=5 // pred_region
        %s245 = ssub.s32 %s23, 1
        %s246 = sand.u32 %s36, 1
        %s247 = scalar_lea.sflag [#allocation3], %s246
        %s248 = sand.u32 %s36, 1
        %s249 = smul.addr %s248, 128
        %s250 = scalar_lea.vmem [#allocation2], %s249
        // Predicated region
        $region37: #{basic_block_forward.4} parent=35 // pred_check
          %p251 = pneg %p49
        $region38: #{basic_block_forward.4} parent=35 // pred_check_branch
          %253 = sbr.rel (%p251) target = $region40
        $region39: #{basic_block_forward.4} parent=35 // pred_region
          %254 = dma.done %s247, 2048
        $region40: #{basic_block_forward.4} parent=35 // pred_fallthru
          _
        // Predicated region
        $region41: #{basic_block_forward.4} parent=35 // pred_check
          %p255 = pneg %p70
        $region42: #{basic_block_forward.4} parent=35 // pred_check_branch
          %257 = sbr.rel (%p255) target = $region44
        $region43: #{basic_block_forward.4} parent=35 // pred_region
          %258 = dma.done [#allocation6], 9216
        $region44: #{basic_block_forward.4} parent=35 // pred_fallthru
          _
        // Predicated region
        $region45: #{basic_block_forward.4} parent=35 // pred_check
          %p259 = pneg %p91
        $region46: #{basic_block_forward.4} parent=35 // pred_check_branch
          %261 = sbr.rel (%p259) target = $region48
        $region47: #{basic_block_forward.4} parent=35 // pred_region
          %262 = dma.done [#allocation6], 16
        $region48: #{basic_block_forward.4} parent=35 // pred_fallthru
          _
        // Predicated region
        $region49: #{basic_block_forward.4} parent=35 // pred_check
          %p263 = pneg %p112
        $region50: #{basic_block_forward.4} parent=35 // pred_check_branch
          %265 = sbr.rel (%p263) target = $region52
        $region51: #{basic_block_forward.4} parent=35 // pred_region
          %266 = dma.done [#allocation9], 16
        $region52: #{basic_block_forward.4} parent=35 // pred_fallthru
          _
        %s267 = sand.u32 %s36, 1
        %s268 = scalar_lea.sflag [#allocation3], %s267
        %s269 = sand.u32 %s36, 1
        %s270 = smul.addr %s269, 128
        %s271 = scalar_lea.vmem [#allocation2], %s270
        %p272 = pneg %p49
        %p273 = pneg %p46
        %p274 = pneg %p70
        %p275 = pneg %p67
        %p276 = pneg %p91
        %p277 = pneg %p88
        %p278 = pneg %p112
        %p279 = pneg %p109
        %p280 = pneg %p138
        %p281 = pneg %p135
        %s282 = sand.u32 %s125, 1
        %s283 = scalar_lea.sflag [#allocation4], %s282
        %s284 = sand.u32 %s125, 1
        %s285 = smul.addr %s284, 128
        %s286 = scalar_lea.vmem [#allocation10], %s285
        %p287 = pneg %p164
        %p288 = pneg %p161
        %s289 = sand.u32 %s151, 1
        %s290 = scalar_lea.sflag [#allocation12], %s289
        %s291 = sand.u32 %s151, 1
        %s292 = smul.addr %s291, 2
        %s293 = scalar_lea.vmem [#allocation11], %s292
        %v295 = vld [vmem:[%s250] sm:$0xf]
        %v296 = vld [vmem:[%s250 + $0x4] sm:$0xf]
        %v297 = vld [vmem:[%s250 + $0x8] sm:$0xf]
        %v298 = vld [vmem:[%s250 + $0xc] sm:$0xf]
        %v299 = vld [vmem:[%s250 + $0x10] sm:$0xf]
        %v300 = vld [vmem:[%s250 + $0x14] sm:$0xf]
        %v301 = vld [vmem:[%s250 + $0x18] sm:$0xf]
        %v302 = vld [vmem:[%s250 + $0x1c] sm:$0xf]
        %v303 = vld [vmem:[%s250 + $0x20] sm:$0xf]
        %v304 = vld [vmem:[%s250 + $0x24] sm:$0xf]
        %v305 = vld [vmem:[%s250 + $0x28] sm:$0xf]
        %v306 = vld [vmem:[%s250 + $0x2c] sm:$0xf]
        %v307 = vld [vmem:[%s250 + $0x30] sm:$0xf]
        %v308 = vld [vmem:[%s250 + $0x34] sm:$0xf]
        %v309 = vld [vmem:[%s250 + $0x38] sm:$0xf]
        %v310 = vld [vmem:[%s250 + $0x3c] sm:$0xf]
        %v311 = vld [vmem:[%s250 + $0x40] sm:$0xf]
        %v312 = vld [vmem:[%s250 + $0x44] sm:$0xf]
        %v313 = vld [vmem:[%s250 + $0x48] sm:$0xf]
        %v314 = vld [vmem:[%s250 + $0x4c] sm:$0xf]
        %v315 = vld [vmem:[%s250 + $0x50] sm:$0xf]
        %v316 = vld [vmem:[%s250 + $0x54] sm:$0xf]
        %v317 = vld [vmem:[%s250 + $0x58] sm:$0xf]
        %v318 = vld [vmem:[%s250 + $0x5c] sm:$0xf]
        %v319 = vld [vmem:[%s250 + $0x60] sm:$0xf]
        %v320 = vld [vmem:[%s250 + $0x64] sm:$0xf]
        %v321 = vld [vmem:[%s250 + $0x68] sm:$0xf]
        %v322 = vld [vmem:[%s250 + $0x6c] sm:$0xf]
        %v323 = vld [vmem:[%s250 + $0x70] sm:$0xf]
        %v324 = vld [vmem:[%s250 + $0x74] sm:$0xf]
        %v325 = vld [vmem:[%s250 + $0x78] sm:$0xf]
        %v326 = vld [vmem:[%s250 + $0x7c] sm:$0xf]
        %v327 = vunpack.c.l.bf16 %v295
        %v328 = vunpack.c.l.bf16 %v296
        %v329 = vunpack.c.l.bf16 %v297
        %v330 = vunpack.c.l.bf16 %v298
        %v331 = vunpack.c.l.bf16 %v299
        %v332 = vunpack.c.l.bf16 %v300
        %v333 = vunpack.c.l.bf16 %v301
        %v334 = vunpack.c.l.bf16 %v302
        %v335 = vunpack.c.l.bf16 %v303
        %v336 = vunpack.c.l.bf16 %v304
        %v337 = vunpack.c.l.bf16 %v305
        %v338 = vunpack.c.l.bf16 %v306
        %v339 = vunpack.c.l.bf16 %v307
        %v340 = vunpack.c.l.bf16 %v308
        %v341 = vunpack.c.l.bf16 %v309
        %v342 = vunpack.c.l.bf16 %v310
        %v343 = vunpack.c.l.bf16 %v311
        %v344 = vunpack.c.l.bf16 %v312
        %v345 = vunpack.c.l.bf16 %v313
        %v346 = vunpack.c.l.bf16 %v314
        %v347 = vunpack.c.l.bf16 %v315
        %v348 = vunpack.c.l.bf16 %v316
        %v349 = vunpack.c.l.bf16 %v317
        %v350 = vunpack.c.l.bf16 %v318
        %v351 = vunpack.c.l.bf16 %v319
        %v352 = vunpack.c.l.bf16 %v320
        %v353 = vunpack.c.l.bf16 %v321
        %v354 = vunpack.c.l.bf16 %v322
        %v355 = vunpack.c.l.bf16 %v323
        %v356 = vunpack.c.l.bf16 %v324
        %v357 = vunpack.c.l.bf16 %v325
        %v358 = vunpack.c.l.bf16 %v326
        %v359 = vld [vmem:[#allocation7] sm:$0x1]
        %v361 = vlaneseq
        %v362 = vshrl.u32 %v361, 7
        %v363 = vsub.s32 0, %v362
        %v364 = vrot.slane %v359, %v363
        %v366 = vmul.f32 %v327, %v364
        %v367 = vmul.f32 %v328, %v364
        %v368 = vmul.f32 %v329, %v364
        %v369 = vmul.f32 %v330, %v364
        %v370 = vmul.f32 %v331, %v364
        %v371 = vmul.f32 %v332, %v364
        %v372 = vmul.f32 %v333, %v364
        %v373 = vmul.f32 %v334, %v364
        %v374 = vmul.f32 %v335, %v364
        %v375 = vmul.f32 %v336, %v364
        %v376 = vmul.f32 %v337, %v364
        %v377 = vmul.f32 %v338, %v364
        %v378 = vmul.f32 %v339, %v364
        %v379 = vmul.f32 %v340, %v364
        %v380 = vmul.f32 %v341, %v364
        %v381 = vmul.f32 %v342, %v364
        %v382 = vmul.f32 %v343, %v364
        %v383 = vmul.f32 %v344, %v364
        %v384 = vmul.f32 %v345, %v364
        %v385 = vmul.f32 %v346, %v364
        %v386 = vmul.f32 %v347, %v364
        %v387 = vmul.f32 %v348, %v364
        %v388 = vmul.f32 %v349, %v364
        %v389 = vmul.f32 %v350, %v364
        %v390 = vmul.f32 %v351, %v364
        %v391 = vmul.f32 %v352, %v364
        %v392 = vmul.f32 %v353, %v364
        %v393 = vmul.f32 %v354, %v364
        %v394 = vmul.f32 %v355, %v364
        %v395 = vmul.f32 %v356, %v364
        %v396 = vmul.f32 %v357, %v364
        %v397 = vmul.f32 %v358, %v364
        %v398 = vld [vmem:[#allocation8] sm:$0x1]
        %v400 = vlaneseq
        %v401 = vshrl.u32 %v400, 7
        %v402 = vsub.s32 0, %v401
        %v403 = vrot.slane %v398, %v402
        %v405 = vadd.f32 %v366, %v403
        %v406 = vadd.f32 %v367, %v403
        %v407 = vadd.f32 %v368, %v403
        %v408 = vadd.f32 %v369, %v403
        %v409 = vadd.f32 %v370, %v403
        %v410 = vadd.f32 %v371, %v403
        %v411 = vadd.f32 %v372, %v403
        %v412 = vadd.f32 %v373, %v403
        %v413 = vadd.f32 %v374, %v403
        %v414 = vadd.f32 %v375, %v403
        %v415 = vadd.f32 %v376, %v403
        %v416 = vadd.f32 %v377, %v403
        %v417 = vadd.f32 %v378, %v403
        %v418 = vadd.f32 %v379, %v403
        %v419 = vadd.f32 %v380, %v403
        %v420 = vadd.f32 %v381, %v403
        %v421 = vadd.f32 %v382, %v403
        %v422 = vadd.f32 %v383, %v403
        %v423 = vadd.f32 %v384, %v403
        %v424 = vadd.f32 %v385, %v403
        %v425 = vadd.f32 %v386, %v403
        %v426 = vadd.f32 %v387, %v403
        %v427 = vadd.f32 %v388, %v403
        %v428 = vadd.f32 %v389, %v403
        %v429 = vadd.f32 %v390, %v403
        %v430 = vadd.f32 %v391, %v403
        %v431 = vadd.f32 %v392, %v403
        %v432 = vadd.f32 %v393, %v403
        %v433 = vadd.f32 %v394, %v403
        %v434 = vadd.f32 %v395, %v403
        %v435 = vadd.f32 %v396, %v403
        %v436 = vadd.f32 %v397, %v403
        %v437 = vmax.f32 %v405, 0.0
        %v438 = vmax.f32 %v406, 0.0
        %v439 = vmax.f32 %v407, 0.0
        %v440 = vmax.f32 %v408, 0.0
        %v441 = vmax.f32 %v409, 0.0
        %v442 = vmax.f32 %v410, 0.0
        %v443 = vmax.f32 %v411, 0.0
        %v444 = vmax.f32 %v412, 0.0
        %v445 = vmax.f32 %v413, 0.0
        %v446 = vmax.f32 %v414, 0.0
        %v447 = vmax.f32 %v415, 0.0
        %v448 = vmax.f32 %v416, 0.0
        %v449 = vmax.f32 %v417, 0.0
        %v450 = vmax.f32 %v418, 0.0
        %v451 = vmax.f32 %v419, 0.0
        %v452 = vmax.f32 %v420, 0.0
        %v453 = vmax.f32 %v421, 0.0
        %v454 = vmax.f32 %v422, 0.0
        %v455 = vmax.f32 %v423, 0.0
        %v456 = vmax.f32 %v424, 0.0
        %v457 = vmax.f32 %v425, 0.0
        %v458 = vmax.f32 %v426, 0.0
        %v459 = vmax.f32 %v427, 0.0
        %v460 = vmax.f32 %v428, 0.0
        %v461 = vmax.f32 %v429, 0.0
        %v462 = vmax.f32 %v430, 0.0
        %v463 = vmax.f32 %v431, 0.0
        %v464 = vmax.f32 %v432, 0.0
        %v465 = vmax.f32 %v433, 0.0
        %v466 = vmax.f32 %v434, 0.0
        %v467 = vmax.f32 %v435, 0.0
        %v468 = vmax.f32 %v436, 0.0
        %v469 = vpack.c.bf16 %v438, %v437
        %v470 = vpack.c.bf16 %v440, %v439
        %v471 = vpack.c.bf16 %v442, %v441
        %v472 = vpack.c.bf16 %v444, %v443
        %v473 = vpack.c.bf16 %v446, %v445
        %v474 = vpack.c.bf16 %v448, %v447
        %v475 = vpack.c.bf16 %v450, %v449
        %v476 = vpack.c.bf16 %v452, %v451
        %v477 = vpack.c.bf16 %v454, %v453
        %v478 = vpack.c.bf16 %v456, %v455
        %v479 = vpack.c.bf16 %v458, %v457
        %v480 = vpack.c.bf16 %v460, %v459
        %v481 = vpack.c.bf16 %v462, %v461
        %v482 = vpack.c.bf16 %v464, %v463
        %v483 = vpack.c.bf16 %v466, %v465
        %v484 = vpack.c.bf16 %v468, %v467
        %v486 = vshrl.u32 %v469, 16
        %v488 = vrot.slane %v486, 7
        %v489 = vshll.u32 %v469, 16
        %v491 = vor.u32 %v488, %v489
        %v493 = vshrl.u32 %v470, 16
        %v495 = vrot.slane %v493, 7
        %v496 = vshll.u32 %v470, 16
        %v498 = vor.u32 %v495, %v496
        %v500 = vshrl.u32 %v471, 16
        %v502 = vrot.slane %v500, 7
        %v503 = vshll.u32 %v471, 16
        %v505 = vor.u32 %v502, %v503
        %v507 = vshrl.u32 %v472, 16
        %v509 = vrot.slane %v507, 7
        %v510 = vshll.u32 %v472, 16
        %v512 = vor.u32 %v509, %v510
        %v514 = vshrl.u32 %v473, 16
        %v516 = vrot.slane %v514, 7
        %v517 = vshll.u32 %v473, 16
        %v519 = vor.u32 %v516, %v517
        %v521 = vshrl.u32 %v474, 16
        %v523 = vrot.slane %v521, 7
        %v524 = vshll.u32 %v474, 16
        %v526 = vor.u32 %v523, %v524
        %v528 = vshrl.u32 %v475, 16
        %v530 = vrot.slane %v528, 7
        %v531 = vshll.u32 %v475, 16
        %v533 = vor.u32 %v530, %v531
        %v535 = vshrl.u32 %v476, 16
        %v537 = vrot.slane %v535, 7
        %v538 = vshll.u32 %v476, 16
        %v540 = vor.u32 %v537, %v538
        %v542 = vshrl.u32 %v477, 16
        %v544 = vrot.slane %v542, 7
        %v545 = vshll.u32 %v477, 16
        %v547 = vor.u32 %v544, %v545
        %v549 = vshrl.u32 %v478, 16
        %v551 = vrot.slane %v549, 7
        %v552 = vshll.u32 %v478, 16
        %v554 = vor.u32 %v551, %v552
        %v556 = vshrl.u32 %v479, 16
        %v558 = vrot.slane %v556, 7
        %v559 = vshll.u32 %v479, 16
        %v561 = vor.u32 %v558, %v559
        %v563 = vshrl.u32 %v480, 16
        %v565 = vrot.slane %v563, 7
        %v566 = vshll.u32 %v480, 16
        %v568 = vor.u32 %v565, %v566
        %v570 = vshrl.u32 %v481, 16
        %v572 = vrot.slane %v570, 7
        %v573 = vshll.u32 %v481, 16
        %v575 = vor.u32 %v572, %v573
        %v577 = vshrl.u32 %v482, 16
        %v579 = vrot.slane %v577, 7
        %v580 = vshll.u32 %v482, 16
        %v582 = vor.u32 %v579, %v580
        %v584 = vshrl.u32 %v483, 16
        %v586 = vrot.slane %v584, 7
        %v587 = vshll.u32 %v483, 16
        %v589 = vor.u32 %v586, %v587
        %v591 = vshrl.u32 %v484, 16
        %v593 = vrot.slane %v591, 7
        %v594 = vshll.u32 %v484, 16
        %v596 = vor.u32 %v593, %v594
        %vm613 = vcmask 1040384
        %vm614 = vsmask.f32 256
        %vm615 = vmand %vm613, %vm614
        %v616 = vsel %vm615, 0, %v491
        %v617 = vsel %vm615, 0, %v498
        %v618 = vsel %vm615, 0, %v505
        %v619 = vsel %vm615, 0, %v512
        %v620 = vsel %vm615, 0, %v519
        %v621 = vsel %vm615, 0, %v526
        %v622 = vsel %vm615, 0, %v533
        %v623 = vsel %vm615, 0, %v540
        %v624 = vsel %vm615, 0, %v547
        %v625 = vsel %vm615, 0, %v554
        %v626 = vsel %vm615, 0, %v561
        %v627 = vsel %vm615, 0, %v568
        %v628 = vsel %vm615, 0, %v575
        %v629 = vsel %vm615, 0, %v582
        %v630 = vsel %vm615, 0, %v589
        %v631 = vsel %vm615, 0, %v596
        %v632 = vrot.slane %v489, 1
        %v633 = vor.u32 %v486, %v632
        %v634 = vrot.slane %v496, 1
        %v635 = vor.u32 %v493, %v634
        %v636 = vrot.slane %v503, 1
        %v637 = vor.u32 %v500, %v636
        %v638 = vrot.slane %v510, 1
        %v639 = vor.u32 %v507, %v638
        %v640 = vrot.slane %v517, 1
        %v641 = vor.u32 %v514, %v640
        %v642 = vrot.slane %v524, 1
        %v643 = vor.u32 %v521, %v642
        %v644 = vrot.slane %v531, 1
        %v645 = vor.u32 %v528, %v644
        %v646 = vrot.slane %v538, 1
        %v647 = vor.u32 %v535, %v646
        %v648 = vrot.slane %v545, 1
        %v649 = vor.u32 %v542, %v648
        %v650 = vrot.slane %v552, 1
        %v651 = vor.u32 %v549, %v650
        %v652 = vrot.slane %v559, 1
        %v653 = vor.u32 %v556, %v652
        %v654 = vrot.slane %v566, 1
        %v655 = vor.u32 %v563, %v654
        %v656 = vrot.slane %v573, 1
        %v657 = vor.u32 %v570, %v656
        %v658 = vrot.slane %v580, 1
        %v659 = vor.u32 %v577, %v658
        %v660 = vrot.slane %v587, 1
        %v661 = vor.u32 %v584, %v660
        %v662 = vrot.slane %v594, 1
        %v663 = vor.u32 %v591, %v662
        %vm680 = vcmask 1047552
        %vm681 = vsmask.f32 7424
        %vm682 = vmand %vm680, %vm681
        %v683 = vsel %vm682, %v633, 0
        %v684 = vsel %vm682, %v635, 0
        %v685 = vsel %vm682, %v637, 0
        %v686 = vsel %vm682, %v639, 0
        %v687 = vsel %vm682, %v641, 0
        %v688 = vsel %vm682, %v643, 0
        %v689 = vsel %vm682, %v645, 0
        %v690 = vsel %vm682, %v647, 0
        %v691 = vsel %vm682, %v649, 0
        %v692 = vsel %vm682, %v651, 0
        %v693 = vsel %vm682, %v653, 0
        %v694 = vsel %vm682, %v655, 0
        %v695 = vsel %vm682, %v657, 0
        %v696 = vsel %vm682, %v659, 0
        %v697 = vsel %vm682, %v661, 0
        %v698 = vsel %vm682, %v663, 0
        %v699 = vld [vmem:[#allocation5] sm:$0xff]
        %v700 = vld [vmem:[#allocation5 + $0x8] sm:$0xf]
        %v701 = vld [vmem:[#allocation5 + $0xc] sm:$0xff]
        %v702 = vld [vmem:[#allocation5 + $0x14] sm:$0xf]
        %v703 = vld [vmem:[#allocation5 + $0x18] sm:$0xff]
        %v704 = vld [vmem:[#allocation5 + $0x20] sm:$0xf]
        %v705 = vld [vmem:[#allocation5 + $0x24] sm:$0xff]
        %v706 = vld [vmem:[#allocation5 + $0x2c] sm:$0xf]
        %v707 = vld [vmem:[#allocation5 + $0x30] sm:$0xff]
        %v708 = vld [vmem:[#allocation5 + $0x38] sm:$0xf]
        %v709 = vld [vmem:[#allocation5 + $0x3c] sm:$0xff]
        %v710 = vld [vmem:[#allocation5 + $0x44] sm:$0xf]
        %v711 = vld [vmem:[#allocation5 + $0x48] sm:$0xff]
        %v712 = vld [vmem:[#allocation5 + $0x50] sm:$0xf]
        %v713 = vld [vmem:[#allocation5 + $0x54] sm:$0xff]
        %v714 = vld [vmem:[#allocation5 + $0x5c] sm:$0xf]
        %v715 = vld [vmem:[#allocation5 + $0x60] sm:$0xff]
        %v716 = vld [vmem:[#allocation5 + $0x68] sm:$0xf]
        %v717 = vld [vmem:[#allocation5 + $0x6c] sm:$0xff]
        %v718 = vld [vmem:[#allocation5 + $0x74] sm:$0xf]
        %v719 = vld [vmem:[#allocation5 + $0x78] sm:$0xff]
        %v720 = vld [vmem:[#allocation5 + $0x80] sm:$0xf]
        %v721 = vld [vmem:[#allocation5 + $0x84] sm:$0xff]
        %v722 = vld [vmem:[#allocation5 + $0x8c] sm:$0xf]
        %v723 = vld [vmem:[#allocation5 + $0x90] sm:$0xff]
        %v724 = vld [vmem:[#allocation5 + $0x98] sm:$0xf]
        %v725 = vld [vmem:[#allocation5 + $0x9c] sm:$0xff]
        %v726 = vld [vmem:[#allocation5 + $0xa4] sm:$0xf]
        %v727 = vld [vmem:[#allocation5 + $0xa8] sm:$0xff]
        %v728 = vld [vmem:[#allocation5 + $0xb0] sm:$0xf]
        %v729 = vld [vmem:[#allocation5 + $0xb4] sm:$0xff]
        %v730 = vld [vmem:[#allocation5 + $0xbc] sm:$0xf]
        %v731 = vld [vmem:[#allocation5 + $0xc0] sm:$0xff]
        %v732 = vld [vmem:[#allocation5 + $0xc8] sm:$0xf]
        %v733 = vld [vmem:[#allocation5 + $0xcc] sm:$0xff]
        %v734 = vld [vmem:[#allocation5 + $0xd4] sm:$0xf]
        %v735 = vld [vmem:[#allocation5 + $0xd8] sm:$0xff]
        %v736 = vld [vmem:[#allocation5 + $0xe0] sm:$0xf]
        %v737 = vld [vmem:[#allocation5 + $0xe4] sm:$0xff]
        %v738 = vld [vmem:[#allocation5 + $0xec] sm:$0xf]
        %v739 = vld [vmem:[#allocation5 + $0xf0] sm:$0xff]
        %v740 = vld [vmem:[#allocation5 + $0xf8] sm:$0xf]
        %v741 = vld [vmem:[#allocation5 + $0xfc] sm:$0xff]
        %v742 = vld [vmem:[#allocation5 + $0x104] sm:$0xf]
        %v743 = vld [vmem:[#allocation5 + $0x108] sm:$0xff]
        %v744 = vld [vmem:[#allocation5 + $0x110] sm:$0xf]
        %v745 = vld [vmem:[#allocation5 + $0x114] sm:$0xff]
        %v746 = vld [vmem:[#allocation5 + $0x11c] sm:$0xf]
        %v747 = vld [vmem:[#allocation5 + $0x120] sm:$0xff]
        %v748 = vld [vmem:[#allocation5 + $0x128] sm:$0xf]
        %v749 = vld [vmem:[#allocation5 + $0x12c] sm:$0xff]
        %v750 = vld [vmem:[#allocation5 + $0x134] sm:$0xf]
        %v751 = vld [vmem:[#allocation5 + $0x138] sm:$0xff]
        %v752 = vld [vmem:[#allocation5 + $0x140] sm:$0xf]
        %v753 = vld [vmem:[#allocation5 + $0x144] sm:$0xff]
        %v754 = vld [vmem:[#allocation5 + $0x14c] sm:$0xf]
        %v755 = vld [vmem:[#allocation5 + $0x150] sm:$0xff]
        %v756 = vld [vmem:[#allocation5 + $0x158] sm:$0xf]
        %v757 = vld [vmem:[#allocation5 + $0x15c] sm:$0xff]
        %v758 = vld [vmem:[#allocation5 + $0x164] sm:$0xf]
        %v759 = vld [vmem:[#allocation5 + $0x168] sm:$0xff]
        %v760 = vld [vmem:[#allocation5 + $0x170] sm:$0xf]
        %v761 = vld [vmem:[#allocation5 + $0x174] sm:$0xff]
        %v762 = vld [vmem:[#allocation5 + $0x17c] sm:$0xf]
        %v763 = vld [vmem:[#allocation5 + $0x180] sm:$0xff]
        %v764 = vld [vmem:[#allocation5 + $0x188] sm:$0xf]
        %v765 = vld [vmem:[#allocation5 + $0x18c] sm:$0xff]
        %v766 = vld [vmem:[#allocation5 + $0x194] sm:$0xf]
        %v767 = vld [vmem:[#allocation5 + $0x198] sm:$0xff]
        %v768 = vld [vmem:[#allocation5 + $0x1a0] sm:$0xf]
        %v769 = vld [vmem:[#allocation5 + $0x1a4] sm:$0xff]
        %v770 = vld [vmem:[#allocation5 + $0x1ac] sm:$0xf]
        %v771 = vld [vmem:[#allocation5 + $0x1b0] sm:$0xff]
        %v772 = vld [vmem:[#allocation5 + $0x1b8] sm:$0xf]
        %v773 = vld [vmem:[#allocation5 + $0x1bc] sm:$0xff]
        %v774 = vld [vmem:[#allocation5 + $0x1c4] sm:$0xf]
        %v775 = vld [vmem:[#allocation5 + $0x1c8] sm:$0xff]
        %v776 = vld [vmem:[#allocation5 + $0x1d0] sm:$0xf]
        %v777 = vld [vmem:[#allocation5 + $0x1d4] sm:$0xff]
        %v778 = vld [vmem:[#allocation5 + $0x1dc] sm:$0xf]
        %v779 = vld [vmem:[#allocation5 + $0x1e0] sm:$0xff]
        %v780 = vld [vmem:[#allocation5 + $0x1e8] sm:$0xf]
        %v781 = vld [vmem:[#allocation5 + $0x1ec] sm:$0xff]
        %v782 = vld [vmem:[#allocation5 + $0x1f4] sm:$0xf]
        %v783 = vld [vmem:[#allocation5 + $0x1f8] sm:$0xff]
        %v784 = vld [vmem:[#allocation5 + $0x200] sm:$0xf]
        %v785 = vld [vmem:[#allocation5 + $0x204] sm:$0xff]
        %v786 = vld [vmem:[#allocation5 + $0x20c] sm:$0xf]
        %v787 = vld [vmem:[#allocation5 + $0x210] sm:$0xff]
        %v788 = vld [vmem:[#allocation5 + $0x218] sm:$0xf]
        %v789 = vld [vmem:[#allocation5 + $0x21c] sm:$0xff]
        %v790 = vld [vmem:[#allocation5 + $0x224] sm:$0xf]
        %v791 = vld [vmem:[#allocation5 + $0x228] sm:$0xff]
        %v792 = vld [vmem:[#allocation5 + $0x230] sm:$0xf]
        %v793 = vld [vmem:[#allocation5 + $0x234] sm:$0xff]
        %v794 = vld [vmem:[#allocation5 + $0x23c] sm:$0xf]
        %v891 = vunpack.c.l.b16 %v699
        %v892 = vunpack.c.h.b16 %v699
        %v893 = vunpack.c.l.b16 %v700
        %v894 = vunpack.c.l.b16 %v701
        %v895 = vunpack.c.h.b16 %v701
        %v896 = vunpack.c.l.b16 %v702
        %v897 = vunpack.c.l.b16 %v703
        %v898 = vunpack.c.h.b16 %v703
        %v899 = vunpack.c.l.b16 %v704
        %v900 = vunpack.c.l.b16 %v705
        %v901 = vunpack.c.h.b16 %v705
        %v902 = vunpack.c.l.b16 %v706
        %v903 = vunpack.c.l.b16 %v707
        %v904 = vunpack.c.h.b16 %v707
        %v905 = vunpack.c.l.b16 %v708
        %v906 = vunpack.c.l.b16 %v709
        %v907 = vunpack.c.h.b16 %v709
        %v908 = vunpack.c.l.b16 %v710
        %v909 = vunpack.c.l.b16 %v711
        %v910 = vunpack.c.h.b16 %v711
        %v911 = vunpack.c.l.b16 %v712
        %v912 = vunpack.c.l.b16 %v713
        %v913 = vunpack.c.h.b16 %v713
        %v914 = vunpack.c.l.b16 %v714
        %v915 = vunpack.c.l.b16 %v715
        %v916 = vunpack.c.h.b16 %v715
        %v917 = vunpack.c.l.b16 %v716
        %v918 = vunpack.c.l.b16 %v717
        %v919 = vunpack.c.h.b16 %v717
        %v920 = vunpack.c.l.b16 %v718
        %v921 = vunpack.c.l.b16 %v719
        %v922 = vunpack.c.h.b16 %v719
        %v923 = vunpack.c.l.b16 %v720
        %v924 = vunpack.c.l.b16 %v721
        %v925 = vunpack.c.h.b16 %v721
        %v926 = vunpack.c.l.b16 %v722
        %v927 = vunpack.c.l.b16 %v723
        %v928 = vunpack.c.h.b16 %v723
        %v929 = vunpack.c.l.b16 %v724
        %v930 = vunpack.c.l.b16 %v725
        %v931 = vunpack.c.h.b16 %v725
        %v932 = vunpack.c.l.b16 %v726
        %v933 = vunpack.c.l.b16 %v727
        %v934 = vunpack.c.h.b16 %v727
        %v935 = vunpack.c.l.b16 %v728
        %v936 = vunpack.c.l.b16 %v729
        %v937 = vunpack.c.h.b16 %v729
        %v938 = vunpack.c.l.b16 %v730
        %v939 = vunpack.c.l.b16 %v731
        %v940 = vunpack.c.h.b16 %v731
        %v941 = vunpack.c.l.b16 %v732
        %v942 = vunpack.c.l.b16 %v733
        %v943 = vunpack.c.h.b16 %v733
        %v944 = vunpack.c.l.b16 %v734
        %v945 = vunpack.c.l.b16 %v735
        %v946 = vunpack.c.h.b16 %v735
        %v947 = vunpack.c.l.b16 %v736
        %v948 = vunpack.c.l.b16 %v737
        %v949 = vunpack.c.h.b16 %v737
        %v950 = vunpack.c.l.b16 %v738
        %v951 = vunpack.c.l.b16 %v739
        %v952 = vunpack.c.h.b16 %v739
        %v953 = vunpack.c.l.b16 %v740
        %v954 = vunpack.c.l.b16 %v741
        %v955 = vunpack.c.h.b16 %v741
        %v956 = vunpack.c.l.b16 %v742
        %v957 = vunpack.c.l.b16 %v743
        %v958 = vunpack.c.h.b16 %v743
        %v959 = vunpack.c.l.b16 %v744
        %v960 = vunpack.c.l.b16 %v745
        %v961 = vunpack.c.h.b16 %v745
        %v962 = vunpack.c.l.b16 %v746
        %v963 = vunpack.c.l.b16 %v747
        %v964 = vunpack.c.h.b16 %v747
        %v965 = vunpack.c.l.b16 %v748
        %v966 = vunpack.c.l.b16 %v749
        %v967 = vunpack.c.h.b16 %v749
        %v968 = vunpack.c.l.b16 %v750
        %v969 = vunpack.c.l.b16 %v751
        %v970 = vunpack.c.h.b16 %v751
        %v971 = vunpack.c.l.b16 %v752
        %v972 = vunpack.c.l.b16 %v753
        %v973 = vunpack.c.h.b16 %v753
        %v974 = vunpack.c.l.b16 %v754
        %v975 = vunpack.c.l.b16 %v755
        %v976 = vunpack.c.h.b16 %v755
        %v977 = vunpack.c.l.b16 %v756
        %v978 = vunpack.c.l.b16 %v757
        %v979 = vunpack.c.h.b16 %v757
        %v980 = vunpack.c.l.b16 %v758
        %v981 = vunpack.c.l.b16 %v759
        %v982 = vunpack.c.h.b16 %v759
        %v983 = vunpack.c.l.b16 %v760
        %v984 = vunpack.c.l.b16 %v761
        %v985 = vunpack.c.h.b16 %v761
        %v986 = vunpack.c.l.b16 %v762
        %v987 = vunpack.c.l.b16 %v763
        %v988 = vunpack.c.h.b16 %v763
        %v989 = vunpack.c.l.b16 %v764
        %v990 = vunpack.c.l.b16 %v765
        %v991 = vunpack.c.h.b16 %v765
        %v992 = vunpack.c.l.b16 %v766
        %v993 = vunpack.c.l.b16 %v767
        %v994 = vunpack.c.h.b16 %v767
        %v995 = vunpack.c.l.b16 %v768
        %v996 = vunpack.c.l.b16 %v769
        %v997 = vunpack.c.h.b16 %v769
        %v998 = vunpack.c.l.b16 %v770
        %v999 = vunpack.c.l.b16 %v771
        %v1000 = vunpack.c.h.b16 %v771
        %v1001 = vunpack.c.l.b16 %v772
        %v1002 = vunpack.c.l.b16 %v773
        %v1003 = vunpack.c.h.b16 %v773
        %v1004 = vunpack.c.l.b16 %v774
        %v1005 = vunpack.c.l.b16 %v775
        %v1006 = vunpack.c.h.b16 %v775
        %v1007 = vunpack.c.l.b16 %v776
        %v1008 = vunpack.c.l.b16 %v777
        %v1009 = vunpack.c.h.b16 %v777
        %v1010 = vunpack.c.l.b16 %v778
        %v1011 = vunpack.c.l.b16 %v779
        %v1012 = vunpack.c.h.b16 %v779
        %v1013 = vunpack.c.l.b16 %v780
        %v1014 = vunpack.c.l.b16 %v781
        %v1015 = vunpack.c.h.b16 %v781
        %v1016 = vunpack.c.l.b16 %v782
        %v1017 = vunpack.c.l.b16 %v783
        %v1018 = vunpack.c.h.b16 %v783
        %v1019 = vunpack.c.l.b16 %v784
        %v1020 = vunpack.c.l.b16 %v785
        %v1021 = vunpack.c.h.b16 %v785
        %v1022 = vunpack.c.l.b16 %v786
        %v1023 = vunpack.c.l.b16 %v787
        %v1024 = vunpack.c.h.b16 %v787
        %v1025 = vunpack.c.l.b16 %v788
        %v1026 = vunpack.c.l.b16 %v789
        %v1027 = vunpack.c.h.b16 %v789
        %v1028 = vunpack.c.l.b16 %v790
        %v1029 = vunpack.c.l.b16 %v791
        %v1030 = vunpack.c.h.b16 %v791
        %v1031 = vunpack.c.l.b16 %v792
        %v1032 = vunpack.c.l.b16 %v793
        %v1033 = vunpack.c.h.b16 %v793
        %v1034 = vunpack.c.l.b16 %v794
        %v1035 = vpack.c.b16 %v894, %v891
        %v1036 = vpack.c.b16 %v895, %v892
        %v1037 = vpack.c.b16 %v896, %v893
        %v1038 = vpack.c.b16 %v900, %v897
        %v1039 = vpack.c.b16 %v901, %v898
        %v1040 = vpack.c.b16 %v902, %v899
        %v1041 = vpack.c.b16 %v906, %v903
        %v1042 = vpack.c.b16 %v907, %v904
        %v1043 = vpack.c.b16 %v908, %v905
        %v1044 = vpack.c.b16 %v912, %v909
        %v1045 = vpack.c.b16 %v913, %v910
        %v1046 = vpack.c.b16 %v914, %v911
        %v1047 = vpack.c.b16 %v918, %v915
        %v1048 = vpack.c.b16 %v919, %v916
        %v1049 = vpack.c.b16 %v920, %v917
        %v1050 = vpack.c.b16 %v924, %v921
        %v1051 = vpack.c.b16 %v925, %v922
        %v1052 = vpack.c.b16 %v926, %v923
        %v1053 = vpack.c.b16 %v930, %v927
        %v1054 = vpack.c.b16 %v931, %v928
        %v1055 = vpack.c.b16 %v932, %v929
        %v1056 = vpack.c.b16 %v936, %v933
        %v1057 = vpack.c.b16 %v937, %v934
        %v1058 = vpack.c.b16 %v938, %v935
        %v1059 = vpack.c.b16 %v942, %v939
        %v1060 = vpack.c.b16 %v943, %v940
        %v1061 = vpack.c.b16 %v944, %v941
        %v1062 = vpack.c.b16 %v948, %v945
        %v1063 = vpack.c.b16 %v949, %v946
        %v1064 = vpack.c.b16 %v950, %v947
        %v1065 = vpack.c.b16 %v954, %v951
        %v1066 = vpack.c.b16 %v955, %v952
        %v1067 = vpack.c.b16 %v956, %v953
        %v1068 = vpack.c.b16 %v960, %v957
        %v1069 = vpack.c.b16 %v961, %v958
        %v1070 = vpack.c.b16 %v962, %v959
        %v1071 = vpack.c.b16 %v966, %v963
        %v1072 = vpack.c.b16 %v967, %v964
        %v1073 = vpack.c.b16 %v968, %v965
        %v1074 = vpack.c.b16 %v972, %v969
        %v1075 = vpack.c.b16 %v973, %v970
        %v1076 = vpack.c.b16 %v974, %v971
        %v1077 = vpack.c.b16 %v978, %v975
        %v1078 = vpack.c.b16 %v979, %v976
        %v1079 = vpack.c.b16 %v980, %v977
        %v1080 = vpack.c.b16 %v984, %v981
        %v1081 = vpack.c.b16 %v985, %v982
        %v1082 = vpack.c.b16 %v986, %v983
        %v1083 = vpack.c.b16 %v990, %v987
        %v1084 = vpack.c.b16 %v991, %v988
        %v1085 = vpack.c.b16 %v992, %v989
        %v1086 = vpack.c.b16 %v996, %v993
        %v1087 = vpack.c.b16 %v997, %v994
        %v1088 = vpack.c.b16 %v998, %v995
        %v1089 = vpack.c.b16 %v1002, %v999
        %v1090 = vpack.c.b16 %v1003, %v1000
        %v1091 = vpack.c.b16 %v1004, %v1001
        %v1092 = vpack.c.b16 %v1008, %v1005
        %v1093 = vpack.c.b16 %v1009, %v1006
        %v1094 = vpack.c.b16 %v1010, %v1007
        %v1095 = vpack.c.b16 %v1014, %v1011
        %v1096 = vpack.c.b16 %v1015, %v1012
        %v1097 = vpack.c.b16 %v1016, %v1013
        %v1098 = vpack.c.b16 %v1020, %v1017
        %v1099 = vpack.c.b16 %v1021, %v1018
        %v1100 = vpack.c.b16 %v1022, %v1019
        %v1101 = vpack.c.b16 %v1026, %v1023
        %v1102 = vpack.c.b16 %v1027, %v1024
        %v1103 = vpack.c.b16 %v1028, %v1025
        %v1104 = vpack.c.b16 %v1032, %v1029
        %v1105 = vpack.c.b16 %v1033, %v1030
        %v1106 = vpack.c.b16 %v1034, %v1031
        %1179 = vmatprep.subr.bf16.mxu0 %v1036
        %1180 = vmatpush1.bf16.msra.mxu0 %v1035
        %1181 = vmatprep.subr.bf16.mxu0 %v1039
        %1182 = vmatpush1.bf16.msra.mxu0 %v1038
        %1183 = vmatprep.subr.bf16.mxu0 %v1042
        %1184 = vmatpush1.bf16.msra.mxu0 %v1041
        %1185 = vmatprep.subr.bf16.mxu0 %v1045
        %1186 = vmatpush1.bf16.msra.mxu0 %v1044
        %1187 = vmatprep.subr.bf16.mxu0 %v1048
        %1188 = vmatpush1.bf16.msra.mxu0 %v1047
        %1189 = vmatprep.subr.bf16.mxu0 %v1051
        %1190 = vmatpush1.bf16.msra.mxu0 %v1050
        %1191 = vmatprep.subr.bf16.mxu0 %v1054
        %1192 = vmatpush1.bf16.msra.mxu0 %v1053
        %1193 = vmatprep.subr.bf16.mxu0 %v1057
        %1194 = vmatpush1.bf16.msra.mxu0 %v1056
        %1195 = vmatprep.subr.bf16.mxu0 %v1060
        %1196 = vmatpush1.bf16.msra.mxu0 %v1059
        %1197 = vmatprep.subr.bf16.mxu0 %v1063
        %1198 = vmatpush1.bf16.msra.mxu0 %v1062
        %1199 = vmatprep.subr.bf16.mxu0 %v1066
        %1200 = vmatpush1.bf16.msra.mxu0 %v1065
        %1201 = vmatprep.subr.bf16.mxu0 %v1069
        %1202 = vmatpush1.bf16.msra.mxu0 %v1068
        %1203 = vmatprep.subr.bf16.mxu0 %v1072
        %1204 = vmatpush1.bf16.msra.mxu0 %v1071
        %1205 = vmatprep.subr.bf16.mxu0 %v1075
        %1206 = vmatpush1.bf16.msra.mxu0 %v1074
        %1207 = vmatprep.subr.bf16.mxu0 %v1078
        %1208 = vmatpush1.bf16.msra.mxu0 %v1077
        %1209 = vmatprep.subr.bf16.mxu0 %v1081
        %1210 = vmatpush1.bf16.msra.mxu0 %v1080
        %1211 = vmatprep.mubr.bf16.mxu0 %v469
        %1212 = vmatmul.mubr.bf16.gmra.mrb[0].mxu0 %v616
        %v1213 = vpop.f32.mrb[0].mxu0
        %v1214 = vadd.f32 0.0, %v1213
        %v1215 = vpop.f32.mrb[0].mxu0
        %v1216 = vadd.f32 0.0, %v1215
        %v1217 = vpop.f32.mrb[0].mxu0
        %v1218 = vadd.f32 0.0, %v1217
        %v1219 = vpop.f32.mrb[0].mxu0
        %v1220 = vadd.f32 0.0, %v1219
        %1221 = vmatprep.mubr.bf16.mxu0 %v470
        %1222 = vmatmul.mubr.bf16.gmra.mrb[0].mxu0 %v617
        %v1223 = vpop.f32.mrb[0].mxu0
        %v1224 = vadd.f32 0.0, %v1223
        %v1225 = vpop.f32.mrb[0].mxu0
        %v1226 = vadd.f32 0.0, %v1225
        %v1227 = vpop.f32.mrb[0].mxu0
        %v1228 = vadd.f32 0.0, %v1227
        %v1229 = vpop.f32.mrb[0].mxu0
        %v1230 = vadd.f32 0.0, %v1229
        %1231 = vmatprep.mubr.bf16.mxu0 %v471
        %1232 = vmatmul.mubr.bf16.gmra.mrb[0].mxu0 %v618
        %v1233 = vpop.f32.mrb[0].mxu0
        %v1234 = vadd.f32 0.0, %v1233
        %v1235 = vpop.f32.mrb[0].mxu0
        %v1236 = vadd.f32 0.0, %v1235
        %v1237 = vpop.f32.mrb[0].mxu0
        %v1238 = vadd.f32 0.0, %v1237
        %v1239 = vpop.f32.mrb[0].mxu0
        %v1240 = vadd.f32 0.0, %v1239
        %1241 = vmatprep.mubr.bf16.mxu0 %v472
        %1242 = vmatmul.mubr.bf16.gmra.mrb[0].mxu0 %v619
        %v1243 = vpop.f32.mrb[0].mxu0
        %v1244 = vadd.f32 0.0, %v1243
        %v1245 = vpop.f32.mrb[0].mxu0
        %v1246 = vadd.f32 0.0, %v1245
        %v1247 = vpop.f32.mrb[0].mxu0
        %v1248 = vadd.f32 0.0, %v1247
        %v1249 = vpop.f32.mrb[0].mxu0
        %v1250 = vadd.f32 0.0, %v1249
        %1251 = vmatprep.mubr.bf16.mxu0 %v473
        %1252 = vmatmul.mubr.bf16.gmra.mrb[0].mxu0 %v620
        %v1253 = vpop.f32.mrb[0].mxu0
        %v1254 = vadd.f32 0.0, %v1253
        %v1255 = vpop.f32.mrb[0].mxu0
        %v1256 = vadd.f32 0.0, %v1255
        %v1257 = vpop.f32.mrb[0].mxu0
        %v1258 = vadd.f32 0.0, %v1257
        %v1259 = vpop.f32.mrb[0].mxu0
        %v1260 = vadd.f32 0.0, %v1259
        %1261 = vmatprep.mubr.bf16.mxu0 %v474
        %1262 = vmatmul.mubr.bf16.gmra.mrb[0].mxu0 %v621
        %v1263 = vpop.f32.mrb[0].mxu0
        %v1264 = vadd.f32 0.0, %v1263
        %v1265 = vpop.f32.mrb[0].mxu0
        %v1266 = vadd.f32 0.0, %v1265
        %v1267 = vpop.f32.mrb[0].mxu0
        %v1268 = vadd.f32 0.0, %v1267
        %v1269 = vpop.f32.mrb[0].mxu0
        %v1270 = vadd.f32 0.0, %v1269
        %1271 = vmatprep.mubr.bf16.mxu0 %v475
        %1272 = vmatmul.mubr.bf16.gmra.mrb[0].mxu0 %v622
        %v1273 = vpop.f32.mrb[0].mxu0
        %v1274 = vadd.f32 0.0, %v1273
        %v1275 = vpop.f32.mrb[0].mxu0
        %v1276 = vadd.f32 0.0, %v1275
        %v1277 = vpop.f32.mrb[0].mxu0
        %v1278 = vadd.f32 0.0, %v1277
        %v1279 = vpop.f32.mrb[0].mxu0
        %v1280 = vadd.f32 0.0, %v1279
        %1281 = vmatprep.mubr.bf16.mxu0 %v476
        %1282 = vmatmul.mubr.bf16.gmra.mrb[0].mxu0 %v623
        %v1283 = vpop.f32.mrb[0].mxu0
        %v1284 = vadd.f32 0.0, %v1283
        %v1285 = vpop.f32.mrb[0].mxu0
        %v1286 = vadd.f32 0.0, %v1285
        %v1287 = vpop.f32.mrb[0].mxu0
        %v1288 = vadd.f32 0.0, %v1287
        %v1289 = vpop.f32.mrb[0].mxu0
        %v1290 = vadd.f32 0.0, %v1289
        %1291 = vmatprep.mubr.bf16.mxu0 %v477
        %1292 = vmatmul.mubr.bf16.gmra.mrb[0].mxu0 %v624
        %v1293 = vpop.f32.mrb[0].mxu0
        %v1294 = vadd.f32 0.0, %v1293
        %v1295 = vpop.f32.mrb[0].mxu0
        %v1296 = vadd.f32 0.0, %v1295
        %v1297 = vpop.f32.mrb[0].mxu0
        %v1298 = vadd.f32 0.0, %v1297
        %v1299 = vpop.f32.mrb[0].mxu0
        %v1300 = vadd.f32 0.0, %v1299
        %1301 = vmatprep.mubr.bf16.mxu0 %v478
        %1302 = vmatmul.mubr.bf16.gmra.mrb[0].mxu0 %v625
        %v1303 = vpop.f32.mrb[0].mxu0
        %v1304 = vadd.f32 0.0, %v1303
        %v1305 = vpop.f32.mrb[0].mxu0
        %v1306 = vadd.f32 0.0, %v1305
        %v1307 = vpop.f32.mrb[0].mxu0
        %v1308 = vadd.f32 0.0, %v1307
        %v1309 = vpop.f32.mrb[0].mxu0
        %v1310 = vadd.f32 0.0, %v1309
        %1311 = vmatprep.mubr.bf16.mxu0 %v479
        %1312 = vmatmul.mubr.bf16.gmra.mrb[0].mxu0 %v626
        %v1313 = vpop.f32.mrb[0].mxu0
        %v1314 = vadd.f32 0.0, %v1313
        %v1315 = vpop.f32.mrb[0].mxu0
        %v1316 = vadd.f32 0.0, %v1315
        %v1317 = vpop.f32.mrb[0].mxu0
        %v1318 = vadd.f32 0.0, %v1317
        %v1319 = vpop.f32.mrb[0].mxu0
        %v1320 = vadd.f32 0.0, %v1319
        %1321 = vmatprep.mubr.bf16.mxu0 %v480
        %1322 = vmatmul.mubr.bf16.gmra.mrb[0].mxu0 %v627
        %v1323 = vpop.f32.mrb[0].mxu0
        %v1324 = vadd.f32 0.0, %v1323
        %v1325 = vpop.f32.mrb[0].mxu0
        %v1326 = vadd.f32 0.0, %v1325
        %v1327 = vpop.f32.mrb[0].mxu0
        %v1328 = vadd.f32 0.0, %v1327
        %v1329 = vpop.f32.mrb[0].mxu0
        %v1330 = vadd.f32 0.0, %v1329
        %1331 = vmatprep.mubr.bf16.mxu0 %v481
        %1332 = vmatmul.mubr.bf16.gmra.mrb[0].mxu0 %v628
        %v1333 = vpop.f32.mrb[0].mxu0
        %v1334 = vadd.f32 0.0, %v1333
        %v1335 = vpop.f32.mrb[0].mxu0
        %v1336 = vadd.f32 0.0, %v1335
        %v1337 = vpop.f32.mrb[0].mxu0
        %v1338 = vadd.f32 0.0, %v1337
        %v1339 = vpop.f32.mrb[0].mxu0
        %v1340 = vadd.f32 0.0, %v1339
        %1341 = vmatprep.mubr.bf16.mxu0 %v482
        %1342 = vmatmul.mubr.bf16.gmra.mrb[0].mxu0 %v629
        %v1343 = vpop.f32.mrb[0].mxu0
        %v1344 = vadd.f32 0.0, %v1343
        %v1345 = vpop.f32.mrb[0].mxu0
        %v1346 = vadd.f32 0.0, %v1345
        %v1347 = vpop.f32.mrb[0].mxu0
        %v1348 = vadd.f32 0.0, %v1347
        %v1349 = vpop.f32.mrb[0].mxu0
        %v1350 = vadd.f32 0.0, %v1349
        %1351 = vmatprep.mubr.bf16.mxu0 %v483
        %1352 = vmatmul.mubr.bf16.gmra.mrb[0].mxu0 %v630
        %v1353 = vpop.f32.mrb[0].mxu0
        %v1354 = vadd.f32 0.0, %v1353
        %v1355 = vpop.f32.mrb[0].mxu0
        %v1356 = vadd.f32 0.0, %v1355
        %v1357 = vpop.f32.mrb[0].mxu0
        %v1358 = vadd.f32 0.0, %v1357
        %v1359 = vpop.f32.mrb[0].mxu0
        %v1360 = vadd.f32 0.0, %v1359
        %1361 = vmatprep.mubr.bf16.mxu0 %v484
        %1362 = vmatmul.mubr.bf16.gmra.mrb[0].mxu0 %v631
        %v1363 = vpop.f32.mrb[0].mxu0
        %v1364 = vpop.f32.mrb[0].mxu0
        %v1365 = vadd.f32 0.0, %v1364
        %v1366 = vpop.f32.mrb[0].mxu0
        %v1367 = vpop.f32.mrb[0].mxu0
        %v1368 = vadd.f32 0.0, %v1367
        %1369 = vdwg.mxu0
        %1370 = vmatprep.subr.bf16.mxu0 %v1084
        %1371 = vmatpush1.bf16.msra.mxu0 %v1083
        %1372 = vmatprep.subr.bf16.mxu0 %v1087
        %1373 = vmatpush1.bf16.msra.mxu0 %v1086
        %1374 = vmatprep.subr.bf16.mxu0 %v1090
        %1375 = vmatpush1.bf16.msra.mxu0 %v1089
        %1376 = vmatprep.subr.bf16.mxu0 %v1093
        %1377 = vmatpush1.bf16.msra.mxu0 %v1092
        %1378 = vmatprep.subr.bf16.mxu0 %v1096
        %1379 = vmatpush1.bf16.msra.mxu0 %v1095
        %1380 = vmatprep.subr.bf16.mxu0 %v1099
        %1381 = vmatpush1.bf16.msra.mxu0 %v1098
        %1382 = vmatprep.subr.bf16.mxu0 %v1102
        %1383 = vmatpush1.bf16.msra.mxu0 %v1101
        %1384 = vmatprep.subr.bf16.mxu0 %v1105
        %1385 = vmatpush1.bf16.msra.mxu0 %v1104
        %1386 = vmatprep.subr.bf16.mxu0 0
        %1387 = vmatpush1.bf16.msra.mxu0 0
        %1388 = vmatprep.subr.bf16.mxu0 0
        %1389 = vmatpush1.bf16.msra.mxu0 0
        %1390 = vmatprep.subr.bf16.mxu0 0
        %1391 = vmatpush1.bf16.msra.mxu0 0
        %1392 = vmatprep.subr.bf16.mxu0 0
        %1393 = vmatpush1.bf16.msra.mxu0 0
        %1394 = vmatprep.subr.bf16.mxu0 0
        %1395 = vmatpush1.bf16.msra.mxu0 0
        %1396 = vmatprep.subr.bf16.mxu0 0
        %1397 = vmatpush1.bf16.msra.mxu0 0
        %1398 = vmatprep.subr.bf16.mxu0 0
        %1399 = vmatpush1.bf16.msra.mxu0 0
        %1400 = vmatprep.subr.bf16.mxu0 0
        %1401 = vmatpush1.bf16.msra.mxu0 0
        %1402 = vmatprep.mubr.bf16.mxu0 0
        %1403 = vmatmul.mubr.bf16.gmra.mrb[0].mxu0 %v683
        %v1404 = vpop.f32.mrb[0].mxu0
        %v1405 = vadd.f32 %v1214, %v1404
        %v1406 = vpop.f32.mrb[0].mxu0
        %v1407 = vadd.f32 %v1216, %v1406
        %v1408 = vpop.f32.mrb[0].mxu0
        %v1409 = vadd.f32 %v1218, %v1408
        %v1410 = vpop.f32.mrb[0].mxu0
        %v1411 = vadd.f32 %v1220, %v1410
        %1412 = vmatprep.mubr.bf16.mxu0 0
        %1413 = vmatmul.mubr.bf16.gmra.mrb[0].mxu0 %v684
        %v1414 = vpop.f32.mrb[0].mxu0
        %v1415 = vadd.f32 %v1224, %v1414
        %v1416 = vpop.f32.mrb[0].mxu0
        %v1417 = vadd.f32 %v1226, %v1416
        %v1418 = vpop.f32.mrb[0].mxu0
        %v1419 = vadd.f32 %v1228, %v1418
        %v1420 = vpop.f32.mrb[0].mxu0
        %v1421 = vadd.f32 %v1230, %v1420
        %1422 = vmatprep.mubr.bf16.mxu0 0
        %1423 = vmatmul.mubr.bf16.gmra.mrb[0].mxu0 %v685
        %v1424 = vpop.f32.mrb[0].mxu0
        %v1425 = vadd.f32 %v1234, %v1424
        %v1426 = vpop.f32.mrb[0].mxu0
        %v1427 = vadd.f32 %v1236, %v1426
        %v1428 = vpop.f32.mrb[0].mxu0
        %v1429 = vadd.f32 %v1238, %v1428
        %v1430 = vpop.f32.mrb[0].mxu0
        %v1431 = vadd.f32 %v1240, %v1430
        %1432 = vmatprep.mubr.bf16.mxu0 0
        %1433 = vmatmul.mubr.bf16.gmra.mrb[0].mxu0 %v686
        %v1434 = vpop.f32.mrb[0].mxu0
        %v1435 = vadd.f32 %v1244, %v1434
        %v1436 = vpop.f32.mrb[0].mxu0
        %v1437 = vadd.f32 %v1246, %v1436
        %v1438 = vpop.f32.mrb[0].mxu0
        %v1439 = vadd.f32 %v1248, %v1438
        %v1440 = vpop.f32.mrb[0].mxu0
        %v1441 = vadd.f32 %v1250, %v1440
        %1442 = vmatprep.mubr.bf16.mxu0 0
        %1443 = vmatmul.mubr.bf16.gmra.mrb[0].mxu0 %v687
        %v1444 = vpop.f32.mrb[0].mxu0
        %v1445 = vadd.f32 %v1254, %v1444
        %v1446 = vpop.f32.mrb[0].mxu0
        %v1447 = vadd.f32 %v1256, %v1446
        %v1448 = vpop.f32.mrb[0].mxu0
        %v1449 = vadd.f32 %v1258, %v1448
        %v1450 = vpop.f32.mrb[0].mxu0
        %v1451 = vadd.f32 %v1260, %v1450
        %1452 = vmatprep.mubr.bf16.mxu0 0
        %1453 = vmatmul.mubr.bf16.gmra.mrb[0].mxu0 %v688
        %v1454 = vpop.f32.mrb[0].mxu0
        %v1455 = vadd.f32 %v1264, %v1454
        %v1456 = vpop.f32.mrb[0].mxu0
        %v1457 = vadd.f32 %v1266, %v1456
        %v1458 = vpop.f32.mrb[0].mxu0
        %v1459 = vadd.f32 %v1268, %v1458
        %v1460 = vpop.f32.mrb[0].mxu0
        %v1461 = vadd.f32 %v1270, %v1460
        %1462 = vmatprep.mubr.bf16.mxu0 0
        %1463 = vmatmul.mubr.bf16.gmra.mrb[0].mxu0 %v689
        %v1464 = vpop.f32.mrb[0].mxu0
        %v1465 = vadd.f32 %v1274, %v1464
        %v1466 = vpop.f32.mrb[0].mxu0
        %v1467 = vadd.f32 %v1276, %v1466
        %v1468 = vpop.f32.mrb[0].mxu0
        %v1469 = vadd.f32 %v1278, %v1468
        %v1470 = vpop.f32.mrb[0].mxu0
        %v1471 = vadd.f32 %v1280, %v1470
        %1472 = vmatprep.mubr.bf16.mxu0 0
        %1473 = vmatmul.mubr.bf16.gmra.mrb[0].mxu0 %v690
        %v1474 = vpop.f32.mrb[0].mxu0
        %v1475 = vadd.f32 %v1284, %v1474
        %v1476 = vpop.f32.mrb[0].mxu0
        %v1477 = vadd.f32 %v1286, %v1476
        %v1478 = vpop.f32.mrb[0].mxu0
        %v1479 = vadd.f32 %v1288, %v1478
        %v1480 = vpop.f32.mrb[0].mxu0
        %v1481 = vadd.f32 %v1290, %v1480
        %1482 = vmatprep.mubr.bf16.mxu0 0
        %1483 = vmatmul.mubr.bf16.gmra.mrb[0].mxu0 %v691
        %v1484 = vpop.f32.mrb[0].mxu0
        %v1485 = vadd.f32 %v1294, %v1484
        %v1486 = vpop.f32.mrb[0].mxu0
        %v1487 = vadd.f32 %v1296, %v1486
        %v1488 = vpop.f32.mrb[0].mxu0
        %v1489 = vadd.f32 %v1298, %v1488
        %v1490 = vpop.f32.mrb[0].mxu0
        %v1491 = vadd.f32 %v1300, %v1490
        %1492 = vmatprep.mubr.bf16.mxu0 0
        %1493 = vmatmul.mubr.bf16.gmra.mrb[0].mxu0 %v692
        %v1494 = vpop.f32.mrb[0].mxu0
        %v1495 = vadd.f32 %v1304, %v1494
        %v1496 = vpop.f32.mrb[0].mxu0
        %v1497 = vadd.f32 %v1306, %v1496
        %v1498 = vpop.f32.mrb[0].mxu0
        %v1499 = vadd.f32 %v1308, %v1498
        %v1500 = vpop.f32.mrb[0].mxu0
        %v1501 = vadd.f32 %v1310, %v1500
        %1502 = vmatprep.mubr.bf16.mxu0 0
        %1503 = vmatmul.mubr.bf16.gmra.mrb[0].mxu0 %v693
        %v1504 = vpop.f32.mrb[0].mxu0
        %v1505 = vadd.f32 %v1314, %v1504
        %v1506 = vpop.f32.mrb[0].mxu0
        %v1507 = vadd.f32 %v1316, %v1506
        %v1508 = vpop.f32.mrb[0].mxu0
        %v1509 = vadd.f32 %v1318, %v1508
        %v1510 = vpop.f32.mrb[0].mxu0
        %v1511 = vadd.f32 %v1320, %v1510
        %1512 = vmatprep.mubr.bf16.mxu0 0
        %1513 = vmatmul.mubr.bf16.gmra.mrb[0].mxu0 %v694
        %v1514 = vpop.f32.mrb[0].mxu0
        %v1515 = vadd.f32 %v1324, %v1514
        %v1516 = vpop.f32.mrb[0].mxu0
        %v1517 = vadd.f32 %v1326, %v1516
        %v1518 = vpop.f32.mrb[0].mxu0
        %v1519 = vadd.f32 %v1328, %v1518
        %v1520 = vpop.f32.mrb[0].mxu0
        %v1521 = vadd.f32 %v1330, %v1520
        %1522 = vmatprep.mubr.bf16.mxu0 0
        %1523 = vmatmul.mubr.bf16.gmra.mrb[0].mxu0 %v695
        %v1524 = vpop.f32.mrb[0].mxu0
        %v1525 = vadd.f32 %v1334, %v1524
        %v1526 = vpop.f32.mrb[0].mxu0
        %v1527 = vadd.f32 %v1336, %v1526
        %v1528 = vpop.f32.mrb[0].mxu0
        %v1529 = vadd.f32 %v1338, %v1528
        %v1530 = vpop.f32.mrb[0].mxu0
        %v1531 = vadd.f32 %v1340, %v1530
        %1532 = vmatprep.mubr.bf16.mxu0 0
        %1533 = vmatmul.mubr.bf16.gmra.mrb[0].mxu0 %v696
        %v1534 = vpop.f32.mrb[0].mxu0
        %v1535 = vadd.f32 %v1344, %v1534
        %v1536 = vpop.f32.mrb[0].mxu0
        %v1537 = vadd.f32 %v1346, %v1536
        %v1538 = vpop.f32.mrb[0].mxu0
        %v1539 = vadd.f32 %v1348, %v1538
        %v1540 = vpop.f32.mrb[0].mxu0
        %v1541 = vadd.f32 %v1350, %v1540
        %1542 = vmatprep.mubr.bf16.mxu0 0
        %1543 = vmatmul.mubr.bf16.gmra.mrb[0].mxu0 %v697
        %v1544 = vpop.f32.mrb[0].mxu0
        %v1545 = vadd.f32 %v1354, %v1544
        %v1546 = vpop.f32.mrb[0].mxu0
        %v1547 = vadd.f32 %v1356, %v1546
        %v1548 = vpop.f32.mrb[0].mxu0
        %v1549 = vadd.f32 %v1358, %v1548
        %v1550 = vpop.f32.mrb[0].mxu0
        %v1551 = vadd.f32 %v1360, %v1550
        %1552 = vmatprep.mubr.bf16.mxu0 0
        %1553 = vmatmul.mubr.bf16.gmra.mrb[0].mxu0 %v698
        %v1554 = vpop.f32.mrb[0].mxu0
        %v1555 = vpop.f32.mrb[0].mxu0
        %v1556 = vadd.f32 %v1365, %v1555
        %v1557 = vpop.f32.mrb[0].mxu0
        %v1558 = vpop.f32.mrb[0].mxu0
        %v1559 = vadd.f32 %v1368, %v1558
        %1560 = vdwg.mxu0
        %1561 = vmatprep.subr.bf16.mxu0 0
        %1562 = vmatpush1.bf16.msra.mxu0 %v1037
        %1563 = vmatprep.subr.bf16.mxu0 0
        %1564 = vmatpush1.bf16.msra.mxu0 %v1040
        %1565 = vmatprep.subr.bf16.mxu0 0
        %1566 = vmatpush1.bf16.msra.mxu0 %v1043
        %1567 = vmatprep.subr.bf16.mxu0 0
        %1568 = vmatpush1.bf16.msra.mxu0 %v1046
        %1569 = vmatprep.subr.bf16.mxu0 0
        %1570 = vmatpush1.bf16.msra.mxu0 %v1049
        %1571 = vmatprep.subr.bf16.mxu0 0
        %1572 = vmatpush1.bf16.msra.mxu0 %v1052
        %1573 = vmatprep.subr.bf16.mxu0 0
        %1574 = vmatpush1.bf16.msra.mxu0 %v1055
        %1575 = vmatprep.subr.bf16.mxu0 0
        %1576 = vmatpush1.bf16.msra.mxu0 %v1058
        %1577 = vmatprep.subr.bf16.mxu0 0
        %1578 = vmatpush1.bf16.msra.mxu0 %v1061
        %1579 = vmatprep.subr.bf16.mxu0 0
        %1580 = vmatpush1.bf16.msra.mxu0 %v1064
        %1581 = vmatprep.subr.bf16.mxu0 0
        %1582 = vmatpush1.bf16.msra.mxu0 %v1067
        %1583 = vmatprep.subr.bf16.mxu0 0
        %1584 = vmatpush1.bf16.msra.mxu0 %v1070
        %1585 = vmatprep.subr.bf16.mxu0 0
        %1586 = vmatpush1.bf16.msra.mxu0 %v1073
        %1587 = vmatprep.subr.bf16.mxu0 0
        %1588 = vmatpush1.bf16.msra.mxu0 %v1076
        %1589 = vmatprep.subr.bf16.mxu0 0
        %1590 = vmatpush1.bf16.msra.mxu0 %v1079
        %1591 = vmatprep.subr.bf16.mxu0 0
        %1592 = vmatpush1.bf16.msra.mxu0 %v1082
        %1593 = vmatprep.mubr.bf16.mxu0 %v469
        %1594 = vmatmul.mubr.bf16.gmra.mrb[0].mxu0 %v616
        %v1595 = vpop.f32.mrb[0].mxu0
        %v1596 = vpop.f32.mrb[0].mxu0
        %v1597 = vpop.f32.mrb[0].mxu0
        %v1598 = vpop.f32.mrb[0].mxu0
        %1599 = vmatprep.mubr.bf16.mxu0 %v470
        %1600 = vmatmul.mubr.bf16.gmra.mrb[0].mxu0 %v617
        %v1601 = vpop.f32.mrb[0].mxu0
        %v1602 = vadd.f32 0.0, %v1601
        %v1603 = vpop.f32.mrb[0].mxu0
        %v1604 = vpop.f32.mrb[0].mxu0
        %v1605 = vadd.f32 0.0, %v1604
        %v1606 = vpop.f32.mrb[0].mxu0
        %1607 = vmatprep.mubr.bf16.mxu0 %v471
        %1608 = vmatmul.mubr.bf16.gmra.mrb[0].mxu0 %v618
        %v1609 = vpop.f32.mrb[0].mxu0
        %v1610 = vadd.f32 0.0, %v1609
        %v1611 = vpop.f32.mrb[0].mxu0
        %v1612 = vpop.f32.mrb[0].mxu0
        %v1613 = vadd.f32 0.0, %v1612
        %v1614 = vpop.f32.mrb[0].mxu0
        %1615 = vmatprep.mubr.bf16.mxu0 %v472
        %1616 = vmatmul.mubr.bf16.gmra.mrb[0].mxu0 %v619
        %v1617 = vpop.f32.mrb[0].mxu0
        %v1618 = vadd.f32 0.0, %v1617
        %v1619 = vpop.f32.mrb[0].mxu0
        %v1620 = vpop.f32.mrb[0].mxu0
        %v1621 = vadd.f32 0.0, %v1620
        %v1622 = vpop.f32.mrb[0].mxu0
        %1623 = vmatprep.mubr.bf16.mxu0 %v473
        %1624 = vmatmul.mubr.bf16.gmra.mrb[0].mxu0 %v620
        %v1625 = vpop.f32.mrb[0].mxu0
        %v1626 = vadd.f32 0.0, %v1625
        %v1627 = vpop.f32.mrb[0].mxu0
        %v1628 = vpop.f32.mrb[0].mxu0
        %v1629 = vadd.f32 0.0, %v1628
        %v1630 = vpop.f32.mrb[0].mxu0
        %1631 = vmatprep.mubr.bf16.mxu0 %v474
        %1632 = vmatmul.mubr.bf16.gmra.mrb[0].mxu0 %v621
        %v1633 = vpop.f32.mrb[0].mxu0
        %v1634 = vadd.f32 0.0, %v1633
        %v1635 = vpop.f32.mrb[0].mxu0
        %v1636 = vpop.f32.mrb[0].mxu0
        %v1637 = vadd.f32 0.0, %v1636
        %v1638 = vpop.f32.mrb[0].mxu0
        %1639 = vmatprep.mubr.bf16.mxu0 %v475
        %1640 = vmatmul.mubr.bf16.gmra.mrb[0].mxu0 %v622
        %v1641 = vpop.f32.mrb[0].mxu0
        %v1642 = vadd.f32 0.0, %v1641
        %v1643 = vpop.f32.mrb[0].mxu0
        %v1644 = vpop.f32.mrb[0].mxu0
        %v1645 = vadd.f32 0.0, %v1644
        %v1646 = vpop.f32.mrb[0].mxu0
        %1647 = vmatprep.mubr.bf16.mxu0 %v476
        %1648 = vmatmul.mubr.bf16.gmra.mrb[0].mxu0 %v623
        %v1649 = vpop.f32.mrb[0].mxu0
        %v1650 = vadd.f32 0.0, %v1649
        %v1651 = vpop.f32.mrb[0].mxu0
        %v1652 = vpop.f32.mrb[0].mxu0
        %v1653 = vadd.f32 0.0, %v1652
        %v1654 = vpop.f32.mrb[0].mxu0
        %1655 = vmatprep.mubr.bf16.mxu0 %v477
        %1656 = vmatmul.mubr.bf16.gmra.mrb[0].mxu0 %v624
        %v1657 = vpop.f32.mrb[0].mxu0
        %v1658 = vadd.f32 0.0, %v1657
        %v1659 = vpop.f32.mrb[0].mxu0
        %v1660 = vpop.f32.mrb[0].mxu0
        %v1661 = vadd.f32 0.0, %v1660
        %v1662 = vpop.f32.mrb[0].mxu0
        %1663 = vmatprep.mubr.bf16.mxu0 %v478
        %1664 = vmatmul.mubr.bf16.gmra.mrb[0].mxu0 %v625
        %v1665 = vpop.f32.mrb[0].mxu0
        %v1666 = vadd.f32 0.0, %v1665
        %v1667 = vpop.f32.mrb[0].mxu0
        %v1668 = vpop.f32.mrb[0].mxu0
        %v1669 = vadd.f32 0.0, %v1668
        %v1670 = vpop.f32.mrb[0].mxu0
        %1671 = vmatprep.mubr.bf16.mxu0 %v479
        %1672 = vmatmul.mubr.bf16.gmra.mrb[0].mxu0 %v626
        %v1673 = vpop.f32.mrb[0].mxu0
        %v1674 = vadd.f32 0.0, %v1673
        %v1675 = vpop.f32.mrb[0].mxu0
        %v1676 = vpop.f32.mrb[0].mxu0
        %v1677 = vadd.f32 0.0, %v1676
        %v1678 = vpop.f32.mrb[0].mxu0
        %1679 = vmatprep.mubr.bf16.mxu0 %v480
        %1680 = vmatmul.mubr.bf16.gmra.mrb[0].mxu0 %v627
        %v1681 = vpop.f32.mrb[0].mxu0
        %v1682 = vadd.f32 0.0, %v1681
        %v1683 = vpop.f32.mrb[0].mxu0
        %v1684 = vpop.f32.mrb[0].mxu0
        %v1685 = vadd.f32 0.0, %v1684
        %v1686 = vpop.f32.mrb[0].mxu0
        %1687 = vmatprep.mubr.bf16.mxu0 %v481
        %1688 = vmatmul.mubr.bf16.gmra.mrb[0].mxu0 %v628
        %v1689 = vpop.f32.mrb[0].mxu0
        %v1690 = vadd.f32 0.0, %v1689
        %v1691 = vpop.f32.mrb[0].mxu0
        %v1692 = vpop.f32.mrb[0].mxu0
        %v1693 = vadd.f32 0.0, %v1692
        %v1694 = vpop.f32.mrb[0].mxu0
        %1695 = vmatprep.mubr.bf16.mxu0 %v482
        %1696 = vmatmul.mubr.bf16.gmra.mrb[0].mxu0 %v629
        %v1697 = vpop.f32.mrb[0].mxu0
        %v1698 = vadd.f32 0.0, %v1697
        %v1699 = vpop.f32.mrb[0].mxu0
        %v1700 = vpop.f32.mrb[0].mxu0
        %v1701 = vadd.f32 0.0, %v1700
        %v1702 = vpop.f32.mrb[0].mxu0
        %1703 = vmatprep.mubr.bf16.mxu0 %v483
        %1704 = vmatmul.mubr.bf16.gmra.mrb[0].mxu0 %v630
        %v1705 = vpop.f32.mrb[0].mxu0
        %v1706 = vadd.f32 0.0, %v1705
        %v1707 = vpop.f32.mrb[0].mxu0
        %v1708 = vpop.f32.mrb[0].mxu0
        %v1709 = vadd.f32 0.0, %v1708
        %v1710 = vpop.f32.mrb[0].mxu0
        %1711 = vmatprep.mubr.bf16.mxu0 %v484
        %1712 = vmatmul.mubr.bf16.gmra.mrb[0].mxu0 %v631
        %v1713 = vpop.f32.mrb[0].mxu0
        %v1714 = vadd.f32 0.0, %v1713
        %v1715 = vpop.f32.mrb[0].mxu0
        %v1716 = vpop.f32.mrb[0].mxu0
        %v1717 = vadd.f32 0.0, %v1716
        %v1718 = vpop.f32.mrb[0].mxu0
        %1719 = vdwg.mxu0
        %1720 = vmatprep.subr.bf16.mxu0 0
        %1721 = vmatpush1.bf16.msra.mxu0 %v1085
        %1722 = vmatprep.subr.bf16.mxu0 0
        %1723 = vmatpush1.bf16.msra.mxu0 %v1088
        %1724 = vmatprep.subr.bf16.mxu0 0
        %1725 = vmatpush1.bf16.msra.mxu0 %v1091
        %1726 = vmatprep.subr.bf16.mxu0 0
        %1727 = vmatpush1.bf16.msra.mxu0 %v1094
        %1728 = vmatprep.subr.bf16.mxu0 0
        %1729 = vmatpush1.bf16.msra.mxu0 %v1097
        %1730 = vmatprep.subr.bf16.mxu0 0
        %1731 = vmatpush1.bf16.msra.mxu0 %v1100
        %1732 = vmatprep.subr.bf16.mxu0 0
        %1733 = vmatpush1.bf16.msra.mxu0 %v1103
        %1734 = vmatprep.subr.bf16.mxu0 0
        %1735 = vmatpush1.bf16.msra.mxu0 %v1106
        %1736 = vmatprep.subr.bf16.mxu0 0
        %1737 = vmatpush1.bf16.msra.mxu0 0
        %1738 = vmatprep.subr.bf16.mxu0 0
        %1739 = vmatpush1.bf16.msra.mxu0 0
        %1740 = vmatprep.subr.bf16.mxu0 0
        %1741 = vmatpush1.bf16.msra.mxu0 0
        %1742 = vmatprep.subr.bf16.mxu0 0
        %1743 = vmatpush1.bf16.msra.mxu0 0
        %1744 = vmatprep.subr.bf16.mxu0 0
        %1745 = vmatpush1.bf16.msra.mxu0 0
        %1746 = vmatprep.subr.bf16.mxu0 0
        %1747 = vmatpush1.bf16.msra.mxu0 0
        %1748 = vmatprep.subr.bf16.mxu0 0
        %1749 = vmatpush1.bf16.msra.mxu0 0
        %1750 = vmatprep.subr.bf16.mxu0 0
        %1751 = vmatpush1.bf16.msra.mxu0 0
        %1752 = vmatprep.mubr.bf16.mxu0 0
        %1753 = vmatmul.mubr.bf16.gmra.mrb[0].mxu0 %v683
        %v1754 = vpop.f32.mrb[0].mxu0
        %v1755 = vpop.f32.mrb[0].mxu0
        %v1756 = vpop.f32.mrb[0].mxu0
        %v1757 = vpop.f32.mrb[0].mxu0
        %1758 = vmatprep.mubr.bf16.mxu0 0
        %1759 = vmatmul.mubr.bf16.gmra.mrb[0].mxu0 %v684
        %v1760 = vpop.f32.mrb[0].mxu0
        %v1761 = vadd.f32 %v1602, %v1760
        %v1762 = vpop.f32.mrb[0].mxu0
        %v1763 = vpop.f32.mrb[0].mxu0
        %v1764 = vadd.f32 %v1605, %v1763
        %v1765 = vpop.f32.mrb[0].mxu0
        %1766 = vmatprep.mubr.bf16.mxu0 0
        %1767 = vmatmul.mubr.bf16.gmra.mrb[0].mxu0 %v685
        %v1768 = vpop.f32.mrb[0].mxu0
        %v1769 = vadd.f32 %v1610, %v1768
        %v1770 = vpop.f32.mrb[0].mxu0
        %v1771 = vpop.f32.mrb[0].mxu0
        %v1772 = vadd.f32 %v1613, %v1771
        %v1773 = vpop.f32.mrb[0].mxu0
        %1774 = vmatprep.mubr.bf16.mxu0 0
        %1775 = vmatmul.mubr.bf16.gmra.mrb[0].mxu0 %v686
        %v1776 = vpop.f32.mrb[0].mxu0
        %v1777 = vadd.f32 %v1618, %v1776
        %v1778 = vpop.f32.mrb[0].mxu0
        %v1779 = vpop.f32.mrb[0].mxu0
        %v1780 = vadd.f32 %v1621, %v1779
        %v1781 = vpop.f32.mrb[0].mxu0
        %1782 = vmatprep.mubr.bf16.mxu0 0
        %1783 = vmatmul.mubr.bf16.gmra.mrb[0].mxu0 %v687
        %v1784 = vpop.f32.mrb[0].mxu0
        %v1785 = vadd.f32 %v1626, %v1784
        %v1786 = vpop.f32.mrb[0].mxu0
        %v1787 = vpop.f32.mrb[0].mxu0
        %v1788 = vadd.f32 %v1629, %v1787
        %v1789 = vpop.f32.mrb[0].mxu0
        %1790 = vmatprep.mubr.bf16.mxu0 0
        %1791 = vmatmul.mubr.bf16.gmra.mrb[0].mxu0 %v688
        %v1792 = vpop.f32.mrb[0].mxu0
        %v1793 = vadd.f32 %v1634, %v1792
        %v1794 = vpop.f32.mrb[0].mxu0
        %v1795 = vpop.f32.mrb[0].mxu0
        %v1796 = vadd.f32 %v1637, %v1795
        %v1797 = vpop.f32.mrb[0].mxu0
        %1798 = vmatprep.mubr.bf16.mxu0 0
        %1799 = vmatmul.mubr.bf16.gmra.mrb[0].mxu0 %v689
        %v1800 = vpop.f32.mrb[0].mxu0
        %v1801 = vadd.f32 %v1642, %v1800
        %v1802 = vpop.f32.mrb[0].mxu0
        %v1803 = vpop.f32.mrb[0].mxu0
        %v1804 = vadd.f32 %v1645, %v1803
        %v1805 = vpop.f32.mrb[0].mxu0
        %1806 = vmatprep.mubr.bf16.mxu0 0
        %1807 = vmatmul.mubr.bf16.gmra.mrb[0].mxu0 %v690
        %v1808 = vpop.f32.mrb[0].mxu0
        %v1809 = vadd.f32 %v1650, %v1808
        %v1810 = vpop.f32.mrb[0].mxu0
        %v1811 = vpop.f32.mrb[0].mxu0
        %v1812 = vadd.f32 %v1653, %v1811
        %v1813 = vpop.f32.mrb[0].mxu0
        %1814 = vmatprep.mubr.bf16.mxu0 0
        %1815 = vmatmul.mubr.bf16.gmra.mrb[0].mxu0 %v691
        %v1816 = vpop.f32.mrb[0].mxu0
        %v1817 = vadd.f32 %v1658, %v1816
        %v1818 = vpop.f32.mrb[0].mxu0
        %v1819 = vpop.f32.mrb[0].mxu0
        %v1820 = vadd.f32 %v1661, %v1819
        %v1821 = vpop.f32.mrb[0].mxu0
        %1822 = vmatprep.mubr.bf16.mxu0 0
        %1823 = vmatmul.mubr.bf16.gmra.mrb[0].mxu0 %v692
        %v1824 = vpop.f32.mrb[0].mxu0
        %v1825 = vadd.f32 %v1666, %v1824
        %v1826 = vpop.f32.mrb[0].mxu0
        %v1827 = vpop.f32.mrb[0].mxu0
        %v1828 = vadd.f32 %v1669, %v1827
        %v1829 = vpop.f32.mrb[0].mxu0
        %1830 = vmatprep.mubr.bf16.mxu0 0
        %1831 = vmatmul.mubr.bf16.gmra.mrb[0].mxu0 %v693
        %v1832 = vpop.f32.mrb[0].mxu0
        %v1833 = vadd.f32 %v1674, %v1832
        %v1834 = vpop.f32.mrb[0].mxu0
        %v1835 = vpop.f32.mrb[0].mxu0
        %v1836 = vadd.f32 %v1677, %v1835
        %v1837 = vpop.f32.mrb[0].mxu0
        %1838 = vmatprep.mubr.bf16.mxu0 0
        %1839 = vmatmul.mubr.bf16.gmra.mrb[0].mxu0 %v694
        %v1840 = vpop.f32.mrb[0].mxu0
        %v1841 = vadd.f32 %v1682, %v1840
        %v1842 = vpop.f32.mrb[0].mxu0
        %v1843 = vpop.f32.mrb[0].mxu0
        %v1844 = vadd.f32 %v1685, %v1843
        %v1845 = vpop.f32.mrb[0].mxu0
        %1846 = vmatprep.mubr.bf16.mxu0 0
        %1847 = vmatmul.mubr.bf16.gmra.mrb[0].mxu0 %v695
        %v1848 = vpop.f32.mrb[0].mxu0
        %v1849 = vadd.f32 %v1690, %v1848
        %v1850 = vpop.f32.mrb[0].mxu0
        %v1851 = vpop.f32.mrb[0].mxu0
        %v1852 = vadd.f32 %v1693, %v1851
        %v1853 = vpop.f32.mrb[0].mxu0
        %1854 = vmatprep.mubr.bf16.mxu0 0
        %1855 = vmatmul.mubr.bf16.gmra.mrb[0].mxu0 %v696
        %v1856 = vpop.f32.mrb[0].mxu0
        %v1857 = vadd.f32 %v1698, %v1856
        %v1858 = vpop.f32.mrb[0].mxu0
        %v1859 = vpop.f32.mrb[0].mxu0
        %v1860 = vadd.f32 %v1701, %v1859
        %v1861 = vpop.f32.mrb[0].mxu0
        %1862 = vmatprep.mubr.bf16.mxu0 0
        %1863 = vmatmul.mubr.bf16.gmra.mrb[0].mxu0 %v697
        %v1864 = vpop.f32.mrb[0].mxu0
        %v1865 = vadd.f32 %v1706, %v1864
        %v1866 = vpop.f32.mrb[0].mxu0
        %v1867 = vpop.f32.mrb[0].mxu0
        %v1868 = vadd.f32 %v1709, %v1867
        %v1869 = vpop.f32.mrb[0].mxu0
        %1870 = vmatprep.mubr.bf16.mxu0 0
        %1871 = vmatmul.mubr.bf16.gmra.mrb[0].mxu0 %v698
        %v1872 = vpop.f32.mrb[0].mxu0
        %v1873 = vadd.f32 %v1714, %v1872
        %v1874 = vpop.f32.mrb[0].mxu0
        %v1875 = vpop.f32.mrb[0].mxu0
        %v1876 = vadd.f32 %v1717, %v1875
        %v1877 = vpop.f32.mrb[0].mxu0
        %1878 = vdwg.mxu0
        %v1879 = vadd.f32 %v1407, 0.0
        %v1880 = vadd.f32 %v1411, 0.0
        %v1881 = vadd.f32 %v1417, %v1405
        %v1882 = vadd.f32 %v1421, %v1409
        %v1883 = vadd.f32 %v1427, %v1415
        %v1884 = vadd.f32 %v1431, %v1419
        %v1885 = vadd.f32 %v1437, %v1425
        %v1886 = vadd.f32 %v1441, %v1429
        %v1887 = vadd.f32 %v1447, %v1435
        %v1888 = vadd.f32 %v1451, %v1439
        %v1889 = vadd.f32 %v1457, %v1445
        %v1890 = vadd.f32 %v1461, %v1449
        %v1891 = vadd.f32 %v1467, %v1455
        %v1892 = vadd.f32 %v1471, %v1459
        %v1893 = vadd.f32 %v1477, %v1465
        %v1894 = vadd.f32 %v1481, %v1469
        %v1895 = vadd.f32 %v1487, %v1475
        %v1896 = vadd.f32 %v1491, %v1479
        %v1897 = vadd.f32 %v1497, %v1485
        %v1898 = vadd.f32 %v1501, %v1489
        %v1899 = vadd.f32 %v1507, %v1495
        %v1900 = vadd.f32 %v1511, %v1499
        %v1901 = vadd.f32 %v1517, %v1505
        %v1902 = vadd.f32 %v1521, %v1509
        %v1903 = vadd.f32 %v1527, %v1515
        %v1904 = vadd.f32 %v1531, %v1519
        %v1905 = vadd.f32 %v1537, %v1525
        %v1906 = vadd.f32 %v1541, %v1529
        %v1907 = vadd.f32 %v1547, %v1535
        %v1908 = vadd.f32 %v1551, %v1539
        %v1909 = vadd.f32 %v1556, %v1545
        %v1910 = vadd.f32 %v1559, %v1549
        %v1911 = vadd.f32 %v1879, %v1761
        %v1912 = vadd.f32 %v1880, %v1764
        %v1913 = vadd.f32 %v1881, %v1769
        %v1914 = vadd.f32 %v1882, %v1772
        %v1915 = vadd.f32 %v1883, %v1777
        %v1916 = vadd.f32 %v1884, %v1780
        %v1917 = vadd.f32 %v1885, %v1785
        %v1918 = vadd.f32 %v1886, %v1788
        %v1919 = vadd.f32 %v1887, %v1793
        %v1920 = vadd.f32 %v1888, %v1796
        %v1921 = vadd.f32 %v1889, %v1801
        %v1922 = vadd.f32 %v1890, %v1804
        %v1923 = vadd.f32 %v1891, %v1809
        %v1924 = vadd.f32 %v1892, %v1812
        %v1925 = vadd.f32 %v1893, %v1817
        %v1926 = vadd.f32 %v1894, %v1820
        %v1927 = vadd.f32 %v1895, %v1825
        %v1928 = vadd.f32 %v1896, %v1828
        %v1929 = vadd.f32 %v1897, %v1833
        %v1930 = vadd.f32 %v1898, %v1836
        %v1931 = vadd.f32 %v1899, %v1841
        %v1932 = vadd.f32 %v1900, %v1844
        %v1933 = vadd.f32 %v1901, %v1849
        %v1934 = vadd.f32 %v1902, %v1852
        %v1935 = vadd.f32 %v1903, %v1857
        %v1936 = vadd.f32 %v1904, %v1860
        %v1937 = vadd.f32 %v1905, %v1865
        %v1938 = vadd.f32 %v1906, %v1868
        %v1939 = vadd.f32 %v1907, %v1873
        %v1940 = vadd.f32 %v1908, %v1876
        %v1941 = vadd.f32 %v1909, 0.0
        %v1942 = vadd.f32 %v1910, 0.0
        %v1943 = vpack.c.bf16 %v1912, %v1911
        %v1944 = vpack.c.bf16 %v1914, %v1913
        %v1945 = vpack.c.bf16 %v1916, %v1915
        %v1946 = vpack.c.bf16 %v1918, %v1917
        %v1947 = vpack.c.bf16 %v1920, %v1919
        %v1948 = vpack.c.bf16 %v1922, %v1921
        %v1949 = vpack.c.bf16 %v1924, %v1923
        %v1950 = vpack.c.bf16 %v1926, %v1925
        %v1951 = vpack.c.bf16 %v1928, %v1927
        %v1952 = vpack.c.bf16 %v1930, %v1929
        %v1953 = vpack.c.bf16 %v1932, %v1931
        %v1954 = vpack.c.bf16 %v1934, %v1933
        %v1955 = vpack.c.bf16 %v1936, %v1935
        %v1956 = vpack.c.bf16 %v1938, %v1937
        %v1957 = vpack.c.bf16 %v1940, %v1939
        %v1958 = vpack.c.bf16 %v1942, %v1941
        %v1975 = vunpack.c.l.b16 %v1943
        %v1976 = vunpack.c.h.b16 %v1943
        %v1977 = vunpack.c.l.b16 %v1944
        %v1978 = vunpack.c.h.b16 %v1944
        %v1979 = vunpack.c.l.b16 %v1945
        %v1980 = vunpack.c.h.b16 %v1945
        %v1981 = vunpack.c.l.b16 %v1946
        %v1982 = vunpack.c.h.b16 %v1946
        %v1983 = vunpack.c.l.b16 %v1947
        %v1984 = vunpack.c.h.b16 %v1947
        %v1985 = vunpack.c.l.b16 %v1948
        %v1986 = vunpack.c.h.b16 %v1948
        %v1987 = vunpack.c.l.b16 %v1949
        %v1988 = vunpack.c.h.b16 %v1949
        %v1989 = vunpack.c.l.b16 %v1950
        %v1990 = vunpack.c.h.b16 %v1950
        %v1991 = vunpack.c.l.b16 %v1951
        %v1992 = vunpack.c.h.b16 %v1951
        %v1993 = vunpack.c.l.b16 %v1952
        %v1994 = vunpack.c.h.b16 %v1952
        %v1995 = vunpack.c.l.b16 %v1953
        %v1996 = vunpack.c.h.b16 %v1953
        %v1997 = vunpack.c.l.b16 %v1954
        %v1998 = vunpack.c.h.b16 %v1954
        %v1999 = vunpack.c.l.b16 %v1955
        %v2000 = vunpack.c.h.b16 %v1955
        %v2001 = vunpack.c.l.b16 %v1956
        %v2002 = vunpack.c.h.b16 %v1956
        %v2003 = vunpack.c.l.b16 %v1957
        %v2004 = vunpack.c.h.b16 %v1957
        %v2005 = vunpack.c.l.b16 %v1958
        %v2006 = vunpack.c.h.b16 %v1958
        %v2007 = vpack.c.b16 %v1975, %v1975
        %v2008 = vpack.c.b16 %v1976, %v1976
        %v2009 = vpack.c.b16 %v1977, %v1977
        %v2010 = vpack.c.b16 %v1978, %v1978
        %v2011 = vpack.c.b16 %v1979, %v1979
        %v2012 = vpack.c.b16 %v1980, %v1980
        %v2013 = vpack.c.b16 %v1981, %v1981
        %v2014 = vpack.c.b16 %v1982, %v1982
        %v2015 = vpack.c.b16 %v1983, %v1983
        %v2016 = vpack.c.b16 %v1984, %v1984
        %v2017 = vpack.c.b16 %v1985, %v1985
        %v2018 = vpack.c.b16 %v1986, %v1986
        %v2019 = vpack.c.b16 %v1987, %v1987
        %v2020 = vpack.c.b16 %v1988, %v1988
        %v2021 = vpack.c.b16 %v1989, %v1989
        %v2022 = vpack.c.b16 %v1990, %v1990
        %v2023 = vpack.c.b16 %v1991, %v1991
        %v2024 = vpack.c.b16 %v1992, %v1992
        %v2025 = vpack.c.b16 %v1993, %v1993
        %v2026 = vpack.c.b16 %v1994, %v1994
        %v2027 = vpack.c.b16 %v1995, %v1995
        %v2028 = vpack.c.b16 %v1996, %v1996
        %v2029 = vpack.c.b16 %v1997, %v1997
        %v2030 = vpack.c.b16 %v1998, %v1998
        %v2031 = vpack.c.b16 %v1999, %v1999
        %v2032 = vpack.c.b16 %v2000, %v2000
        %v2033 = vpack.c.b16 %v2001, %v2001
        %v2034 = vpack.c.b16 %v2002, %v2002
        %v2035 = vpack.c.b16 %v2003, %v2003
        %v2036 = vpack.c.b16 %v2004, %v2004
        %v2037 = vpack.c.b16 %v2005, %v2005
        %v2038 = vpack.c.b16 %v2006, %v2006
        %2071 = vst [vmem:[%s286] sm:$0xf] %v2007
        %2072 = vst [vmem:[%s286 + $0x4] sm:$0xf] %v2008
        %2073 = vst [vmem:[%s286 + $0x8] sm:$0xf] %v2009
        %2074 = vst [vmem:[%s286 + $0xc] sm:$0xf] %v2010
        %2075 = vst [vmem:[%s286 + $0x10] sm:$0xf] %v2011
        %2076 = vst [vmem:[%s286 + $0x14] sm:$0xf] %v2012
        %2077 = vst [vmem:[%s286 + $0x18] sm:$0xf] %v2013
        %2078 = vst [vmem:[%s286 + $0x1c] sm:$0xf] %v2014
        %2079 = vst [vmem:[%s286 + $0x20] sm:$0xf] %v2015
        %2080 = vst [vmem:[%s286 + $0x24] sm:$0xf] %v2016
        %2081 = vst [vmem:[%s286 + $0x28] sm:$0xf] %v2017
        %2082 = vst [vmem:[%s286 + $0x2c] sm:$0xf] %v2018
        %2083 = vst [vmem:[%s286 + $0x30] sm:$0xf] %v2019
        %2084 = vst [vmem:[%s286 + $0x34] sm:$0xf] %v2020
        %2085 = vst [vmem:[%s286 + $0x38] sm:$0xf] %v2021
        %2086 = vst [vmem:[%s286 + $0x3c] sm:$0xf] %v2022
        %2087 = vst [vmem:[%s286 + $0x40] sm:$0xf] %v2023
        %2088 = vst [vmem:[%s286 + $0x44] sm:$0xf] %v2024
        %2089 = vst [vmem:[%s286 + $0x48] sm:$0xf] %v2025
        %2090 = vst [vmem:[%s286 + $0x4c] sm:$0xf] %v2026
        %2091 = vst [vmem:[%s286 + $0x50] sm:$0xf] %v2027
        %2092 = vst [vmem:[%s286 + $0x54] sm:$0xf] %v2028
        %2093 = vst [vmem:[%s286 + $0x58] sm:$0xf] %v2029
        %2094 = vst [vmem:[%s286 + $0x5c] sm:$0xf] %v2030
        %2095 = vst [vmem:[%s286 + $0x60] sm:$0xf] %v2031
        %2096 = vst [vmem:[%s286 + $0x64] sm:$0xf] %v2032
        %2097 = vst [vmem:[%s286 + $0x68] sm:$0xf] %v2033
        %2098 = vst [vmem:[%s286 + $0x6c] sm:$0xf] %v2034
        %2099 = vst [vmem:[%s286 + $0x70] sm:$0xf] %v2035
        %2100 = vst [vmem:[%s286 + $0x74] sm:$0xf] %v2036
        %2101 = vst [vmem:[%s286 + $0x78] sm:$0xf] %v2037
        %2102 = vst [vmem:[%s286 + $0x7c] sm:$0xf] %v2038
        %v2103 = vadd.f32 %v1911, %v1912
        %v2104 = vadd.f32 %v2103, %v1913
        %v2105 = vadd.f32 %v2104, %v1914
        %v2106 = vadd.f32 %v2105, %v1915
        %v2107 = vadd.f32 %v2106, %v1916
        %v2108 = vadd.f32 %v2107, %v1917
        %v2109 = vadd.f32 %v2108, %v1918
        %v2110 = vadd.f32 %v2109, %v1919
        %v2111 = vadd.f32 %v2110, %v1920
        %v2112 = vadd.f32 %v2111, %v1921
        %v2113 = vadd.f32 %v2112, %v1922
        %v2114 = vadd.f32 %v2113, %v1923
        %v2115 = vadd.f32 %v2114, %v1924
        %v2116 = vadd.f32 %v2115, %v1925
        %v2117 = vadd.f32 %v2116, %v1926
        %v2118 = vadd.f32 %v2117, %v1927
        %v2119 = vadd.f32 %v2118, %v1928
        %v2120 = vadd.f32 %v2119, %v1929
        %v2121 = vadd.f32 %v2120, %v1930
        %v2122 = vadd.f32 %v2121, %v1931
        %v2123 = vadd.f32 %v2122, %v1932
        %v2124 = vadd.f32 %v2123, %v1933
        %v2125 = vadd.f32 %v2124, %v1934
        %v2126 = vadd.f32 %v2125, %v1935
        %v2127 = vadd.f32 %v2126, %v1936
        %v2128 = vadd.f32 %v2127, %v1937
        %v2129 = vadd.f32 %v2128, %v1938
        %v2130 = vadd.f32 %v2129, %v1939
        %v2131 = vadd.f32 %v2130, %v1940
        %v2132 = vadd.f32 %v2131, %v1941
        %v2133 = vadd.f32 %v2132, %v1942
        %v2134 = vrot.slane %v2133, 4
        %v2135 = vadd.f32 %v2133, %v2134
        %v2136 = vrot.slane %v2135, 2
        %v2137 = vadd.f32 %v2135, %v2136
        %v2138 = vrot.slane %v2137, 1
        %v2139 = vadd.f32 %v2137, %v2138
        %v2140 = vmul.f32 %v1911, %v1911
        %v2141 = vmul.f32 %v1912, %v1912
        %v2142 = vmul.f32 %v1913, %v1913
        %v2143 = vmul.f32 %v1914, %v1914
        %v2144 = vmul.f32 %v1915, %v1915
        %v2145 = vmul.f32 %v1916, %v1916
        %v2146 = vmul.f32 %v1917, %v1917
        %v2147 = vmul.f32 %v1918, %v1918
        %v2148 = vmul.f32 %v1919, %v1919
        %v2149 = vmul.f32 %v1920, %v1920
        %v2150 = vmul.f32 %v1921, %v1921
        %v2151 = vmul.f32 %v1922, %v1922
        %v2152 = vmul.f32 %v1923, %v1923
        %v2153 = vmul.f32 %v1924, %v1924
        %v2154 = vmul.f32 %v1925, %v1925
        %v2155 = vmul.f32 %v1926, %v1926
        %v2156 = vmul.f32 %v1927, %v1927
        %v2157 = vmul.f32 %v1928, %v1928
        %v2158 = vmul.f32 %v1929, %v1929
        %v2159 = vmul.f32 %v1930, %v1930
        %v2160 = vmul.f32 %v1931, %v1931
        %v2161 = vmul.f32 %v1932, %v1932
        %v2162 = vmul.f32 %v1933, %v1933
        %v2163 = vmul.f32 %v1934, %v1934
        %v2164 = vmul.f32 %v1935, %v1935
        %v2165 = vmul.f32 %v1936, %v1936
        %v2166 = vmul.f32 %v1937, %v1937
        %v2167 = vmul.f32 %v1938, %v1938
        %v2168 = vmul.f32 %v1939, %v1939
        %v2169 = vmul.f32 %v1940, %v1940
        %v2170 = vmul.f32 %v1941, %v1941
        %v2171 = vmul.f32 %v1942, %v1942
        %v2172 = vadd.f32 %v2140, %v2141
        %v2173 = vadd.f32 %v2172, %v2142
        %v2174 = vadd.f32 %v2173, %v2143
        %v2175 = vadd.f32 %v2174, %v2144
        %v2176 = vadd.f32 %v2175, %v2145
        %v2177 = vadd.f32 %v2176, %v2146
        %v2178 = vadd.f32 %v2177, %v2147
        %v2179 = vadd.f32 %v2178, %v2148
        %v2180 = vadd.f32 %v2179, %v2149
        %v2181 = vadd.f32 %v2180, %v2150
        %v2182 = vadd.f32 %v2181, %v2151
        %v2183 = vadd.f32 %v2182, %v2152
        %v2184 = vadd.f32 %v2183, %v2153
        %v2185 = vadd.f32 %v2184, %v2154
        %v2186 = vadd.f32 %v2185, %v2155
        %v2187 = vadd.f32 %v2186, %v2156
        %v2188 = vadd.f32 %v2187, %v2157
        %v2189 = vadd.f32 %v2188, %v2158
        %v2190 = vadd.f32 %v2189, %v2159
        %v2191 = vadd.f32 %v2190, %v2160
        %v2192 = vadd.f32 %v2191, %v2161
        %v2193 = vadd.f32 %v2192, %v2162
        %v2194 = vadd.f32 %v2193, %v2163
        %v2195 = vadd.f32 %v2194, %v2164
        %v2196 = vadd.f32 %v2195, %v2165
        %v2197 = vadd.f32 %v2196, %v2166
        %v2198 = vadd.f32 %v2197, %v2167
        %v2199 = vadd.f32 %v2198, %v2168
        %v2200 = vadd.f32 %v2199, %v2169
        %v2201 = vadd.f32 %v2200, %v2170
        %v2202 = vadd.f32 %v2201, %v2171
        %v2203 = vrot.slane %v2202, 4
        %v2204 = vadd.f32 %v2202, %v2203
        %v2205 = vrot.slane %v2204, 2
        %v2206 = vadd.f32 %v2204, %v2205
        %v2207 = vrot.slane %v2206, 1
        %v2208 = vadd.f32 %v2206, %v2207
        %vm2209 = vcmask 1040384
        %v2210 = vsel %vm2209, %v2139, %v2208
        %2211 = vst [vmem:[%s293] sm:$0x3] %v2210
        %s2212 = sand.u32 %s125, 1
        %s2213 = scalar_lea.sflag [#allocation4], %s2212
        %s2214 = sand.u32 %s125, 1
        %s2215 = smul.addr %s2214, 128
        %s2216 = scalar_lea.vmem [#allocation10], %s2215
        %s2217 = sand.u32 %s151, 1
        %s2218 = scalar_lea.sflag [#allocation12], %s2217
        %s2219 = sand.u32 %s151, 1
        %s2220 = smul.addr %s2219, 2
        %s2221 = scalar_lea.vmem [#allocation11], %s2220
        // Predicated region
        $region53: #{basic_block_forward.4} parent=35 // pred_check
          %p2222 = pneg %p135
        $region54: #{basic_block_forward.4} parent=35 // pred_check_branch
          %2224 = sbr.rel (%p2222) target = $region56
        $region55: #{basic_block_forward.4} parent=35 // pred_region
          %s2226 = ssub.s32 2048, 2048
          %2227 = vsyncadd %s2213, %s2226
          %s2228 = smul.addr %s28, 32
          %s2229 = smul.addr %s2228, 64
          %s2230 = scalar_lea.hbm %s4, %s2229
          %s2231 = sshll.u32 %s2216, 4
          %s2232 = int_to_ptr.vmem [resolvable:$true] %s2231
          %2237 = dma.vmem_to_hbm [thread:$0]  %s2232, 2048, %s2230, %s2213, 64, 64, 4
        $region56: #{basic_block_forward.4} parent=35 // pred_fallthru
          _
        // Predicated region
        $region57: #{basic_block_forward.4} parent=35 // pred_check
          %p2238 = pneg %p161
        $region58: #{basic_block_forward.4} parent=35 // pred_check_branch
          %2240 = sbr.rel (%p2238) target = $region60
        $region59: #{basic_block_forward.4} parent=35 // pred_region
          %s2242 = ssub.s32 32, 32
          %2243 = vsyncadd %s2218, %s2242
          %s2244 = smul.addr %s28, 32
          %s2245 = scalar_lea.hbm %s5, %s2244
          %s2247 = sshll.u32 %s2221, 4
          %s2248 = int_to_ptr.vmem [resolvable:$true] %s2247
          %2250 = dma.vmem_to_hbm [thread:$0]  %s2248, 32, %s2245, %s2218
        $region60: #{basic_block_forward.4} parent=35 // pred_fallthru
          _
      $region36: #{basic_block_forward.4} parent=5 // pred_fallthru
        _
      %p2251 = scmp.le.s32.totalorder 2, %s23
      // Predicated region
      $region61: #{basic_block_forward.4} parent=5 // pred_check
        %p2252 = pneg %p2251
      $region62: #{basic_block_forward.4} parent=5 // pred_check_branch
        %2254 = sbr.rel (%p2252) target = $region64
      $region63: #{basic_block_forward.4} parent=5 // pred_region
        %s2255 = ssub.s32 %s23, 2
        // Predicated region
        $region65: #{basic_block_forward.4} parent=63 // pred_check
          %p2256 = pneg %p141
        $region66: #{basic_block_forward.4} parent=63 // pred_check_branch
          %2258 = sbr.rel (%p2256) target = $region68
        $region67: #{basic_block_forward.4} parent=63 // pred_region
          %s2259 = sand.u32 %s126, 1
          %s2260 = scalar_lea.sflag [#allocation4], %s2259
          %s2261 = sand.u32 %s126, 1
          %s2262 = smul.addr %s2261, 128
          %s2263 = scalar_lea.vmem [#allocation10], %s2262
          %2264 = dma.done %s2260, 2048
        $region68: #{basic_block_forward.4} parent=63 // pred_fallthru
          _
        // Predicated region
        $region69: #{basic_block_forward.4} parent=63 // pred_check
          %p2265 = pneg %p167
        $region70: #{basic_block_forward.4} parent=63 // pred_check_branch
          %2267 = sbr.rel (%p2265) target = $region72
        $region71: #{basic_block_forward.4} parent=63 // pred_region
          %s2268 = sand.u32 %s152, 1
          %s2269 = scalar_lea.sflag [#allocation12], %s2268
          %s2270 = sand.u32 %s152, 1
          %s2271 = smul.addr %s2270, 2
          %s2272 = scalar_lea.vmem [#allocation11], %s2271
          %2273 = dma.done %s2269, 32
        $region72: #{basic_block_forward.4} parent=63 // pred_fallthru
          _
      $region64: #{basic_block_forward.4} parent=5 // pred_fallthru
        _
    $region6: #{basic_block_forward.4} parent=1 // loop_footer
      %s27 = sadd.s32 1, %s23
    $region7: #{basic_block_forward.4} parent=1 // loop_footer_branch
      %22 = sbr.rel target = $region3
    $region8: #{basic_block_forward.4} parent=1 // loop_exit
      _
    %2274 = vsyncpa [#allocation3], 1
    %s2275 = scalar_lea.sflag [#allocation3], 1
    %2276 = vsyncpa %s2275, 1
    %2277 = vsyncpa [#allocation6], 1
    %2278 = vsyncpa [#allocation9], 1
    %2279 = vsyncpa [#allocation4], 1
    %s2280 = scalar_lea.sflag [#allocation4], 1
    %2281 = vsyncpa %s2280, 1
    %2282 = vsyncpa [#allocation12], 1
    %s2283 = scalar_lea.sflag [#allocation12], 1
    %2284 = vsyncpa %s2283, 1

</llo_original>
